<compile_context>
chip_gen: v7x
topology: tpu7x:2x2x1
jax: 0.10.0
libtpu: 0.0.40
codegen_flags: <defaults>
</compile_context>

<pallas_src>
import functools
import math

import jax
import jax.numpy as jnp
from jax.experimental import pallas as pl
from jax.experimental.pallas import tpu as pltpu

COMPUTE_DTYPE = jnp.bfloat16   # MXU input dtype (f32 accumulation everywhere)
LN_EPS = 1e-5                  # PyTorch LayerNorm default


# --------------------------------------------------------------------------------------
# Pallas kernels
# --------------------------------------------------------------------------------------

def _matmul_bias_kernel(x_ref, w_ref, b_ref, o_ref, acc_ref):
    """o = x @ w + b, tiled over (M, N, K) with an f32 VMEM accumulator."""
    @pl.when(pl.program_id(2) == 0)
    def _():
        acc_ref[...] = jnp.zeros_like(acc_ref)

    acc_ref[...] += jnp.dot(x_ref[...].astype(w_ref.dtype), w_ref[...],
                            preferred_element_type=jnp.float32)

    @pl.when(pl.program_id(2) == pl.num_programs(2) - 1)
    def _():
        o_ref[...] = (acc_ref[...] + b_ref[...].astype(jnp.float32)).astype(o_ref.dtype)


def _layernorm_f32(y, g, b):
    mu = jnp.mean(y, axis=-1, keepdims=True)
    yc = y - mu
    var = jnp.mean(yc * yc, axis=-1, keepdims=True)
    return yc * jax.lax.rsqrt(var + LN_EPS) * g + b


def _proj_res_ln_kernel(x_ref, w_ref, b_ref, r_ref, g_ref, bb_ref, o_ref):
    """o = LayerNorm(residual + x @ w + b)  -- attention out-proj with fused epilogue."""
    y = jnp.dot(x_ref[...].astype(w_ref.dtype), w_ref[...],
                preferred_element_type=jnp.float32)
    y = y + b_ref[...].astype(jnp.float32) + r_ref[...].astype(jnp.float32)
    o_ref[...] = _layernorm_f32(y, g_ref[...].astype(jnp.float32),
                                bb_ref[...].astype(jnp.float32)).astype(o_ref.dtype)


def _ffn_res_ln_kernel(x_ref, w1_ref, b1_ref, w2_ref, b2_ref, g_ref, bb_ref, o_ref):
    """o = LayerNorm(x + linear2(relu(linear1(x))))  -- fully fused FFN block."""
    xc = x_ref[...].astype(w1_ref.dtype)
    h = jnp.dot(xc, w1_ref[...], preferred_element_type=jnp.float32)
    h = jnp.maximum(h + b1_ref[...].astype(jnp.float32), 0.0)
    y = jnp.dot(h.astype(w2_ref.dtype), w2_ref[...], preferred_element_type=jnp.float32)
    y = y + b2_ref[...].astype(jnp.float32) + x_ref[...].astype(jnp.float32)
    o_ref[...] = _layernorm_f32(y, g_ref[...].astype(jnp.float32),
                                bb_ref[...].astype(jnp.float32)).astype(o_ref.dtype)


def _attn_heads(q, k, v, nhead, scale):
    """q:(Sq,D), k/v:(Sk,D) heads packed along the lane axis; returns f32 (Sq,D)."""
    D = q.shape[-1]
    Dh = D // nhead
    qf = q.astype(jnp.float32) * scale            # fold scale into Q (Sq*Dh, not Sq*Sk)
    outs = []
    for h in range(nhead):                        # nhead is static -> unrolled
        lo, hi = h * Dh, (h + 1) * Dh
        qh = qf[:, lo:hi].astype(k.dtype)
        kh = k[:, lo:hi]
        vh = v[:, lo:hi]
        s = jax.lax.dot_general(qh, kh, (((1,), (1,)), ((), ())),
                                preferred_element_type=jnp.float32)
        s = s - jnp.max(s, axis=-1, keepdims=True)
        p = jnp.exp(s)
        p = p * pl.reciprocal(jnp.sum(p, axis=-1, keepdims=True), approx=True)
        outs.append(jnp.dot(p.astype(vh.dtype), vh, preferred_element_type=jnp.float32))
    return jnp.concatenate(outs, axis=-1)         # lane-dense (Sq, D) result


def _self_attn_kernel(qkv_ref, o_ref, *, nhead, scale, d_model):
    x = qkv_ref[0]                                # (Sq, 3D): packed Q|K|V
    q = x[:, :d_model]
    k = x[:, d_model:2 * d_model]
    v = x[:, 2 * d_model:3 * d_model]
    o_ref[0] = _attn_heads(q, k, v, nhead, scale).astype(o_ref.dtype)


def _cross_attn_kernel(q_ref, kv_ref, o_ref, *, nhead, scale, d_model):
    q = q_ref[0]                                  # (Sq, D)
    kv = kv_ref[0]                                # (Sk, 2D): packed K|V
    o_ref[0] = _attn_heads(q, kv[:, :d_model], kv[:, d_model:],
                           nhead, scale).astype(o_ref.dtype)


# --------------------------------------------------------------------------------------
# pallas_call wrappers
# --------------------------------------------------------------------------------------

def _pick_tile(dim, pref):
    """Use a 128-aligned tile when it divides the dim, else the full dim (legal block)."""
    return pref if dim % pref == 0 else dim


def linear(x, w, b, out_dtype):
    """x: (M, K) f32/bf16, w: (K, N) bf16 (pre-transposed), b: (N,) f32 -> (M, N)."""
    M, K = x.shape
    N = w.shape[1]
    tm = _pick_tile(M, 128)
    tn = _pick_tile(N, 256)
    tk = _pick_tile(K, 512)
    grid = (M // tm, N // tn, K // tk)
    return pl.pallas_call(
        _matmul_bias_kernel,
        out_shape=jax.ShapeDtypeStruct((M, N), out_dtype),
        grid=grid,
        in_specs=[pl.BlockSpec((tm, tk), lambda i, j, k: (i, k)),
                  pl.BlockSpec((tk, tn), lambda i, j, k: (k, j)),
                  pl.BlockSpec((1, tn), lambda i, j, k: (0, j))],
        out_specs=pl.BlockSpec((tm, tn), lambda i, j, k: (i, j)),
        scratch_shapes=[pltpu.VMEM((tm, tn), jnp.float32)],
        compiler_params=pltpu.CompilerParams(
            dimension_semantics=("parallel", "parallel", "arbitrary")),
    )(x, w, b.reshape(1, N))


def proj_res_ln(x, w, b, residual, gamma, beta):
    """LayerNorm(residual + x @ w + b); x: (M, D), w: (D, D), residual: (M, D) f32."""
    M, K = x.shape
    D = w.shape[1]
    tm = _pick_tile(M, 128)
    return pl.pallas_call(
        _proj_res_ln_kernel,
        out_shape=jax.ShapeDtypeStruct((M, D), jnp.float32),
        grid=(M // tm,),
        in_specs=[pl.BlockSpec((tm, K), lambda i: (i, 0)),
                  pl.BlockSpec((K, D), lambda i: (0, 0)),
                  pl.BlockSpec((1, D), lambda i: (0, 0)),
                  pl.BlockSpec((tm, D), lambda i: (i, 0)),
                  pl.BlockSpec((1, D), lambda i: (0, 0)),
                  pl.BlockSpec((1, D), lambda i: (0, 0))],
        out_specs=pl.BlockSpec((tm, D), lambda i: (i, 0)),
        compiler_params=pltpu.CompilerParams(dimension_semantics=("parallel",)),
    )(x, w, b.reshape(1, D), residual, gamma.reshape(1, D), beta.reshape(1, D))


def ffn_res_ln(x, w1, b1, w2, b2, gamma, beta):
    """LayerNorm(x + relu(x@w1+b1)@w2+b2); x: (M, D) f32, w1: (D, FF), w2: (FF, D)."""
    M, D = x.shape
    FF = w1.shape[1]
    tm = _pick_tile(M, 128)
    return pl.pallas_call(
        _ffn_res_ln_kernel,
        out_shape=jax.ShapeDtypeStruct((M, D), jnp.float32),
        grid=(M // tm,),
        in_specs=[pl.BlockSpec((tm, D), lambda i: (i, 0)),
                  pl.BlockSpec((D, FF), lambda i: (0, 0)),
                  pl.BlockSpec((1, FF), lambda i: (0, 0)),
                  pl.BlockSpec((FF, D), lambda i: (0, 0)),
                  pl.BlockSpec((1, D), lambda i: (0, 0)),
                  pl.BlockSpec((1, D), lambda i: (0, 0)),
                  pl.BlockSpec((1, D), lambda i: (0, 0))],
        out_specs=pl.BlockSpec((tm, D), lambda i: (i, 0)),
        compiler_params=pltpu.CompilerParams(dimension_semantics=("parallel",)),
    )(x, w1, b1.reshape(1, FF), w2, b2.reshape(1, D),
      gamma.reshape(1, D), beta.reshape(1, D))


def self_attention(qkv, d_model, nhead):
    """qkv: (B, Sq, 3D) packed Q|K|V -> (B, Sq, D)."""
    B, Sq, C = qkv.shape
    scale = 1.0 / math.sqrt(d_model // nhead)
    kern = functools.partial(_self_attn_kernel, nhead=nhead, scale=scale, d_model=d_model)
    return pl.pallas_call(
        kern,
        out_shape=jax.ShapeDtypeStruct((B, Sq, d_model), COMPUTE_DTYPE),
        grid=(B,),
        in_specs=[pl.BlockSpec((1, Sq, C), lambda b: (b, 0, 0))],
        out_specs=pl.BlockSpec((1, Sq, d_model), lambda b: (b, 0, 0)),
        compiler_params=pltpu.CompilerParams(dimension_semantics=("parallel",)),
    )(qkv)


def cross_attention(q, kv, d_model, nhead):
    """q: (B, Sq, D), kv: (B, Sk, 2D) packed K|V -> (B, Sq, D)."""
    B, Sq, _ = q.shape
    Sk, C = kv.shape[1], kv.shape[2]
    scale = 1.0 / math.sqrt(d_model // nhead)
    kern = functools.partial(_cross_attn_kernel, nhead=nhead, scale=scale, d_model=d_model)
    return pl.pallas_call(
        kern,
        out_shape=jax.ShapeDtypeStruct((B, Sq, d_model), COMPUTE_DTYPE),
        grid=(B,),
        in_specs=[pl.BlockSpec((1, Sq, d_model), lambda b: (b, 0, 0)),
                  pl.BlockSpec((1, Sk, C), lambda b: (b, 0, 0))],
        out_specs=pl.BlockSpec((1, Sq, d_model), lambda b: (b, 0, 0)),
        compiler_params=pltpu.CompilerParams(dimension_semantics=("parallel",)),
    )(q, kv)


# --------------------------------------------------------------------------------------
# TransformerDecoder forward (post-norm, as in nn.TransformerDecoderLayer default)
# --------------------------------------------------------------------------------------

def prepare_params(params, d_model, cdt=COMPUTE_DTYPE):
    """One-time hoist: transpose to (Din, Dout), pack QKV / KV, cast weights to bf16."""
    D = d_model
    prepped = []
    for p in params:
        prepped.append({
            'sa_wqkv': p['sa_in_w'].T.astype(cdt),          # (D, 3D)
            'sa_bqkv': p['sa_in_b'].astype(jnp.float32),
            'sa_wo': p['sa_out_w'].T.astype(cdt),           # (D, D)
            'sa_bo': p['sa_out_b'].astype(jnp.float32),
            'ca_wq': p['ca_in_w'][:D].T.astype(cdt),        # (D, D)
            'ca_bq': p['ca_in_b'][:D].astype(jnp.float32),
            'ca_wkv': p['ca_in_w'][D:].T.astype(cdt),       # (D, 2D)
            'ca_bkv': p['ca_in_b'][D:].astype(jnp.float32),
            'ca_wo': p['ca_out_w'].T.astype(cdt),           # (D, D)
            'ca_bo': p['ca_out_b'].astype(jnp.float32),
            'w1': p['w1'].T.astype(cdt),                    # (D, FF)
            'b1': p['b1'].astype(jnp.float32),
            'w2': p['w2'].T.astype(cdt),                    # (FF, D)
            'b2': p['b2'].astype(jnp.float32),
            'ln1_g': p['ln1_g'], 'ln1_b': p['ln1_b'],
            'ln2_g': p['ln2_g'], 'ln2_b': p['ln2_b'],
            'ln3_g': p['ln3_g'], 'ln3_b': p['ln3_b'],
        })
    return prepped


def decoder_layer(x, memory, p, nhead):
    B, Sq, D = x.shape
    Sk = memory.shape[1]
    x2d = x.reshape(B * Sq, D)
    mem2d = memory.reshape(B * Sk, D)

    # --- self-attention: fused QKV proj -> attention -> out-proj + residual + LN ---
    qkv = linear(x2d, p['sa_wqkv'], p['sa_bqkv'], COMPUTE_DTYPE).reshape(B, Sq, 3 * D)
    sa = self_attention(qkv, D, nhead).reshape(B * Sq, D)
    x2d = proj_res_ln(sa, p['sa_wo'], p['sa_bo'], x2d, p['ln1_g'], p['ln1_b'])

    # --- cross-attention: Q proj + fused KV proj -> attention -> out-proj + res + LN ---
    q = linear(x2d, p['ca_wq'], p['ca_bq'], COMPUTE_DTYPE).reshape(B, Sq, D)
    kv = linear(mem2d, p['ca_wkv'], p['ca_bkv'], COMPUTE_DTYPE).reshape(B, Sk, 2 * D)
    ca = cross_attention(q, kv, D, nhead).reshape(B * Sq, D)
    x2d = proj_res_ln(ca, p['ca_wo'], p['ca_bo'], x2d, p['ln2_g'], p['ln2_b'])

    # --- fused FFN + residual + LN ---
    x2d = ffn_res_ln(x2d, p['w1'], p['b1'], p['w2'], p['b2'], p['ln3_g'], p['ln3_b'])
    return x2d.reshape(B, Sq, D)


def transformer_dec(tgt, enc_memory, prepped_params, nhead):
    x = tgt
    for p in prepped_params:
        x = decoder_layer(x, enc_memory, p, nhead)
    return x  # nn.TransformerDecoder default norm=None -> no final LayerNorm


# --------------------------------------------------------------------------------------
# Pure-JAX f32 reference (correctness check only)
# --------------------------------------------------------------------------------------

def _ref_ln(x, g, b):
    mu = jnp.mean(x, axis=-1, keepdims=True)
    var = jnp.mean((x - mu) ** 2, axis=-1, keepdims=True)
    return (x - mu) * jax.lax.rsqrt(var + LN_EPS) * g + b


def _ref_mha(x_q, x_kv, in_w, in_b, out_w, out_b, nhead):
    B, Sq, D = x_q.shape
    Sk = x_kv.shape[1]
    Dh = D // nhead
    wq, wk, wv = in_w[:D], in_w[D:2 * D], in_w[2 * D:]
    bq, bk, bv = in_b[:D], in_b[D:2 * D], in_b[2 * D:]
    q = (x_q @ wq.T + bq).reshape(B, Sq, nhead, Dh).transpose(0, 2, 1, 3)
    k = (x_kv @ wk.T + bk).reshape(B, Sk, nhead, Dh).transpose(0, 2, 1, 3)
    v = (x_kv @ wv.T + bv).reshape(B, Sk, nhead, Dh).transpose(0, 2, 1, 3)
    s = jnp.einsum('bhqd,bhkd->bhqk', q, k) / (Dh ** 0.5)
    p = jax.nn.softmax(s, axis=-1)
    o = jnp.einsum('bhqk,bhkd->bhqd', p, v).transpose(0, 2, 1, 3).reshape(B, Sq, D)
    return o @ out_w.T + out_b


def transformer_dec_ref(tgt, enc_memory, params, nhead):
    x = tgt
    for p in params:
        sa = _ref_mha(x, x, p['sa_in_w'], p['sa_in_b'], p['sa_out_w'], p['sa_out_b'], nhead)
        x = _ref_ln(x + sa, p['ln1_g'], p['ln1_b'])
        ca = _ref_mha(x, enc_memory, p['ca_in_w'], p['ca_in_b'], p['ca_out_w'], p['ca_out_b'], nhead)
        x = _ref_ln(x + ca, p['ln2_g'], p['ln2_b'])
        ff = jnp.maximum(x @ p['w1'].T + p['b1'], 0.0) @ p['w2'].T + p['b2']
        x = _ref_ln(x + ff, p['ln3_g'], p['ln3_b'])
    return x


# --------------------------------------------------------------------------------------
# Deterministic parameter init (shapes mirror nn.TransformerDecoderLayer)
# --------------------------------------------------------------------------------------

def init_params(key, d_model, nlayers, dff):
    params = []
    for _ in range(nlayers):
        key, *ks = jax.random.split(key, 13)
        n = lambda k, shape: 0.05 * jax.random.normal(k, shape, jnp.float32)
        params.append({
            'sa_in_w': n(ks[0], (3 * d_model, d_model)),
            'sa_in_b': n(ks[1], (3 * d_model,)),
            'sa_out_w': n(ks[2], (d_model, d_model)),
            'sa_out_b': n(ks[3], (d_model,)),
            'ca_in_w': n(ks[4], (3 * d_model, d_model)),
            'ca_in_b': n(ks[5], (3 * d_model,)),
            'ca_out_w': n(ks[6], (d_model, d_model)),
            'ca_out_b': n(ks[7], (d_model,)),
            'w1': n(ks[8], (dff, d_model)),
            'b1': n(ks[9], (dff,)),
            'w2': n(ks[10], (d_model, dff)),
            'b2': n(ks[11], (d_model,)),
            'ln1_g': jnp.ones((d_model,), jnp.float32),
            'ln1_b': jnp.zeros((d_model,), jnp.float32),
            'ln2_g': jnp.ones((d_model,), jnp.float32),
            'ln2_b': jnp.zeros((d_model,), jnp.float32),
            'ln3_g': jnp.ones((d_model,), jnp.float32),
            'ln3_b': jnp.zeros((d_model,), jnp.float32),
        })
    return params


if __name__ == "__main__":
    B, S_tgt, S_mem = 2, 8, 8
    d_model, nhead, nlayers, dff = 32, 4, 2, 64

    key = jax.random.PRNGKey(0)
    k_tgt, k_mem, k_par = jax.random.split(key, 3)
    tgt = jax.random.normal(k_tgt, (B, S_tgt, d_model), jnp.float32)
    enc_memory = jax.random.normal(k_mem, (B, S_mem, d_model), jnp.float32)
    params = init_params(k_par, d_model, nlayers, dff)

    prepped = prepare_params(params, d_model)                  # one-time weight prep
    fwd = jax.jit(functools.partial(transformer_dec, nhead=nhead))
    out = jax.block_until_ready(fwd(tgt, enc_memory, prepped))

    ref = transformer_dec_ref(tgt, enc_memory, params, nhead)
    assert out.shape == (B, S_tgt, d_model)
    # bf16 MXU inputs + approx reciprocal -> intentional precision trade vs f32 reference.
    assert jnp.allclose(out, ref, atol=5e-2, rtol=5e-2), "Pallas output mismatch vs JAX reference"

    print("KERNEL_OK")
</pallas_src>

<mosaic_0001>
module attributes {stable_mosaic.version = 11 : i64} {
  func.func @_self_attn_kernel(%arg0: i32, %arg1: memref<1x8x96xbf16, #tpu.memory_space<vmem>>, %arg2: memref<1x8x32xbf16, #tpu.memory_space<vmem>>) attributes {dimension_semantics = [#tpu.dimension_semantics<parallel>], iteration_bounds = array<i64: 2>, scalar_prefetch = 0 : i64, scratch_operands = 0 : i64, tpu.core_type = #tpu.core_type<tc>, window_params = [{transform_indices = @transform_0, window_bounds = array<i64: 1, 8, 96>}, {transform_indices = @transform_1, window_bounds = array<i64: 1, 8, 32>}]} {
    %c0 = arith.constant 0 : index
    %c0_0 = arith.constant 0 : index
    %c0_1 = arith.constant 0 : index
    %0 = vector.load %arg1[%c0, %c0_0, %c0_1] : memref<1x8x96xbf16, #tpu.memory_space<vmem>>, vector<1x8x96xbf16>
    %1 = vector.shape_cast %0 : vector<1x8x96xbf16> to vector<8x96xbf16>
    %2 = vector.extract_strided_slice %1 {offsets = [0, 0], sizes = [8, 32], strides = [1, 1]} : vector<8x96xbf16> to vector<8x32xbf16>
    %3 = vector.extract_strided_slice %1 {offsets = [0, 32], sizes = [8, 32], strides = [1, 1]} : vector<8x96xbf16> to vector<8x32xbf16>
    %4 = vector.extract_strided_slice %1 {offsets = [0, 64], sizes = [8, 32], strides = [1, 1]} : vector<8x96xbf16> to vector<8x32xbf16>
    %5 = arith.extf %2 : vector<8x32xbf16> to vector<8x32xf32>
    %cst = arith.constant 0.353553385 : f32
    %6 = vector.broadcast %cst : f32 to vector<8x32xf32>
    %7 = arith.mulf %5, %6 : vector<8x32xf32>
    %8 = vector.extract_strided_slice %7 {offsets = [0, 0], sizes = [8, 8], strides = [1, 1]} : vector<8x32xf32> to vector<8x8xf32>
    %9 = arith.truncf %8 : vector<8x8xf32> to vector<8x8xbf16>
    %10 = vector.extract_strided_slice %3 {offsets = [0, 0], sizes = [8, 8], strides = [1, 1]} : vector<8x32xbf16> to vector<8x8xbf16>
    %11 = vector.extract_strided_slice %4 {offsets = [0, 0], sizes = [8, 8], strides = [1, 1]} : vector<8x32xbf16> to vector<8x8xbf16>
    %cst_2 = arith.constant dense<0.000000e+00> : vector<8x8xf32>
    %12 = tpu.matmul %9, %10, %cst_2 {dimension_numbers = #tpu.dot_dimension_numbers<[1], [1], [0], [0], [0, 0, 1, 0], [], []>} : vector<8x8xbf16>, vector<8x8xbf16>, vector<8x8xf32> -> vector<8x8xf32>
    %cst_3 = arith.constant dense<0xFF800000> : vector<8xf32>
    %13 = vector.multi_reduction <maximumf>, %12, %cst_3 [1] : vector<8x8xf32> to vector<8xf32>
    %14 = vector.shape_cast %13 : vector<8xf32> to vector<8x1xf32>
    %15 = vector.broadcast %14 : vector<8x1xf32> to vector<8x8xf32>
    %16 = arith.subf %12, %15 : vector<8x8xf32>
    %17 = math.exp %16 : vector<8x8xf32>
    %cst_4 = arith.constant dense<0.000000e+00> : vector<8xf32>
    %18 = vector.multi_reduction <add>, %17, %cst_4 [1] : vector<8x8xf32> to vector<8xf32>
    %19 = vector.shape_cast %18 : vector<8xf32> to vector<8x1xf32>
    %20 = tpu.reciprocal %19 {approx = true} : vector<8x1xf32> -> vector<8x1xf32>
    %21 = vector.broadcast %20 : vector<8x1xf32> to vector<8x8xf32>
    %22 = arith.mulf %17, %21 : vector<8x8xf32>
    %23 = arith.truncf %22 : vector<8x8xf32> to vector<8x8xbf16>
    %cst_5 = arith.constant dense<0.000000e+00> : vector<8x8xf32>
    %24 = tpu.matmul %23, %11, %cst_5 {dimension_numbers = #tpu.dot_dimension_numbers<[1], [0], [0], [1], [0, 0, 1, 1], [], []>} : vector<8x8xbf16>, vector<8x8xbf16>, vector<8x8xf32> -> vector<8x8xf32>
    %25 = vector.extract_strided_slice %7 {offsets = [0, 8], sizes = [8, 8], strides = [1, 1]} : vector<8x32xf32> to vector<8x8xf32>
    %26 = arith.truncf %25 : vector<8x8xf32> to vector<8x8xbf16>
    %27 = vector.extract_strided_slice %3 {offsets = [0, 8], sizes = [8, 8], strides = [1, 1]} : vector<8x32xbf16> to vector<8x8xbf16>
    %28 = vector.extract_strided_slice %4 {offsets = [0, 8], sizes = [8, 8], strides = [1, 1]} : vector<8x32xbf16> to vector<8x8xbf16>
    %cst_6 = arith.constant dense<0.000000e+00> : vector<8x8xf32>
    %29 = tpu.matmul %26, %27, %cst_6 {dimension_numbers = #tpu.dot_dimension_numbers<[1], [1], [0], [0], [0, 0, 1, 0], [], []>} : vector<8x8xbf16>, vector<8x8xbf16>, vector<8x8xf32> -> vector<8x8xf32>
    %cst_7 = arith.constant dense<0xFF800000> : vector<8xf32>
    %30 = vector.multi_reduction <maximumf>, %29, %cst_7 [1] : vector<8x8xf32> to vector<8xf32>
    %31 = vector.shape_cast %30 : vector<8xf32> to vector<8x1xf32>
    %32 = vector.broadcast %31 : vector<8x1xf32> to vector<8x8xf32>
    %33 = arith.subf %29, %32 : vector<8x8xf32>
    %34 = math.exp %33 : vector<8x8xf32>
    %cst_8 = arith.constant dense<0.000000e+00> : vector<8xf32>
    %35 = vector.multi_reduction <add>, %34, %cst_8 [1] : vector<8x8xf32> to vector<8xf32>
    %36 = vector.shape_cast %35 : vector<8xf32> to vector<8x1xf32>
    %37 = tpu.reciprocal %36 {approx = true} : vector<8x1xf32> -> vector<8x1xf32>
    %38 = vector.broadcast %37 : vector<8x1xf32> to vector<8x8xf32>
    %39 = arith.mulf %34, %38 : vector<8x8xf32>
    %40 = arith.truncf %39 : vector<8x8xf32> to vector<8x8xbf16>
    %cst_9 = arith.constant dense<0.000000e+00> : vector<8x8xf32>
    %41 = tpu.matmul %40, %28, %cst_9 {dimension_numbers = #tpu.dot_dimension_numbers<[1], [0], [0], [1], [0, 0, 1, 1], [], []>} : vector<8x8xbf16>, vector<8x8xbf16>, vector<8x8xf32> -> vector<8x8xf32>
    %42 = vector.extract_strided_slice %7 {offsets = [0, 16], sizes = [8, 8], strides = [1, 1]} : vector<8x32xf32> to vector<8x8xf32>
    %43 = arith.truncf %42 : vector<8x8xf32> to vector<8x8xbf16>
    %44 = vector.extract_strided_slice %3 {offsets = [0, 16], sizes = [8, 8], strides = [1, 1]} : vector<8x32xbf16> to vector<8x8xbf16>
    %45 = vector.extract_strided_slice %4 {offsets = [0, 16], sizes = [8, 8], strides = [1, 1]} : vector<8x32xbf16> to vector<8x8xbf16>
    %cst_10 = arith.constant dense<0.000000e+00> : vector<8x8xf32>
    %46 = tpu.matmul %43, %44, %cst_10 {dimension_numbers = #tpu.dot_dimension_numbers<[1], [1], [0], [0], [0, 0, 1, 0], [], []>} : vector<8x8xbf16>, vector<8x8xbf16>, vector<8x8xf32> -> vector<8x8xf32>
    %cst_11 = arith.constant dense<0xFF800000> : vector<8xf32>
    %47 = vector.multi_reduction <maximumf>, %46, %cst_11 [1] : vector<8x8xf32> to vector<8xf32>
    %48 = vector.shape_cast %47 : vector<8xf32> to vector<8x1xf32>
    %49 = vector.broadcast %48 : vector<8x1xf32> to vector<8x8xf32>
    %50 = arith.subf %46, %49 : vector<8x8xf32>
    %51 = math.exp %50 : vector<8x8xf32>
    %cst_12 = arith.constant dense<0.000000e+00> : vector<8xf32>
    %52 = vector.multi_reduction <add>, %51, %cst_12 [1] : vector<8x8xf32> to vector<8xf32>
    %53 = vector.shape_cast %52 : vector<8xf32> to vector<8x1xf32>
    %54 = tpu.reciprocal %53 {approx = true} : vector<8x1xf32> -> vector<8x1xf32>
    %55 = vector.broadcast %54 : vector<8x1xf32> to vector<8x8xf32>
    %56 = arith.mulf %51, %55 : vector<8x8xf32>
    %57 = arith.truncf %56 : vector<8x8xf32> to vector<8x8xbf16>
    %cst_13 = arith.constant dense<0.000000e+00> : vector<8x8xf32>
    %58 = tpu.matmul %57, %45, %cst_13 {dimension_numbers = #tpu.dot_dimension_numbers<[1], [0], [0], [1], [0, 0, 1, 1], [], []>} : vector<8x8xbf16>, vector<8x8xbf16>, vector<8x8xf32> -> vector<8x8xf32>
    %59 = vector.extract_strided_slice %7 {offsets = [0, 24], sizes = [8, 8], strides = [1, 1]} : vector<8x32xf32> to vector<8x8xf32>
    %60 = arith.truncf %59 : vector<8x8xf32> to vector<8x8xbf16>
    %61 = vector.extract_strided_slice %3 {offsets = [0, 24], sizes = [8, 8], strides = [1, 1]} : vector<8x32xbf16> to vector<8x8xbf16>
    %62 = vector.extract_strided_slice %4 {offsets = [0, 24], sizes = [8, 8], strides = [1, 1]} : vector<8x32xbf16> to vector<8x8xbf16>
    %cst_14 = arith.constant dense<0.000000e+00> : vector<8x8xf32>
    %63 = tpu.matmul %60, %61, %cst_14 {dimension_numbers = #tpu.dot_dimension_numbers<[1], [1], [0], [0], [0, 0, 1, 0], [], []>} : vector<8x8xbf16>, vector<8x8xbf16>, vector<8x8xf32> -> vector<8x8xf32>
    %cst_15 = arith.constant dense<0xFF800000> : vector<8xf32>
    %64 = vector.multi_reduction <maximumf>, %63, %cst_15 [1] : vector<8x8xf32> to vector<8xf32>
    %65 = vector.shape_cast %64 : vector<8xf32> to vector<8x1xf32>
    %66 = vector.broadcast %65 : vector<8x1xf32> to vector<8x8xf32>
    %67 = arith.subf %63, %66 : vector<8x8xf32>
    %68 = math.exp %67 : vector<8x8xf32>
    %cst_16 = arith.constant dense<0.000000e+00> : vector<8xf32>
    %69 = vector.multi_reduction <add>, %68, %cst_16 [1] : vector<8x8xf32> to vector<8xf32>
    %70 = vector.shape_cast %69 : vector<8xf32> to vector<8x1xf32>
    %71 = tpu.reciprocal %70 {approx = true} : vector<8x1xf32> -> vector<8x1xf32>
    %72 = vector.broadcast %71 : vector<8x1xf32> to vector<8x8xf32>
    %73 = arith.mulf %68, %72 : vector<8x8xf32>
    %74 = arith.truncf %73 : vector<8x8xf32> to vector<8x8xbf16>
    %cst_17 = arith.constant dense<0.000000e+00> : vector<8x8xf32>
    %75 = tpu.matmul %74, %62, %cst_17 {dimension_numbers = #tpu.dot_dimension_numbers<[1], [0], [0], [1], [0, 0, 1, 1], [], []>} : vector<8x8xbf16>, vector<8x8xbf16>, vector<8x8xf32> -> vector<8x8xf32>
    %76 = tpu.concatenate %24, %41, %58, %75 in 1 : vector<8x8xf32>, vector<8x8xf32>, vector<8x8xf32>, vector<8x8xf32> -> vector<8x32xf32>
    %77 = arith.truncf %76 : vector<8x32xf32> to vector<8x32xbf16>
    %c0_18 = arith.constant 0 : index
    %c0_19 = arith.constant 0 : index
    %c0_20 = arith.constant 0 : index
    %78 = vector.load %arg2[%c0_18, %c0_19, %c0_20] : memref<1x8x32xbf16, #tpu.memory_space<vmem>>, vector<1x8x32xbf16>
    %79 = vector.shape_cast %78 : vector<1x8x32xbf16> to vector<8x32xbf16>
    %80 = vector.shape_cast %77 : vector<8x32xbf16> to vector<1x8x32xbf16>
    tpu.vector_store %arg2[%c0_18, %c0_19, %c0_20], %80 {strides = array<i32>} : memref<1x8x32xbf16, #tpu.memory_space<vmem>>, vector<1x8x32xbf16>,
    return
  }
  func.func @transform_0(%arg0: i32) -> (i32, i32, i32) {
    %c0_i32 = arith.constant 0 : i32
    %c0_i32_0 = arith.constant 0 : i32
    %c0_i32_1 = arith.constant 0 : i32
    return %arg0, %c0_i32, %c0_i32_0 : i32, i32, i32
  }
  func.func @transform_1(%arg0: i32) -> (i32, i32, i32) {
    %c0_i32 = arith.constant 0 : i32
    %c0_i32_0 = arith.constant 0 : i32
    %c0_i32_1 = arith.constant 0 : i32
    return %arg0, %c0_i32, %c0_i32_0 : i32, i32, i32
  }
}

module attributes {stable_mosaic.version = 11 : i64} {
  func.func @_proj_res_ln_kernel(%arg0: i32, %arg1: memref<16x32xbf16, #tpu.memory_space<vmem>>, %arg2: memref<32x32xbf16, #tpu.memory_space<vmem>>, %arg3: memref<1x32xf32, #tpu.memory_space<vmem>>, %arg4: memref<16x32xf32, #tpu.memory_space<vmem>>, %arg5: memref<1x32xf32, #tpu.memory_space<vmem>>, %arg6: memref<1x32xf32, #tpu.memory_space<vmem>>, %arg7: memref<16x32xf32, #tpu.memory_space<vmem>>) attributes {dimension_semantics = [#tpu.dimension_semantics<parallel>], iteration_bounds = array<i64: 1>, scalar_prefetch = 0 : i64, scratch_operands = 0 : i64, tpu.core_type = #tpu.core_type<tc>, window_params = [{transform_indices = @transform_0, window_bounds = array<i64: 16, 32>}, {pipeline_mode = #tpu.pipeline_mode<synchronous>, transform_indices = @transform_1, window_bounds = array<i64: 32, 32>}, {pipeline_mode = #tpu.pipeline_mode<synchronous>, transform_indices = @transform_2, window_bounds = array<i64: 1, 32>}, {transform_indices = @transform_3, window_bounds = array<i64: 16, 32>}, {pipeline_mode = #tpu.pipeline_mode<synchronous>, transform_indices = @transform_4, window_bounds = array<i64: 1, 32>}, {pipeline_mode = #tpu.pipeline_mode<synchronous>, transform_indices = @transform_5, window_bounds = array<i64: 1, 32>}, {transform_indices = @transform_6, window_bounds = array<i64: 16, 32>}]} {
    %c0 = arith.constant 0 : index
    %c0_0 = arith.constant 0 : index
    %0 = vector.load %arg1[%c0, %c0_0] : memref<16x32xbf16, #tpu.memory_space<vmem>>, vector<16x32xbf16>
    %c0_1 = arith.constant 0 : index
    %c0_2 = arith.constant 0 : index
    %1 = vector.load %arg2[%c0_1, %c0_2] : memref<32x32xbf16, #tpu.memory_space<vmem>>, vector<32x32xbf16>
    %cst = arith.constant dense<0.000000e+00> : vector<16x32xf32>
    %2 = tpu.matmul %0, %1, %cst {dimension_numbers = #tpu.dot_dimension_numbers<[1], [0], [0], [1], [0, 0, 1, 1], [], []>} : vector<16x32xbf16>, vector<32x32xbf16>, vector<16x32xf32> -> vector<16x32xf32>
    %c0_3 = arith.constant 0 : index
    %c0_4 = arith.constant 0 : index
    %3 = vector.load %arg3[%c0_3, %c0_4] : memref<1x32xf32, #tpu.memory_space<vmem>>, vector<1x32xf32>
    %4 = vector.broadcast %3 : vector<1x32xf32> to vector<16x32xf32>
    %5 = arith.addf %2, %4 : vector<16x32xf32>
    %c0_5 = arith.constant 0 : index
    %c0_6 = arith.constant 0 : index
    %6 = vector.load %arg4[%c0_5, %c0_6] : memref<16x32xf32, #tpu.memory_space<vmem>>, vector<16x32xf32>
    %7 = arith.addf %5, %6 : vector<16x32xf32>
    %c0_7 = arith.constant 0 : index
    %c0_8 = arith.constant 0 : index
    %8 = vector.load %arg5[%c0_7, %c0_8] : memref<1x32xf32, #tpu.memory_space<vmem>>, vector<1x32xf32>
    %c0_9 = arith.constant 0 : index
    %c0_10 = arith.constant 0 : index
    %9 = vector.load %arg6[%c0_9, %c0_10] : memref<1x32xf32, #tpu.memory_space<vmem>>, vector<1x32xf32>
    %cst_11 = arith.constant dense<0.000000e+00> : vector<16xf32>
    %10 = vector.multi_reduction <add>, %7, %cst_11 [1] : vector<16x32xf32> to vector<16xf32>
    %11 = vector.shape_cast %10 : vector<16xf32> to vector<16x1xf32>
    %cst_12 = arith.constant 3.200000e+01 : f32
    %12 = vector.broadcast %cst_12 : f32 to vector<16x1xf32>
    %13 = arith.divf %11, %12 : vector<16x1xf32>
    %14 = vector.broadcast %13 : vector<16x1xf32> to vector<16x32xf32>
    %15 = arith.subf %7, %14 : vector<16x32xf32>
    %16 = arith.mulf %15, %15 : vector<16x32xf32>
    %cst_13 = arith.constant dense<0.000000e+00> : vector<16xf32>
    %17 = vector.multi_reduction <add>, %16, %cst_13 [1] : vector<16x32xf32> to vector<16xf32>
    %18 = vector.shape_cast %17 : vector<16xf32> to vector<16x1xf32>
    %cst_14 = arith.constant 3.200000e+01 : f32
    %19 = vector.broadcast %cst_14 : f32 to vector<16x1xf32>
    %20 = arith.divf %18, %19 : vector<16x1xf32>
    %cst_15 = arith.constant 9.99999974E-6 : f32
    %21 = vector.broadcast %cst_15 : f32 to vector<16x1xf32>
    %22 = arith.addf %20, %21 : vector<16x1xf32>
    %23 = math.rsqrt %22 : vector<16x1xf32>
    %24 = vector.broadcast %23 : vector<16x1xf32> to vector<16x32xf32>
    %25 = arith.mulf %15, %24 : vector<16x32xf32>
    %26 = vector.broadcast %8 : vector<1x32xf32> to vector<16x32xf32>
    %27 = arith.mulf %25, %26 : vector<16x32xf32>
    %28 = vector.broadcast %9 : vector<1x32xf32> to vector<16x32xf32>
    %29 = arith.addf %27, %28 : vector<16x32xf32>
    %c0_16 = arith.constant 0 : index
    %c0_17 = arith.constant 0 : index
    %30 = vector.load %arg7[%c0_16, %c0_17] : memref<16x32xf32, #tpu.memory_space<vmem>>, vector<16x32xf32>
    tpu.vector_store %arg7[%c0_16, %c0_17], %29 {strides = array<i32>} : memref<16x32xf32, #tpu.memory_space<vmem>>, vector<16x32xf32>,
    return
  }
  func.func @transform_0(%arg0: i32) -> (i32, i32) {
    %c0_i32 = arith.constant 0 : i32
    %c0_i32_0 = arith.constant 0 : i32
    return %arg0, %c0_i32 : i32, i32
  }
  func.func @transform_1(%arg0: i32) -> (i32, i32) {
    %c0_i32 = arith.constant 0 : i32
    %c0_i32_0 = arith.constant 0 : i32
    %c0_i32_1 = arith.constant 0 : i32
    return %c0_i32, %c0_i32_0 : i32, i32
  }
  func.func @transform_2(%arg0: i32) -> (i32, i32) {
    %c0_i32 = arith.constant 0 : i32
    %c0_i32_0 = arith.constant 0 : i32
    %c0_i32_1 = arith.constant 0 : i32
    return %c0_i32, %c0_i32_0 : i32, i32
  }
  func.func @transform_3(%arg0: i32) -> (i32, i32) {
    %c0_i32 = arith.constant 0 : i32
    %c0_i32_0 = arith.constant 0 : i32
    return %arg0, %c0_i32 : i32, i32
  }
  func.func @transform_4(%arg0: i32) -> (i32, i32) {
    %c0_i32 = arith.constant 0 : i32
    %c0_i32_0 = arith.constant 0 : i32
    %c0_i32_1 = arith.constant 0 : i32
    return %c0_i32, %c0_i32_0 : i32, i32
  }
  func.func @transform_5(%arg0: i32) -> (i32, i32) {
    %c0_i32 = arith.constant 0 : i32
    %c0_i32_0 = arith.constant 0 : i32
    %c0_i32_1 = arith.constant 0 : i32
    return %c0_i32, %c0_i32_0 : i32, i32
  }
  func.func @transform_6(%arg0: i32) -> (i32, i32) {
    %c0_i32 = arith.constant 0 : i32
    %c0_i32_0 = arith.constant 0 : i32
    return %arg0, %c0_i32 : i32, i32
  }
}

module attributes {stable_mosaic.version = 11 : i64} {
  func.func @_matmul_bias_kernel(%arg0: i32, %arg1: i32, %arg2: i32, %arg3: memref<16x32xf32, #tpu.memory_space<vmem>>, %arg4: memref<32x96xbf16, #tpu.memory_space<vmem>>, %arg5: memref<1x96xf32, #tpu.memory_space<vmem>>, %arg6: memref<16x96xbf16, #tpu.memory_space<vmem>>, %arg7: memref<16x96xf32, #tpu.memory_space<vmem>>) attributes {dimension_semantics = [#tpu.dimension_semantics<parallel>, #tpu.dimension_semantics<parallel>, #tpu.dimension_semantics<arbitrary>], iteration_bounds = array<i64: 1, 1, 1>, scalar_prefetch = 0 : i64, scratch_operands = 1 : i64, tpu.core_type = #tpu.core_type<tc>, window_params = [{transform_indices = @transform_0, window_bounds = array<i64: 16, 32>}, {transform_indices = @transform_1, window_bounds = array<i64: 32, 96>}, {transform_indices = @transform_2, window_bounds = array<i64: 1, 96>}, {transform_indices = @transform_3, window_bounds = array<i64: 16, 96>}]} {
    %c0_i32 = arith.constant 0 : i32
    %0 = arith.cmpi eq, %arg2, %c0_i32 : i32
    %1 = arith.extui %0 : i1 to i32
    %c0_i32_0 = arith.constant 0 : i32
    %2 = arith.cmpi ne, %1, %c0_i32_0 : i32
    scf.if %2 {
      %cst_10 = arith.constant 0.000000e+00 : f32
      %13 = vector.broadcast %cst_10 : f32 to vector<16x96xf32>
      %c0_11 = arith.constant 0 : index
      %c0_12 = arith.constant 0 : index
      %14 = vector.load %arg7[%c0_11, %c0_12] : memref<16x96xf32, #tpu.memory_space<vmem>>, vector<16x96xf32>
      tpu.vector_store %arg7[%c0_11, %c0_12], %13 {strides = array<i32>} : memref<16x96xf32, #tpu.memory_space<vmem>>, vector<16x96xf32>,
    } else {
    }
    %c0 = arith.constant 0 : index
    %c0_1 = arith.constant 0 : index
    %3 = vector.load %arg7[%c0, %c0_1] : memref<16x96xf32, #tpu.memory_space<vmem>>, vector<16x96xf32>
    %c0_2 = arith.constant 0 : index
    %c0_3 = arith.constant 0 : index
    %4 = vector.load %arg3[%c0_2, %c0_3] : memref<16x32xf32, #tpu.memory_space<vmem>>, vector<16x32xf32>
    %5 = arith.truncf %4 : vector<16x32xf32> to vector<16x32xbf16>
    %c0_4 = arith.constant 0 : index
    %c0_5 = arith.constant 0 : index
    %6 = vector.load %arg4[%c0_4, %c0_5] : memref<32x96xbf16, #tpu.memory_space<vmem>>, vector<32x96xbf16>
    %cst = arith.constant dense<0.000000e+00> : vector<16x96xf32>
    %7 = tpu.matmul %5, %6, %cst {dimension_numbers = #tpu.dot_dimension_numbers<[1], [0], [0], [1], [0, 0, 1, 1], [], []>} : vector<16x32xbf16>, vector<32x96xbf16>, vector<16x96xf32> -> vector<16x96xf32>
    %8 = arith.addf %3, %7 : vector<16x96xf32>
    %c0_6 = arith.constant 0 : index
    %c0_7 = arith.constant 0 : index
    %9 = vector.load %arg7[%c0_6, %c0_7] : memref<16x96xf32, #tpu.memory_space<vmem>>, vector<16x96xf32>
    tpu.vector_store %arg7[%c0_6, %c0_7], %8 {strides = array<i32>} : memref<16x96xf32, #tpu.memory_space<vmem>>, vector<16x96xf32>,
    %c0_i32_8 = arith.constant 0 : i32
    %10 = arith.cmpi eq, %arg2, %c0_i32_8 : i32
    %11 = arith.extui %10 : i1 to i32
    %c0_i32_9 = arith.constant 0 : i32
    %12 = arith.cmpi ne, %11, %c0_i32_9 : i32
    scf.if %12 {
      %c0_10 = arith.constant 0 : index
      %c0_11 = arith.constant 0 : index
      %13 = vector.load %arg7[%c0_10, %c0_11] : memref<16x96xf32, #tpu.memory_space<vmem>>, vector<16x96xf32>
      %c0_12 = arith.constant 0 : index
      %c0_13 = arith.constant 0 : index
      %14 = vector.load %arg5[%c0_12, %c0_13] : memref<1x96xf32, #tpu.memory_space<vmem>>, vector<1x96xf32>
      %15 = vector.broadcast %14 : vector<1x96xf32> to vector<16x96xf32>
      %16 = arith.addf %13, %15 : vector<16x96xf32>
      %17 = arith.truncf %16 : vector<16x96xf32> to vector<16x96xbf16>
      %c0_14 = arith.constant 0 : index
      %c0_15 = arith.constant 0 : index
      %18 = vector.load %arg6[%c0_14, %c0_15] : memref<16x96xbf16, #tpu.memory_space<vmem>>, vector<16x96xbf16>
      tpu.vector_store %arg6[%c0_14, %c0_15], %17 {strides = array<i32>} : memref<16x96xbf16, #tpu.memory_space<vmem>>, vector<16x96xbf16>,
    } else {
    }
    return
  }
  func.func @transform_0(%arg0: i32, %arg1: i32, %arg2: i32) -> (i32, i32) {
    %c0_i32 = arith.constant 0 : i32
    return %arg0, %arg2 : i32, i32
  }
  func.func @transform_1(%arg0: i32, %arg1: i32, %arg2: i32) -> (i32, i32) {
    %c0_i32 = arith.constant 0 : i32
    return %arg2, %arg1 : i32, i32
  }
  func.func @transform_2(%arg0: i32, %arg1: i32, %arg2: i32) -> (i32, i32) {
    %c0_i32 = arith.constant 0 : i32
    %c0_i32_0 = arith.constant 0 : i32
    return %c0_i32, %arg1 : i32, i32
  }
  func.func @transform_3(%arg0: i32, %arg1: i32, %arg2: i32) -> (i32, i32) {
    %c0_i32 = arith.constant 0 : i32
    return %arg0, %arg1 : i32, i32
  }
}

module attributes {stable_mosaic.version = 11 : i64} {
  func.func @_matmul_bias_kernel(%arg0: i32, %arg1: i32, %arg2: i32, %arg3: memref<16x32xf32, #tpu.memory_space<vmem>>, %arg4: memref<32x32xbf16, #tpu.memory_space<vmem>>, %arg5: memref<1x32xf32, #tpu.memory_space<vmem>>, %arg6: memref<16x32xbf16, #tpu.memory_space<vmem>>, %arg7: memref<16x32xf32, #tpu.memory_space<vmem>>) attributes {dimension_semantics = [#tpu.dimension_semantics<parallel>, #tpu.dimension_semantics<parallel>, #tpu.dimension_semantics<arbitrary>], iteration_bounds = array<i64: 1, 1, 1>, scalar_prefetch = 0 : i64, scratch_operands = 1 : i64, tpu.core_type = #tpu.core_type<tc>, window_params = [{transform_indices = @transform_0, window_bounds = array<i64: 16, 32>}, {transform_indices = @transform_1, window_bounds = array<i64: 32, 32>}, {transform_indices = @transform_2, window_bounds = array<i64: 1, 32>}, {transform_indices = @transform_3, window_bounds = array<i64: 16, 32>}]} {
    %c0_i32 = arith.constant 0 : i32
    %0 = arith.cmpi eq, %arg2, %c0_i32 : i32
    %1 = arith.extui %0 : i1 to i32
    %c0_i32_0 = arith.constant 0 : i32
    %2 = arith.cmpi ne, %1, %c0_i32_0 : i32
    scf.if %2 {
      %cst_10 = arith.constant 0.000000e+00 : f32
      %13 = vector.broadcast %cst_10 : f32 to vector<16x32xf32>
      %c0_11 = arith.constant 0 : index
      %c0_12 = arith.constant 0 : index
      %14 = vector.load %arg7[%c0_11, %c0_12] : memref<16x32xf32, #tpu.memory_space<vmem>>, vector<16x32xf32>
      tpu.vector_store %arg7[%c0_11, %c0_12], %13 {strides = array<i32>} : memref<16x32xf32, #tpu.memory_space<vmem>>, vector<16x32xf32>,
    } else {
    }
    %c0 = arith.constant 0 : index
    %c0_1 = arith.constant 0 : index
    %3 = vector.load %arg7[%c0, %c0_1] : memref<16x32xf32, #tpu.memory_space<vmem>>, vector<16x32xf32>
    %c0_2 = arith.constant 0 : index
    %c0_3 = arith.constant 0 : index
    %4 = vector.load %arg3[%c0_2, %c0_3] : memref<16x32xf32, #tpu.memory_space<vmem>>, vector<16x32xf32>
    %5 = arith.truncf %4 : vector<16x32xf32> to vector<16x32xbf16>
    %c0_4 = arith.constant 0 : index
    %c0_5 = arith.constant 0 : index
    %6 = vector.load %arg4[%c0_4, %c0_5] : memref<32x32xbf16, #tpu.memory_space<vmem>>, vector<32x32xbf16>
    %cst = arith.constant dense<0.000000e+00> : vector<16x32xf32>
    %7 = tpu.matmul %5, %6, %cst {dimension_numbers = #tpu.dot_dimension_numbers<[1], [0], [0], [1], [0, 0, 1, 1], [], []>} : vector<16x32xbf16>, vector<32x32xbf16>, vector<16x32xf32> -> vector<16x32xf32>
    %8 = arith.addf %3, %7 : vector<16x32xf32>
    %c0_6 = arith.constant 0 : index
    %c0_7 = arith.constant 0 : index
    %9 = vector.load %arg7[%c0_6, %c0_7] : memref<16x32xf32, #tpu.memory_space<vmem>>, vector<16x32xf32>
    tpu.vector_store %arg7[%c0_6, %c0_7], %8 {strides = array<i32>} : memref<16x32xf32, #tpu.memory_space<vmem>>, vector<16x32xf32>,
    %c0_i32_8 = arith.constant 0 : i32
    %10 = arith.cmpi eq, %arg2, %c0_i32_8 : i32
    %11 = arith.extui %10 : i1 to i32
    %c0_i32_9 = arith.constant 0 : i32
    %12 = arith.cmpi ne, %11, %c0_i32_9 : i32
    scf.if %12 {
      %c0_10 = arith.constant 0 : index
      %c0_11 = arith.constant 0 : index
      %13 = vector.load %arg7[%c0_10, %c0_11] : memref<16x32xf32, #tpu.memory_space<vmem>>, vector<16x32xf32>
      %c0_12 = arith.constant 0 : index
      %c0_13 = arith.constant 0 : index
      %14 = vector.load %arg5[%c0_12, %c0_13] : memref<1x32xf32, #tpu.memory_space<vmem>>, vector<1x32xf32>
      %15 = vector.broadcast %14 : vector<1x32xf32> to vector<16x32xf32>
      %16 = arith.addf %13, %15 : vector<16x32xf32>
      %17 = arith.truncf %16 : vector<16x32xf32> to vector<16x32xbf16>
      %c0_14 = arith.constant 0 : index
      %c0_15 = arith.constant 0 : index
      %18 = vector.load %arg6[%c0_14, %c0_15] : memref<16x32xbf16, #tpu.memory_space<vmem>>, vector<16x32xbf16>
      tpu.vector_store %arg6[%c0_14, %c0_15], %17 {strides = array<i32>} : memref<16x32xbf16, #tpu.memory_space<vmem>>, vector<16x32xbf16>,
    } else {
    }
    return
  }
  func.func @transform_0(%arg0: i32, %arg1: i32, %arg2: i32) -> (i32, i32) {
    %c0_i32 = arith.constant 0 : i32
    return %arg0, %arg2 : i32, i32
  }
  func.func @transform_1(%arg0: i32, %arg1: i32, %arg2: i32) -> (i32, i32) {
    %c0_i32 = arith.constant 0 : i32
    return %arg2, %arg1 : i32, i32
  }
  func.func @transform_2(%arg0: i32, %arg1: i32, %arg2: i32) -> (i32, i32) {
    %c0_i32 = arith.constant 0 : i32
    %c0_i32_0 = arith.constant 0 : i32
    return %c0_i32, %arg1 : i32, i32
  }
  func.func @transform_3(%arg0: i32, %arg1: i32, %arg2: i32) -> (i32, i32) {
    %c0_i32 = arith.constant 0 : i32
    return %arg0, %arg1 : i32, i32
  }
}

module attributes {stable_mosaic.version = 11 : i64} {
  func.func @_matmul_bias_kernel(%arg0: i32, %arg1: i32, %arg2: i32, %arg3: memref<16x32xf32, #tpu.memory_space<vmem>>, %arg4: memref<32x64xbf16, #tpu.memory_space<vmem>>, %arg5: memref<1x64xf32, #tpu.memory_space<vmem>>, %arg6: memref<16x64xbf16, #tpu.memory_space<vmem>>, %arg7: memref<16x64xf32, #tpu.memory_space<vmem>>) attributes {dimension_semantics = [#tpu.dimension_semantics<parallel>, #tpu.dimension_semantics<parallel>, #tpu.dimension_semantics<arbitrary>], iteration_bounds = array<i64: 1, 1, 1>, scalar_prefetch = 0 : i64, scratch_operands = 1 : i64, tpu.core_type = #tpu.core_type<tc>, window_params = [{transform_indices = @transform_0, window_bounds = array<i64: 16, 32>}, {transform_indices = @transform_1, window_bounds = array<i64: 32, 64>}, {transform_indices = @transform_2, window_bounds = array<i64: 1, 64>}, {transform_indices = @transform_3, window_bounds = array<i64: 16, 64>}]} {
    %c0_i32 = arith.constant 0 : i32
    %0 = arith.cmpi eq, %arg2, %c0_i32 : i32
    %1 = arith.extui %0 : i1 to i32
    %c0_i32_0 = arith.constant 0 : i32
    %2 = arith.cmpi ne, %1, %c0_i32_0 : i32
    scf.if %2 {
      %cst_10 = arith.constant 0.000000e+00 : f32
      %13 = vector.broadcast %cst_10 : f32 to vector<16x64xf32>
      %c0_11 = arith.constant 0 : index
      %c0_12 = arith.constant 0 : index
      %14 = vector.load %arg7[%c0_11, %c0_12] : memref<16x64xf32, #tpu.memory_space<vmem>>, vector<16x64xf32>
      tpu.vector_store %arg7[%c0_11, %c0_12], %13 {strides = array<i32>} : memref<16x64xf32, #tpu.memory_space<vmem>>, vector<16x64xf32>,
    } else {
    }
    %c0 = arith.constant 0 : index
    %c0_1 = arith.constant 0 : index
    %3 = vector.load %arg7[%c0, %c0_1] : memref<16x64xf32, #tpu.memory_space<vmem>>, vector<16x64xf32>
    %c0_2 = arith.constant 0 : index
    %c0_3 = arith.constant 0 : index
    %4 = vector.load %arg3[%c0_2, %c0_3] : memref<16x32xf32, #tpu.memory_space<vmem>>, vector<16x32xf32>
    %5 = arith.truncf %4 : vector<16x32xf32> to vector<16x32xbf16>
    %c0_4 = arith.constant 0 : index
    %c0_5 = arith.constant 0 : index
    %6 = vector.load %arg4[%c0_4, %c0_5] : memref<32x64xbf16, #tpu.memory_space<vmem>>, vector<32x64xbf16>
    %cst = arith.constant dense<0.000000e+00> : vector<16x64xf32>
    %7 = tpu.matmul %5, %6, %cst {dimension_numbers = #tpu.dot_dimension_numbers<[1], [0], [0], [1], [0, 0, 1, 1], [], []>} : vector<16x32xbf16>, vector<32x64xbf16>, vector<16x64xf32> -> vector<16x64xf32>
    %8 = arith.addf %3, %7 : vector<16x64xf32>
    %c0_6 = arith.constant 0 : index
    %c0_7 = arith.constant 0 : index
    %9 = vector.load %arg7[%c0_6, %c0_7] : memref<16x64xf32, #tpu.memory_space<vmem>>, vector<16x64xf32>
    tpu.vector_store %arg7[%c0_6, %c0_7], %8 {strides = array<i32>} : memref<16x64xf32, #tpu.memory_space<vmem>>, vector<16x64xf32>,
    %c0_i32_8 = arith.constant 0 : i32
    %10 = arith.cmpi eq, %arg2, %c0_i32_8 : i32
    %11 = arith.extui %10 : i1 to i32
    %c0_i32_9 = arith.constant 0 : i32
    %12 = arith.cmpi ne, %11, %c0_i32_9 : i32
    scf.if %12 {
      %c0_10 = arith.constant 0 : index
      %c0_11 = arith.constant 0 : index
      %13 = vector.load %arg7[%c0_10, %c0_11] : memref<16x64xf32, #tpu.memory_space<vmem>>, vector<16x64xf32>
      %c0_12 = arith.constant 0 : index
      %c0_13 = arith.constant 0 : index
      %14 = vector.load %arg5[%c0_12, %c0_13] : memref<1x64xf32, #tpu.memory_space<vmem>>, vector<1x64xf32>
      %15 = vector.broadcast %14 : vector<1x64xf32> to vector<16x64xf32>
      %16 = arith.addf %13, %15 : vector<16x64xf32>
      %17 = arith.truncf %16 : vector<16x64xf32> to vector<16x64xbf16>
      %c0_14 = arith.constant 0 : index
      %c0_15 = arith.constant 0 : index
      %18 = vector.load %arg6[%c0_14, %c0_15] : memref<16x64xbf16, #tpu.memory_space<vmem>>, vector<16x64xbf16>
      tpu.vector_store %arg6[%c0_14, %c0_15], %17 {strides = array<i32>} : memref<16x64xbf16, #tpu.memory_space<vmem>>, vector<16x64xbf16>,
    } else {
    }
    return
  }
  func.func @transform_0(%arg0: i32, %arg1: i32, %arg2: i32) -> (i32, i32) {
    %c0_i32 = arith.constant 0 : i32
    return %arg0, %arg2 : i32, i32
  }
  func.func @transform_1(%arg0: i32, %arg1: i32, %arg2: i32) -> (i32, i32) {
    %c0_i32 = arith.constant 0 : i32
    return %arg2, %arg1 : i32, i32
  }
  func.func @transform_2(%arg0: i32, %arg1: i32, %arg2: i32) -> (i32, i32) {
    %c0_i32 = arith.constant 0 : i32
    %c0_i32_0 = arith.constant 0 : i32
    return %c0_i32, %arg1 : i32, i32
  }
  func.func @transform_3(%arg0: i32, %arg1: i32, %arg2: i32) -> (i32, i32) {
    %c0_i32 = arith.constant 0 : i32
    return %arg0, %arg1 : i32, i32
  }
}

module attributes {stable_mosaic.version = 11 : i64} {
  func.func @_cross_attn_kernel(%arg0: i32, %arg1: memref<1x8x32xbf16, #tpu.memory_space<vmem>>, %arg2: memref<1x8x64xbf16, #tpu.memory_space<vmem>>, %arg3: memref<1x8x32xbf16, #tpu.memory_space<vmem>>) attributes {dimension_semantics = [#tpu.dimension_semantics<parallel>], iteration_bounds = array<i64: 2>, scalar_prefetch = 0 : i64, scratch_operands = 0 : i64, tpu.core_type = #tpu.core_type<tc>, window_params = [{transform_indices = @transform_0, window_bounds = array<i64: 1, 8, 32>}, {transform_indices = @transform_1, window_bounds = array<i64: 1, 8, 64>}, {transform_indices = @transform_2, window_bounds = array<i64: 1, 8, 32>}]} {
    %c0 = arith.constant 0 : index
    %c0_0 = arith.constant 0 : index
    %c0_1 = arith.constant 0 : index
    %0 = vector.load %arg1[%c0, %c0_0, %c0_1] : memref<1x8x32xbf16, #tpu.memory_space<vmem>>, vector<1x8x32xbf16>
    %1 = vector.shape_cast %0 : vector<1x8x32xbf16> to vector<8x32xbf16>
    %c0_2 = arith.constant 0 : index
    %c0_3 = arith.constant 0 : index
    %c0_4 = arith.constant 0 : index
    %2 = vector.load %arg2[%c0_2, %c0_3, %c0_4] : memref<1x8x64xbf16, #tpu.memory_space<vmem>>, vector<1x8x64xbf16>
    %3 = vector.shape_cast %2 : vector<1x8x64xbf16> to vector<8x64xbf16>
    %4 = vector.extract_strided_slice %3 {offsets = [0, 0], sizes = [8, 32], strides = [1, 1]} : vector<8x64xbf16> to vector<8x32xbf16>
    %5 = vector.extract_strided_slice %3 {offsets = [0, 32], sizes = [8, 32], strides = [1, 1]} : vector<8x64xbf16> to vector<8x32xbf16>
    %6 = arith.extf %1 : vector<8x32xbf16> to vector<8x32xf32>
    %cst = arith.constant 0.353553385 : f32
    %7 = vector.broadcast %cst : f32 to vector<8x32xf32>
    %8 = arith.mulf %6, %7 : vector<8x32xf32>
    %9 = vector.extract_strided_slice %8 {offsets = [0, 0], sizes = [8, 8], strides = [1, 1]} : vector<8x32xf32> to vector<8x8xf32>
    %10 = arith.truncf %9 : vector<8x8xf32> to vector<8x8xbf16>
    %11 = vector.extract_strided_slice %4 {offsets = [0, 0], sizes = [8, 8], strides = [1, 1]} : vector<8x32xbf16> to vector<8x8xbf16>
    %12 = vector.extract_strided_slice %5 {offsets = [0, 0], sizes = [8, 8], strides = [1, 1]} : vector<8x32xbf16> to vector<8x8xbf16>
    %cst_5 = arith.constant dense<0.000000e+00> : vector<8x8xf32>
    %13 = tpu.matmul %10, %11, %cst_5 {dimension_numbers = #tpu.dot_dimension_numbers<[1], [1], [0], [0], [0, 0, 1, 0], [], []>} : vector<8x8xbf16>, vector<8x8xbf16>, vector<8x8xf32> -> vector<8x8xf32>
    %cst_6 = arith.constant dense<0xFF800000> : vector<8xf32>
    %14 = vector.multi_reduction <maximumf>, %13, %cst_6 [1] : vector<8x8xf32> to vector<8xf32>
    %15 = vector.shape_cast %14 : vector<8xf32> to vector<8x1xf32>
    %16 = vector.broadcast %15 : vector<8x1xf32> to vector<8x8xf32>
    %17 = arith.subf %13, %16 : vector<8x8xf32>
    %18 = math.exp %17 : vector<8x8xf32>
    %cst_7 = arith.constant dense<0.000000e+00> : vector<8xf32>
    %19 = vector.multi_reduction <add>, %18, %cst_7 [1] : vector<8x8xf32> to vector<8xf32>
    %20 = vector.shape_cast %19 : vector<8xf32> to vector<8x1xf32>
    %21 = tpu.reciprocal %20 {approx = true} : vector<8x1xf32> -> vector<8x1xf32>
    %22 = vector.broadcast %21 : vector<8x1xf32> to vector<8x8xf32>
    %23 = arith.mulf %18, %22 : vector<8x8xf32>
    %24 = arith.truncf %23 : vector<8x8xf32> to vector<8x8xbf16>
    %cst_8 = arith.constant dense<0.000000e+00> : vector<8x8xf32>
    %25 = tpu.matmul %24, %12, %cst_8 {dimension_numbers = #tpu.dot_dimension_numbers<[1], [0], [0], [1], [0, 0, 1, 1], [], []>} : vector<8x8xbf16>, vector<8x8xbf16>, vector<8x8xf32> -> vector<8x8xf32>
    %26 = vector.extract_strided_slice %8 {offsets = [0, 8], sizes = [8, 8], strides = [1, 1]} : vector<8x32xf32> to vector<8x8xf32>
    %27 = arith.truncf %26 : vector<8x8xf32> to vector<8x8xbf16>
    %28 = vector.extract_strided_slice %4 {offsets = [0, 8], sizes = [8, 8], strides = [1, 1]} : vector<8x32xbf16> to vector<8x8xbf16>
    %29 = vector.extract_strided_slice %5 {offsets = [0, 8], sizes = [8, 8], strides = [1, 1]} : vector<8x32xbf16> to vector<8x8xbf16>
    %cst_9 = arith.constant dense<0.000000e+00> : vector<8x8xf32>
    %30 = tpu.matmul %27, %28, %cst_9 {dimension_numbers = #tpu.dot_dimension_numbers<[1], [1], [0], [0], [0, 0, 1, 0], [], []>} : vector<8x8xbf16>, vector<8x8xbf16>, vector<8x8xf32> -> vector<8x8xf32>
    %cst_10 = arith.constant dense<0xFF800000> : vector<8xf32>
    %31 = vector.multi_reduction <maximumf>, %30, %cst_10 [1] : vector<8x8xf32> to vector<8xf32>
    %32 = vector.shape_cast %31 : vector<8xf32> to vector<8x1xf32>
    %33 = vector.broadcast %32 : vector<8x1xf32> to vector<8x8xf32>
    %34 = arith.subf %30, %33 : vector<8x8xf32>
    %35 = math.exp %34 : vector<8x8xf32>
    %cst_11 = arith.constant dense<0.000000e+00> : vector<8xf32>
    %36 = vector.multi_reduction <add>, %35, %cst_11 [1] : vector<8x8xf32> to vector<8xf32>
    %37 = vector.shape_cast %36 : vector<8xf32> to vector<8x1xf32>
    %38 = tpu.reciprocal %37 {approx = true} : vector<8x1xf32> -> vector<8x1xf32>
    %39 = vector.broadcast %38 : vector<8x1xf32> to vector<8x8xf32>
    %40 = arith.mulf %35, %39 : vector<8x8xf32>
    %41 = arith.truncf %40 : vector<8x8xf32> to vector<8x8xbf16>
    %cst_12 = arith.constant dense<0.000000e+00> : vector<8x8xf32>
    %42 = tpu.matmul %41, %29, %cst_12 {dimension_numbers = #tpu.dot_dimension_numbers<[1], [0], [0], [1], [0, 0, 1, 1], [], []>} : vector<8x8xbf16>, vector<8x8xbf16>, vector<8x8xf32> -> vector<8x8xf32>
    %43 = vector.extract_strided_slice %8 {offsets = [0, 16], sizes = [8, 8], strides = [1, 1]} : vector<8x32xf32> to vector<8x8xf32>
    %44 = arith.truncf %43 : vector<8x8xf32> to vector<8x8xbf16>
    %45 = vector.extract_strided_slice %4 {offsets = [0, 16], sizes = [8, 8], strides = [1, 1]} : vector<8x32xbf16> to vector<8x8xbf16>
    %46 = vector.extract_strided_slice %5 {offsets = [0, 16], sizes = [8, 8], strides = [1, 1]} : vector<8x32xbf16> to vector<8x8xbf16>
    %cst_13 = arith.constant dense<0.000000e+00> : vector<8x8xf32>
    %47 = tpu.matmul %44, %45, %cst_13 {dimension_numbers = #tpu.dot_dimension_numbers<[1], [1], [0], [0], [0, 0, 1, 0], [], []>} : vector<8x8xbf16>, vector<8x8xbf16>, vector<8x8xf32> -> vector<8x8xf32>
    %cst_14 = arith.constant dense<0xFF800000> : vector<8xf32>
    %48 = vector.multi_reduction <maximumf>, %47, %cst_14 [1] : vector<8x8xf32> to vector<8xf32>
    %49 = vector.shape_cast %48 : vector<8xf32> to vector<8x1xf32>
    %50 = vector.broadcast %49 : vector<8x1xf32> to vector<8x8xf32>
    %51 = arith.subf %47, %50 : vector<8x8xf32>
    %52 = math.exp %51 : vector<8x8xf32>
    %cst_15 = arith.constant dense<0.000000e+00> : vector<8xf32>
    %53 = vector.multi_reduction <add>, %52, %cst_15 [1] : vector<8x8xf32> to vector<8xf32>
    %54 = vector.shape_cast %53 : vector<8xf32> to vector<8x1xf32>
    %55 = tpu.reciprocal %54 {approx = true} : vector<8x1xf32> -> vector<8x1xf32>
    %56 = vector.broadcast %55 : vector<8x1xf32> to vector<8x8xf32>
    %57 = arith.mulf %52, %56 : vector<8x8xf32>
    %58 = arith.truncf %57 : vector<8x8xf32> to vector<8x8xbf16>
    %cst_16 = arith.constant dense<0.000000e+00> : vector<8x8xf32>
    %59 = tpu.matmul %58, %46, %cst_16 {dimension_numbers = #tpu.dot_dimension_numbers<[1], [0], [0], [1], [0, 0, 1, 1], [], []>} : vector<8x8xbf16>, vector<8x8xbf16>, vector<8x8xf32> -> vector<8x8xf32>
    %60 = vector.extract_strided_slice %8 {offsets = [0, 24], sizes = [8, 8], strides = [1, 1]} : vector<8x32xf32> to vector<8x8xf32>
    %61 = arith.truncf %60 : vector<8x8xf32> to vector<8x8xbf16>
    %62 = vector.extract_strided_slice %4 {offsets = [0, 24], sizes = [8, 8], strides = [1, 1]} : vector<8x32xbf16> to vector<8x8xbf16>
    %63 = vector.extract_strided_slice %5 {offsets = [0, 24], sizes = [8, 8], strides = [1, 1]} : vector<8x32xbf16> to vector<8x8xbf16>
    %cst_17 = arith.constant dense<0.000000e+00> : vector<8x8xf32>
    %64 = tpu.matmul %61, %62, %cst_17 {dimension_numbers = #tpu.dot_dimension_numbers<[1], [1], [0], [0], [0, 0, 1, 0], [], []>} : vector<8x8xbf16>, vector<8x8xbf16>, vector<8x8xf32> -> vector<8x8xf32>
    %cst_18 = arith.constant dense<0xFF800000> : vector<8xf32>
    %65 = vector.multi_reduction <maximumf>, %64, %cst_18 [1] : vector<8x8xf32> to vector<8xf32>
    %66 = vector.shape_cast %65 : vector<8xf32> to vector<8x1xf32>
    %67 = vector.broadcast %66 : vector<8x1xf32> to vector<8x8xf32>
    %68 = arith.subf %64, %67 : vector<8x8xf32>
    %69 = math.exp %68 : vector<8x8xf32>
    %cst_19 = arith.constant dense<0.000000e+00> : vector<8xf32>
    %70 = vector.multi_reduction <add>, %69, %cst_19 [1] : vector<8x8xf32> to vector<8xf32>
    %71 = vector.shape_cast %70 : vector<8xf32> to vector<8x1xf32>
    %72 = tpu.reciprocal %71 {approx = true} : vector<8x1xf32> -> vector<8x1xf32>
    %73 = vector.broadcast %72 : vector<8x1xf32> to vector<8x8xf32>
    %74 = arith.mulf %69, %73 : vector<8x8xf32>
    %75 = arith.truncf %74 : vector<8x8xf32> to vector<8x8xbf16>
    %cst_20 = arith.constant dense<0.000000e+00> : vector<8x8xf32>
    %76 = tpu.matmul %75, %63, %cst_20 {dimension_numbers = #tpu.dot_dimension_numbers<[1], [0], [0], [1], [0, 0, 1, 1], [], []>} : vector<8x8xbf16>, vector<8x8xbf16>, vector<8x8xf32> -> vector<8x8xf32>
    %77 = tpu.concatenate %25, %42, %59, %76 in 1 : vector<8x8xf32>, vector<8x8xf32>, vector<8x8xf32>, vector<8x8xf32> -> vector<8x32xf32>
    %78 = arith.truncf %77 : vector<8x32xf32> to vector<8x32xbf16>
    %c0_21 = arith.constant 0 : index
    %c0_22 = arith.constant 0 : index
    %c0_23 = arith.constant 0 : index
    %79 = vector.load %arg3[%c0_21, %c0_22, %c0_23] : memref<1x8x32xbf16, #tpu.memory_space<vmem>>, vector<1x8x32xbf16>
    %80 = vector.shape_cast %79 : vector<1x8x32xbf16> to vector<8x32xbf16>
    %81 = vector.shape_cast %78 : vector<8x32xbf16> to vector<1x8x32xbf16>
    tpu.vector_store %arg3[%c0_21, %c0_22, %c0_23], %81 {strides = array<i32>} : memref<1x8x32xbf16, #tpu.memory_space<vmem>>, vector<1x8x32xbf16>,
    return
  }
  func.func @transform_0(%arg0: i32) -> (i32, i32, i32) {
    %c0_i32 = arith.constant 0 : i32
    %c0_i32_0 = arith.constant 0 : i32
    %c0_i32_1 = arith.constant 0 : i32
    return %arg0, %c0_i32, %c0_i32_0 : i32, i32, i32
  }
  func.func @transform_1(%arg0: i32) -> (i32, i32, i32) {
    %c0_i32 = arith.constant 0 : i32
    %c0_i32_0 = arith.constant 0 : i32
    %c0_i32_1 = arith.constant 0 : i32
    return %arg0, %c0_i32, %c0_i32_0 : i32, i32, i32
  }
  func.func @transform_2(%arg0: i32) -> (i32, i32, i32) {
    %c0_i32 = arith.constant 0 : i32
    %c0_i32_0 = arith.constant 0 : i32
    %c0_i32_1 = arith.constant 0 : i32
    return %arg0, %c0_i32, %c0_i32_0 : i32, i32, i32
  }
}

module attributes {stable_mosaic.version = 11 : i64} {
  func.func @_ffn_res_ln_kernel(%arg0: i32, %arg1: memref<16x32xf32, #tpu.memory_space<vmem>>, %arg2: memref<32x64xbf16, #tpu.memory_space<vmem>>, %arg3: memref<1x64xf32, #tpu.memory_space<vmem>>, %arg4: memref<64x32xbf16, #tpu.memory_space<vmem>>, %arg5: memref<1x32xf32, #tpu.memory_space<vmem>>, %arg6: memref<1x32xf32, #tpu.memory_space<vmem>>, %arg7: memref<1x32xf32, #tpu.memory_space<vmem>>, %arg8: memref<16x32xf32, #tpu.memory_space<vmem>>) attributes {dimension_semantics = [#tpu.dimension_semantics<parallel>], iteration_bounds = array<i64: 1>, scalar_prefetch = 0 : i64, scratch_operands = 0 : i64, tpu.core_type = #tpu.core_type<tc>, window_params = [{transform_indices = @transform_0, window_bounds = array<i64: 16, 32>}, {pipeline_mode = #tpu.pipeline_mode<synchronous>, transform_indices = @transform_1, window_bounds = array<i64: 32, 64>}, {pipeline_mode = #tpu.pipeline_mode<synchronous>, transform_indices = @transform_2, window_bounds = array<i64: 1, 64>}, {pipeline_mode = #tpu.pipeline_mode<synchronous>, transform_indices = @transform_3, window_bounds = array<i64: 64, 32>}, {pipeline_mode = #tpu.pipeline_mode<synchronous>, transform_indices = @transform_4, window_bounds = array<i64: 1, 32>}, {pipeline_mode = #tpu.pipeline_mode<synchronous>, transform_indices = @transform_5, window_bounds = array<i64: 1, 32>}, {pipeline_mode = #tpu.pipeline_mode<synchronous>, transform_indices = @transform_6, window_bounds = array<i64: 1, 32>}, {transform_indices = @transform_7, window_bounds = array<i64: 16, 32>}]} {
    %c0 = arith.constant 0 : index
    %c0_0 = arith.constant 0 : index
    %0 = vector.load %arg1[%c0, %c0_0] : memref<16x32xf32, #tpu.memory_space<vmem>>, vector<16x32xf32>
    %1 = arith.truncf %0 : vector<16x32xf32> to vector<16x32xbf16>
    %c0_1 = arith.constant 0 : index
    %c0_2 = arith.constant 0 : index
    %2 = vector.load %arg2[%c0_1, %c0_2] : memref<32x64xbf16, #tpu.memory_space<vmem>>, vector<32x64xbf16>
    %cst = arith.constant dense<0.000000e+00> : vector<16x64xf32>
    %3 = tpu.matmul %1, %2, %cst {dimension_numbers = #tpu.dot_dimension_numbers<[1], [0], [0], [1], [0, 0, 1, 1], [], []>} : vector<16x32xbf16>, vector<32x64xbf16>, vector<16x64xf32> -> vector<16x64xf32>
    %c0_3 = arith.constant 0 : index
    %c0_4 = arith.constant 0 : index
    %4 = vector.load %arg3[%c0_3, %c0_4] : memref<1x64xf32, #tpu.memory_space<vmem>>, vector<1x64xf32>
    %5 = vector.broadcast %4 : vector<1x64xf32> to vector<16x64xf32>
    %6 = arith.addf %3, %5 : vector<16x64xf32>
    %cst_5 = arith.constant 0.000000e+00 : f32
    %7 = vector.broadcast %cst_5 : f32 to vector<16x64xf32>
    %8 = arith.maximumf %6, %7 : vector<16x64xf32>
    %9 = arith.truncf %8 : vector<16x64xf32> to vector<16x64xbf16>
    %c0_6 = arith.constant 0 : index
    %c0_7 = arith.constant 0 : index
    %10 = vector.load %arg4[%c0_6, %c0_7] : memref<64x32xbf16, #tpu.memory_space<vmem>>, vector<64x32xbf16>
    %cst_8 = arith.constant dense<0.000000e+00> : vector<16x32xf32>
    %11 = tpu.matmul %9, %10, %cst_8 {dimension_numbers = #tpu.dot_dimension_numbers<[1], [0], [0], [1], [0, 0, 1, 1], [], []>} : vector<16x64xbf16>, vector<64x32xbf16>, vector<16x32xf32> -> vector<16x32xf32>
    %c0_9 = arith.constant 0 : index
    %c0_10 = arith.constant 0 : index
    %12 = vector.load %arg5[%c0_9, %c0_10] : memref<1x32xf32, #tpu.memory_space<vmem>>, vector<1x32xf32>
    %13 = vector.broadcast %12 : vector<1x32xf32> to vector<16x32xf32>
    %14 = arith.addf %11, %13 : vector<16x32xf32>
    %c0_11 = arith.constant 0 : index
    %c0_12 = arith.constant 0 : index
    %15 = vector.load %arg1[%c0_11, %c0_12] : memref<16x32xf32, #tpu.memory_space<vmem>>, vector<16x32xf32>
    %16 = arith.addf %14, %15 : vector<16x32xf32>
    %c0_13 = arith.constant 0 : index
    %c0_14 = arith.constant 0 : index
    %17 = vector.load %arg6[%c0_13, %c0_14] : memref<1x32xf32, #tpu.memory_space<vmem>>, vector<1x32xf32>
    %c0_15 = arith.constant 0 : index
    %c0_16 = arith.constant 0 : index
    %18 = vector.load %arg7[%c0_15, %c0_16] : memref<1x32xf32, #tpu.memory_space<vmem>>, vector<1x32xf32>
    %cst_17 = arith.constant dense<0.000000e+00> : vector<16xf32>
    %19 = vector.multi_reduction <add>, %16, %cst_17 [1] : vector<16x32xf32> to vector<16xf32>
    %20 = vector.shape_cast %19 : vector<16xf32> to vector<16x1xf32>
    %cst_18 = arith.constant 3.200000e+01 : f32
    %21 = vector.broadcast %cst_18 : f32 to vector<16x1xf32>
    %22 = arith.divf %20, %21 : vector<16x1xf32>
    %23 = vector.broadcast %22 : vector<16x1xf32> to vector<16x32xf32>
    %24 = arith.subf %16, %23 : vector<16x32xf32>
    %25 = arith.mulf %24, %24 : vector<16x32xf32>
    %cst_19 = arith.constant dense<0.000000e+00> : vector<16xf32>
    %26 = vector.multi_reduction <add>, %25, %cst_19 [1] : vector<16x32xf32> to vector<16xf32>
    %27 = vector.shape_cast %26 : vector<16xf32> to vector<16x1xf32>
    %cst_20 = arith.constant 3.200000e+01 : f32
    %28 = vector.broadcast %cst_20 : f32 to vector<16x1xf32>
    %29 = arith.divf %27, %28 : vector<16x1xf32>
    %cst_21 = arith.constant 9.99999974E-6 : f32
    %30 = vector.broadcast %cst_21 : f32 to vector<16x1xf32>
    %31 = arith.addf %29, %30 : vector<16x1xf32>
    %32 = math.rsqrt %31 : vector<16x1xf32>
    %33 = vector.broadcast %32 : vector<16x1xf32> to vector<16x32xf32>
    %34 = arith.mulf %24, %33 : vector<16x32xf32>
    %35 = vector.broadcast %17 : vector<1x32xf32> to vector<16x32xf32>
    %36 = arith.mulf %34, %35 : vector<16x32xf32>
    %37 = vector.broadcast %18 : vector<1x32xf32> to vector<16x32xf32>
    %38 = arith.addf %36, %37 : vector<16x32xf32>
    %c0_22 = arith.constant 0 : index
    %c0_23 = arith.constant 0 : index
    %39 = vector.load %arg8[%c0_22, %c0_23] : memref<16x32xf32, #tpu.memory_space<vmem>>, vector<16x32xf32>
    tpu.vector_store %arg8[%c0_22, %c0_23], %38 {strides = array<i32>} : memref<16x32xf32, #tpu.memory_space<vmem>>, vector<16x32xf32>,
    return
  }
  func.func @transform_0(%arg0: i32) -> (i32, i32) {
    %c0_i32 = arith.constant 0 : i32
    %c0_i32_0 = arith.constant 0 : i32
    return %arg0, %c0_i32 : i32, i32
  }
  func.func @transform_1(%arg0: i32) -> (i32, i32) {
    %c0_i32 = arith.constant 0 : i32
    %c0_i32_0 = arith.constant 0 : i32
    %c0_i32_1 = arith.constant 0 : i32
    return %c0_i32, %c0_i32_0 : i32, i32
  }
  func.func @transform_2(%arg0: i32) -> (i32, i32) {
    %c0_i32 = arith.constant 0 : i32
    %c0_i32_0 = arith.constant 0 : i32
    %c0_i32_1 = arith.constant 0 : i32
    return %c0_i32, %c0_i32_0 : i32, i32
  }
  func.func @transform_3(%arg0: i32) -> (i32, i32) {
    %c0_i32 = arith.constant 0 : i32
    %c0_i32_0 = arith.constant 0 : i32
    %c0_i32_1 = arith.constant 0 : i32
    return %c0_i32, %c0_i32_0 : i32, i32
  }
  func.func @transform_4(%arg0: i32) -> (i32, i32) {
    %c0_i32 = arith.constant 0 : i32
    %c0_i32_0 = arith.constant 0 : i32
    %c0_i32_1 = arith.constant 0 : i32
    return %c0_i32, %c0_i32_0 : i32, i32
  }
  func.func @transform_5(%arg0: i32) -> (i32, i32) {
    %c0_i32 = arith.constant 0 : i32
    %c0_i32_0 = arith.constant 0 : i32
    %c0_i32_1 = arith.constant 0 : i32
    return %c0_i32, %c0_i32_0 : i32, i32
  }
  func.func @transform_6(%arg0: i32) -> (i32, i32) {
    %c0_i32 = arith.constant 0 : i32
    %c0_i32_0 = arith.constant 0 : i32
    %c0_i32_1 = arith.constant 0 : i32
    return %c0_i32, %c0_i32_0 : i32, i32
  }
  func.func @transform_7(%arg0: i32) -> (i32, i32) {
    %c0_i32 = arith.constant 0 : i32
    %c0_i32_0 = arith.constant 0 : i32
    return %arg0, %c0_i32 : i32, i32
  }
}

module attributes {stable_mosaic.version = 11 : i64} {
  func.func @_ffn_res_ln_kernel(%arg0: i32, %arg1: memref<16x32xf32, #tpu.memory_space<vmem>>, %arg2: memref<32x64xbf16, #tpu.memory_space<vmem>>, %arg3: memref<1x64xf32, #tpu.memory_space<vmem>>, %arg4: memref<64x32xbf16, #tpu.memory_space<vmem>>, %arg5: memref<1x32xf32, #tpu.memory_space<vmem>>, %arg6: memref<1x32xf32, #tpu.memory_space<vmem>>, %arg7: memref<1x32xf32, #tpu.memory_space<vmem>>, %arg8: memref<16x32xf32, #tpu.memory_space<vmem>>) attributes {dimension_semantics = [#tpu.dimension_semantics<parallel>], iteration_bounds = array<i64: 1>, scalar_prefetch = 0 : i64, scratch_operands = 0 : i64, tpu.core_type = #tpu.core_type<tc>, window_params = [{transform_indices = @transform_0, window_bounds = array<i64: 16, 32>}, {pipeline_mode = #tpu.pipeline_mode<synchronous>, transform_indices = @transform_1, window_bounds = array<i64: 32, 64>}, {pipeline_mode = #tpu.pipeline_mode<synchronous>, transform_indices = @transform_2, window_bounds = array<i64: 1, 64>}, {pipeline_mode = #tpu.pipeline_mode<synchronous>, transform_indices = @transform_3, window_bounds = array<i64: 64, 32>}, {pipeline_mode = #tpu.pipeline_mode<synchronous>, transform_indices = @transform_4, window_bounds = array<i64: 1, 32>}, {pipeline_mode = #tpu.pipeline_mode<synchronous>, transform_indices = @transform_5, window_bounds = array<i64: 1, 32>}, {pipeline_mode = #tpu.pipeline_mode<synchronous>, transform_indices = @transform_6, window_bounds = array<i64: 1, 32>}, {transform_indices = @transform_7, window_bounds = array<i64: 16, 32>}]} {
    %c0 = arith.constant 0 : index
    %c0_0 = arith.constant 0 : index
    %0 = vector.load %arg1[%c0, %c0_0] : memref<16x32xf32, #tpu.memory_space<vmem>>, vector<16x32xf32>
    %1 = arith.truncf %0 : vector<16x32xf32> to vector<16x32xbf16>
    %c0_1 = arith.constant 0 : index
    %c0_2 = arith.constant 0 : index
    %2 = vector.load %arg2[%c0_1, %c0_2] : memref<32x64xbf16, #tpu.memory_space<vmem>>, vector<32x64xbf16>
    %cst = arith.constant dense<0.000000e+00> : vector<16x64xf32>
    %3 = tpu.matmul %1, %2, %cst {dimension_numbers = #tpu.dot_dimension_numbers<[1], [0], [0], [1], [0, 0, 1, 1], [], []>} : vector<16x32xbf16>, vector<32x64xbf16>, vector<16x64xf32> -> vector<16x64xf32>
    %c0_3 = arith.constant 0 : index
    %c0_4 = arith.constant 0 : index
    %4 = vector.load %arg3[%c0_3, %c0_4] : memref<1x64xf32, #tpu.memory_space<vmem>>, vector<1x64xf32>
    %5 = vector.broadcast %4 : vector<1x64xf32> to vector<16x64xf32>
    %6 = arith.addf %3, %5 : vector<16x64xf32>
    %cst_5 = arith.constant 0.000000e+00 : f32
    %7 = vector.broadcast %cst_5 : f32 to vector<16x64xf32>
    %8 = arith.maximumf %6, %7 : vector<16x64xf32>
    %9 = arith.truncf %8 : vector<16x64xf32> to vector<16x64xbf16>
    %c0_6 = arith.constant 0 : index
    %c0_7 = arith.constant 0 : index
    %10 = vector.load %arg4[%c0_6, %c0_7] : memref<64x32xbf16, #tpu.memory_space<vmem>>, vector<64x32xbf16>
    %cst_8 = arith.constant dense<0.000000e+00> : vector<16x32xf32>
    %11 = tpu.matmul %9, %10, %cst_8 {dimension_numbers = #tpu.dot_dimension_numbers<[1], [0], [0], [1], [0, 0, 1, 1], [], []>} : vector<16x64xbf16>, vector<64x32xbf16>, vector<16x32xf32> -> vector<16x32xf32>
    %c0_9 = arith.constant 0 : index
    %c0_10 = arith.constant 0 : index
    %12 = vector.load %arg5[%c0_9, %c0_10] : memref<1x32xf32, #tpu.memory_space<vmem>>, vector<1x32xf32>
    %13 = vector.broadcast %12 : vector<1x32xf32> to vector<16x32xf32>
    %14 = arith.addf %11, %13 : vector<16x32xf32>
    %c0_11 = arith.constant 0 : index
    %c0_12 = arith.constant 0 : index
    %15 = vector.load %arg1[%c0_11, %c0_12] : memref<16x32xf32, #tpu.memory_space<vmem>>, vector<16x32xf32>
    %16 = arith.addf %14, %15 : vector<16x32xf32>
    %c0_13 = arith.constant 0 : index
    %c0_14 = arith.constant 0 : index
    %17 = vector.load %arg6[%c0_13, %c0_14] : memref<1x32xf32, #tpu.memory_space<vmem>>, vector<1x32xf32>
    %c0_15 = arith.constant 0 : index
    %c0_16 = arith.constant 0 : index
    %18 = vector.load %arg7[%c0_15, %c0_16] : memref<1x32xf32, #tpu.memory_space<vmem>>, vector<1x32xf32>
    %cst_17 = arith.constant dense<0.000000e+00> : vector<16xf32>
    %19 = vector.multi_reduction <add>, %16, %cst_17 [1] : vector<16x32xf32> to vector<16xf32>
    %20 = vector.shape_cast %19 : vector<16xf32> to vector<16x1xf32>
    %cst_18 = arith.constant 3.200000e+01 : f32
    %21 = vector.broadcast %cst_18 : f32 to vector<16x1xf32>
    %22 = arith.divf %20, %21 : vector<16x1xf32>
    %23 = vector.broadcast %22 : vector<16x1xf32> to vector<16x32xf32>
    %24 = arith.subf %16, %23 : vector<16x32xf32>
    %25 = arith.mulf %24, %24 : vector<16x32xf32>
    %cst_19 = arith.constant dense<0.000000e+00> : vector<16xf32>
    %26 = vector.multi_reduction <add>, %25, %cst_19 [1] : vector<16x32xf32> to vector<16xf32>
    %27 = vector.shape_cast %26 : vector<16xf32> to vector<16x1xf32>
    %cst_20 = arith.constant 3.200000e+01 : f32
    %28 = vector.broadcast %cst_20 : f32 to vector<16x1xf32>
    %29 = arith.divf %27, %28 : vector<16x1xf32>
    %cst_21 = arith.constant 9.99999974E-6 : f32
    %30 = vector.broadcast %cst_21 : f32 to vector<16x1xf32>
    %31 = arith.addf %29, %30 : vector<16x1xf32>
    %32 = math.rsqrt %31 : vector<16x1xf32>
    %33 = vector.broadcast %32 : vector<16x1xf32> to vector<16x32xf32>
    %34 = arith.mulf %24, %33 : vector<16x32xf32>
    %35 = vector.broadcast %17 : vector<1x32xf32> to vector<16x32xf32>
    %36 = arith.mulf %34, %35 : vector<16x32xf32>
    %37 = vector.broadcast %18 : vector<1x32xf32> to vector<16x32xf32>
    %38 = arith.addf %36, %37 : vector<16x32xf32>
    %c0_22 = arith.constant 0 : index
    %c0_23 = arith.constant 0 : index
    %39 = vector.load %arg8[%c0_22, %c0_23] : memref<16x32xf32, #tpu.memory_space<vmem>>, vector<16x32xf32>
    tpu.vector_store %arg8[%c0_22, %c0_23], %38 {strides = array<i32>} : memref<16x32xf32, #tpu.memory_space<vmem>>, vector<16x32xf32>,
    return
  }
  func.func @transform_0(%arg0: i32) -> (i32, i32) {
    %c0_i32 = arith.constant 0 : i32
    %c0_i32_0 = arith.constant 0 : i32
    return %arg0, %c0_i32 : i32, i32
  }
  func.func @transform_1(%arg0: i32) -> (i32, i32) {
    %c0_i32 = arith.constant 0 : i32
    %c0_i32_0 = arith.constant 0 : i32
    %c0_i32_1 = arith.constant 0 : i32
    return %c0_i32, %c0_i32_0 : i32, i32
  }
  func.func @transform_2(%arg0: i32) -> (i32, i32) {
    %c0_i32 = arith.constant 0 : i32
    %c0_i32_0 = arith.constant 0 : i32
    %c0_i32_1 = arith.constant 0 : i32
    return %c0_i32, %c0_i32_0 : i32, i32
  }
  func.func @transform_3(%arg0: i32) -> (i32, i32) {
    %c0_i32 = arith.constant 0 : i32
    %c0_i32_0 = arith.constant 0 : i32
    %c0_i32_1 = arith.constant 0 : i32
    return %c0_i32, %c0_i32_0 : i32, i32
  }
  func.func @transform_4(%arg0: i32) -> (i32, i32) {
    %c0_i32 = arith.constant 0 : i32
    %c0_i32_0 = arith.constant 0 : i32
    %c0_i32_1 = arith.constant 0 : i32
    return %c0_i32, %c0_i32_0 : i32, i32
  }
  func.func @transform_5(%arg0: i32) -> (i32, i32) {
    %c0_i32 = arith.constant 0 : i32
    %c0_i32_0 = arith.constant 0 : i32
    %c0_i32_1 = arith.constant 0 : i32
    return %c0_i32, %c0_i32_0 : i32, i32
  }
  func.func @transform_6(%arg0: i32) -> (i32, i32) {
    %c0_i32 = arith.constant 0 : i32
    %c0_i32_0 = arith.constant 0 : i32
    %c0_i32_1 = arith.constant 0 : i32
    return %c0_i32, %c0_i32_0 : i32, i32
  }
  func.func @transform_7(%arg0: i32) -> (i32, i32) {
    %c0_i32 = arith.constant 0 : i32
    %c0_i32_0 = arith.constant 0 : i32
    return %arg0, %c0_i32 : i32, i32
  }
}

</mosaic_0001>

<llo_original>
// kernel: transformer_dec.19
$region0: #{transformer_dec.19}
  #allocation0 [shape = 'u32[]', space=smem, size = 0x4, offset = 0x4, fixed_abs, tag = 'smem constant byte address 0x4 - core index']
  #allocation1 [shape = 'u32[144,128]{1,0:T(1,128)}', space=vmem, size = 0x12000, scoped, tag = 'internal scratch']
  #allocation2 [shape = 'f32[16,32]{1,0:T(8,128)}', space=vmem, size = 0x2000, scoped, tag = 'scratch operand']
  %s0 = inlined_call_operand.vmem [shape: f32[16,32], index: 0, kind: input, shape index: {}]
  %s1 = inlined_call_operand.vmem [shape: bf16[32,32], index: 1, kind: input, shape index: {}]
  %s2 = inlined_call_operand.vmem [shape: f32[1,32], index: 2, kind: input, shape index: {}]
  %s3 = inlined_call_operand.vmem [shape: bf16[16,32], index: 3, kind: output, shape index: {}]
  %s4 = sld [smem:[#allocation0]]
  $region30: #{transformer_dec.19} parent=0
    _
  %s6 = ssub.s32 1, %s4
  %s7 = scalar_select 0, %s6, %s4
  // Predicated region
  $region2: #{transformer_dec.19} parent=0 // pred_check
    _
  $region3: #{transformer_dec.19} parent=0 // pred_check_branch
    %9 = sbr.rel (0) target = $region5
  $region4: #{transformer_dec.19} parent=0 // pred_region
    _
  $region5: #{transformer_dec.19} parent=0 // pred_fallthru
    _
  // Predicated region
  $region6: #{transformer_dec.19} parent=0 // pred_check
    _
  $region7: #{transformer_dec.19} parent=0 // pred_check_branch
    %11 = sbr.rel (0) target = $region9
  $region8: #{transformer_dec.19} parent=0 // pred_region
    _
  $region9: #{transformer_dec.19} parent=0 // pred_fallthru
    _
  // Predicated region
  $region10: #{transformer_dec.19} parent=0 // pred_check
    _
  $region11: #{transformer_dec.19} parent=0 // pred_check_branch
    %13 = sbr.rel (0) target = $region13
  $region12: #{transformer_dec.19} parent=0 // pred_region
    _
  $region13: #{transformer_dec.19} parent=0 // pred_fallthru
    _
  %p15 = scmp.eq.s32.totalorder 0, 0
  // Predicated region
  $region14: #{transformer_dec.19} parent=0 // pred_check
    %p16 = pneg %p15
  $region15: #{transformer_dec.19} parent=0 // pred_check_branch
    %18 = sbr.rel (%p16) target = $region17
  $region16: #{transformer_dec.19} parent=0 // pred_region
    %vm19 = vcmask 261120
    %20 = vst.msk [vmem:[#allocation2] sm:$0xff] %vm19, 0.0
    %21 = vst.msk [vmem:[#allocation2 + $0x8] sm:$0xff] %vm19, 0.0
  $region17: #{transformer_dec.19} parent=0 // pred_fallthru
    _
  %v22 = vld [vmem:[#allocation2] sm:$0xff]
  %v23 = vld [vmem:[#allocation2 + $0x8] sm:$0xff]
  %v24 = vld [vmem:[%s0] sm:$0xff]
  %v25 = vld [vmem:[%s0 + $0x8] sm:$0xff]
  %v26 = vpack.c.bf16 %v25, %v24
  %v27 = vld [vmem:[%s1] sm:$0xf]
  %v28 = vld [vmem:[%s1 + $0x4] sm:$0xf]
  %v29 = vld [vmem:[%s1 + $0x8] sm:$0xf]
  %v30 = vld [vmem:[%s1 + $0xc] sm:$0xf]
  %v35 = vunpack.c.l.b16 %v27
  %v36 = vunpack.c.l.b16 %v28
  %v37 = vunpack.c.l.b16 %v29
  %v38 = vunpack.c.l.b16 %v30
  %v39 = vpack.c.b16 %v36, %v35
  %v40 = vpack.c.b16 %v38, %v37
  %vm43 = vcmask 261120
  %v45 = vsel %vm43, %v26, 0
  %47 = vmatprep.subr.bf16.mxu0 0
  %48 = vmatpush1.bf16.msra.mxu0 %v39
  %49 = vmatprep.subr.bf16.mxu0 0
  %50 = vmatpush1.bf16.msra.mxu0 %v40
  %51 = vmatprep.subr.bf16.mxu0 0
  %52 = vmatpush1.bf16.msra.mxu0 0
  %53 = vmatprep.subr.bf16.mxu0 0
  %54 = vmatpush1.bf16.msra.mxu0 0
  %55 = vmatprep.subr.bf16.mxu0 0
  %56 = vmatpush1.bf16.msra.mxu0 0
  %57 = vmatprep.subr.bf16.mxu0 0
  %58 = vmatpush1.bf16.msra.mxu0 0
  %59 = vmatprep.subr.bf16.mxu0 0
  %60 = vmatpush1.bf16.msra.mxu0 0
  %61 = vmatprep.subr.bf16.mxu0 0
  %62 = vmatpush1.bf16.msra.mxu0 0
  %63 = vmatprep.subr.bf16.mxu0 0
  %64 = vmatpush1.bf16.msra.mxu0 0
  %65 = vmatprep.subr.bf16.mxu0 0
  %66 = vmatpush1.bf16.msra.mxu0 0
  %67 = vmatprep.subr.bf16.mxu0 0
  %68 = vmatpush1.bf16.msra.mxu0 0
  %69 = vmatprep.subr.bf16.mxu0 0
  %70 = vmatpush1.bf16.msra.mxu0 0
  %71 = vmatprep.subr.bf16.mxu0 0
  %72 = vmatpush1.bf16.msra.mxu0 0
  %73 = vmatprep.subr.bf16.mxu0 0
  %74 = vmatpush1.bf16.msra.mxu0 0
  %75 = vmatprep.subr.bf16.mxu0 0
  %76 = vmatpush1.bf16.msra.mxu0 0
  %77 = vmatprep.subr.bf16.mxu0 0
  %78 = vmatpush1.bf16.msra.mxu0 0
  %79 = vmatprep.mubr.bf16.mxu0 0
  %80 = vmatmul.mubr.bf16.gmra.mrb[0].mxu0 %v45
  %v81 = vpop.f32.mrb[0].mxu0
  %v82 = vadd.f32 0.0, %v81
  %v83 = vpop.f32.mrb[0].mxu0
  %v84 = vpop.f32.mrb[0].mxu0
  %v85 = vadd.f32 0.0, %v84
  %v86 = vpop.f32.mrb[0].mxu0
  %87 = vdwg.mxu0
  %v88 = vadd.f32 %v22, %v82
  %v89 = vadd.f32 %v23, %v85
  %90 = vst.msk [vmem:[#allocation2] sm:$0xff] %vm43, %v88
  %91 = vst.msk [vmem:[#allocation2 + $0x8] sm:$0xff] %vm43, %v89
  // Predicated region
  $region18: #{transformer_dec.19} parent=0 // pred_check
    %p92 = pneg %p15
  $region19: #{transformer_dec.19} parent=0 // pred_check_branch
    %94 = sbr.rel (%p92) target = $region21
  $region20: #{transformer_dec.19} parent=0 // pred_region
    %v95 = vld [vmem:[#allocation2] sm:$0xff]
    %v96 = vld [vmem:[#allocation2 + $0x8] sm:$0xff]
    %v97 = vld [vmem:[%s2] sm:$0x1]
    %v99 = vlaneseq
    %v100 = vshrl.u32 %v99, 7
    %v101 = vsub.s32 0, %v100
    %v102 = vrot.slane %v97, %v101
    %v104 = vadd.f32 %v95, %v102
    %v105 = vadd.f32 %v96, %v102
    %v106 = vpack.c.bf16 %v105, %v104
    %v108 = vunpack.c.l.b16 %v106
    %v109 = vunpack.c.h.b16 %v106
    %v110 = vpack.c.b16 %v108, %v108
    %v111 = vpack.c.b16 %v109, %v109
    %vm114 = vcmask 257024
    %115 = vst.msk [vmem:[%s3] sm:$0xf] %vm114, %v110
    %116 = vst.msk [vmem:[%s3 + $0x4] sm:$0xf] %vm114, %v111
  $region21: #{transformer_dec.19} parent=0 // pred_fallthru
    _
  // Predicated region
  $region22: #{transformer_dec.19} parent=0 // pred_check
    _
  $region23: #{transformer_dec.19} parent=0 // pred_check_branch
    %118 = sbr.rel (0) target = $region25
  $region24: #{transformer_dec.19} parent=0 // pred_region
    _
  $region25: #{transformer_dec.19} parent=0 // pred_fallthru
    _
  // Predicated region
  $region26: #{transformer_dec.19} parent=0 // pred_check
    _
  $region27: #{transformer_dec.19} parent=0 // pred_check_branch
    %120 = sbr.rel (0) target = $region29
  $region28: #{transformer_dec.19} parent=0 // pred_region
    _
  $region29: #{transformer_dec.19} parent=0 // pred_fallthru
    _

// kernel: transformer_dec.16
$region0: #{transformer_dec.16}
  #allocation0 [shape = 'u32[]', space=smem, size = 0x4, offset = 0x4, fixed_abs, tag = 'smem constant byte address 0x4 - core index']
  #allocation1 [shape = 'u32[144,128]{1,0:T(1,128)}', space=vmem, size = 0x12000, scoped, tag = 'internal scratch']
  #allocation2 [shape = 'f32[16,96]{1,0:T(8,128)}', space=vmem, size = 0x2000, scoped, tag = 'scratch operand']
  %s0 = inlined_call_operand.vmem [shape: f32[16,32], index: 0, kind: input, shape index: {}]
  %s1 = inlined_call_operand.vmem [shape: bf16[32,96], index: 1, kind: input, shape index: {}]
  %s2 = inlined_call_operand.vmem [shape: f32[1,96], index: 2, kind: input, shape index: {}]
  %s3 = inlined_call_operand.vmem [shape: bf16[16,96], index: 3, kind: output, shape index: {}]
  %s4 = sld [smem:[#allocation0]]
  $region30: #{transformer_dec.16} parent=0
    _
  %s6 = ssub.s32 1, %s4
  %s7 = scalar_select 0, %s6, %s4
  // Predicated region
  $region2: #{transformer_dec.16} parent=0 // pred_check
    _
  $region3: #{transformer_dec.16} parent=0 // pred_check_branch
    %9 = sbr.rel (0) target = $region5
  $region4: #{transformer_dec.16} parent=0 // pred_region
    _
  $region5: #{transformer_dec.16} parent=0 // pred_fallthru
    _
  // Predicated region
  $region6: #{transformer_dec.16} parent=0 // pred_check
    _
  $region7: #{transformer_dec.16} parent=0 // pred_check_branch
    %11 = sbr.rel (0) target = $region9
  $region8: #{transformer_dec.16} parent=0 // pred_region
    _
  $region9: #{transformer_dec.16} parent=0 // pred_fallthru
    _
  // Predicated region
  $region10: #{transformer_dec.16} parent=0 // pred_check
    _
  $region11: #{transformer_dec.16} parent=0 // pred_check_branch
    %13 = sbr.rel (0) target = $region13
  $region12: #{transformer_dec.16} parent=0 // pred_region
    _
  $region13: #{transformer_dec.16} parent=0 // pred_fallthru
    _
  %p15 = scmp.eq.s32.totalorder 0, 0
  // Predicated region
  $region14: #{transformer_dec.16} parent=0 // pred_check
    %p16 = pneg %p15
  $region15: #{transformer_dec.16} parent=0 // pred_check_branch
    %18 = sbr.rel (%p16) target = $region17
  $region16: #{transformer_dec.16} parent=0 // pred_region
    %vm19 = vcmask 785408
    %20 = vst.msk [vmem:[#allocation2] sm:$0xff] %vm19, 0.0
    %21 = vst.msk [vmem:[#allocation2 + $0x8] sm:$0xff] %vm19, 0.0
  $region17: #{transformer_dec.16} parent=0 // pred_fallthru
    _
  %v22 = vld [vmem:[#allocation2] sm:$0xff]
  %v23 = vld [vmem:[#allocation2 + $0x8] sm:$0xff]
  %v24 = vld [vmem:[%s0] sm:$0xff]
  %v25 = vld [vmem:[%s0 + $0x8] sm:$0xff]
  %v26 = vpack.c.bf16 %v25, %v24
  %v27 = vld [vmem:[%s1] sm:$0xf]
  %v28 = vld [vmem:[%s1 + $0x4] sm:$0xf]
  %v29 = vld [vmem:[%s1 + $0x8] sm:$0xf]
  %v30 = vld [vmem:[%s1 + $0xc] sm:$0xf]
  %v35 = vunpack.c.l.b16 %v27
  %v36 = vunpack.c.l.b16 %v28
  %v37 = vunpack.c.l.b16 %v29
  %v38 = vunpack.c.l.b16 %v30
  %v39 = vpack.c.b16 %v36, %v35
  %v40 = vpack.c.b16 %v38, %v37
  %vm43 = vcmask 261120
  %v45 = vsel %vm43, %v26, 0
  %47 = vmatprep.subr.bf16.mxu0 0
  %48 = vmatpush1.bf16.msra.mxu0 %v39
  %49 = vmatprep.subr.bf16.mxu0 0
  %50 = vmatpush1.bf16.msra.mxu0 %v40
  %51 = vmatprep.subr.bf16.mxu0 0
  %52 = vmatpush1.bf16.msra.mxu0 0
  %53 = vmatprep.subr.bf16.mxu0 0
  %54 = vmatpush1.bf16.msra.mxu0 0
  %55 = vmatprep.subr.bf16.mxu0 0
  %56 = vmatpush1.bf16.msra.mxu0 0
  %57 = vmatprep.subr.bf16.mxu0 0
  %58 = vmatpush1.bf16.msra.mxu0 0
  %59 = vmatprep.subr.bf16.mxu0 0
  %60 = vmatpush1.bf16.msra.mxu0 0
  %61 = vmatprep.subr.bf16.mxu0 0
  %62 = vmatpush1.bf16.msra.mxu0 0
  %63 = vmatprep.subr.bf16.mxu0 0
  %64 = vmatpush1.bf16.msra.mxu0 0
  %65 = vmatprep.subr.bf16.mxu0 0
  %66 = vmatpush1.bf16.msra.mxu0 0
  %67 = vmatprep.subr.bf16.mxu0 0
  %68 = vmatpush1.bf16.msra.mxu0 0
  %69 = vmatprep.subr.bf16.mxu0 0
  %70 = vmatpush1.bf16.msra.mxu0 0
  %71 = vmatprep.subr.bf16.mxu0 0
  %72 = vmatpush1.bf16.msra.mxu0 0
  %73 = vmatprep.subr.bf16.mxu0 0
  %74 = vmatpush1.bf16.msra.mxu0 0
  %75 = vmatprep.subr.bf16.mxu0 0
  %76 = vmatpush1.bf16.msra.mxu0 0
  %77 = vmatprep.subr.bf16.mxu0 0
  %78 = vmatpush1.bf16.msra.mxu0 0
  %79 = vmatprep.mubr.bf16.mxu0 0
  %80 = vmatmul.mubr.bf16.gmra.mrb[0].mxu0 %v45
  %v81 = vpop.f32.mrb[0].mxu0
  %v82 = vadd.f32 0.0, %v81
  %v83 = vpop.f32.mrb[0].mxu0
  %v84 = vpop.f32.mrb[0].mxu0
  %v85 = vadd.f32 0.0, %v84
  %v86 = vpop.f32.mrb[0].mxu0
  %87 = vdwg.mxu0
  %v88 = vadd.f32 %v22, %v82
  %v89 = vadd.f32 %v23, %v85
  %vm90 = vcmask 785408
  %91 = vst.msk [vmem:[#allocation2] sm:$0xff] %vm90, %v88
  %92 = vst.msk [vmem:[#allocation2 + $0x8] sm:$0xff] %vm90, %v89
  // Predicated region
  $region18: #{transformer_dec.16} parent=0 // pred_check
    %p93 = pneg %p15
  $region19: #{transformer_dec.16} parent=0 // pred_check_branch
    %95 = sbr.rel (%p93) target = $region21
  $region20: #{transformer_dec.16} parent=0 // pred_region
    %v96 = vld [vmem:[#allocation2] sm:$0xff]
    %v97 = vld [vmem:[#allocation2 + $0x8] sm:$0xff]
    %v98 = vld [vmem:[%s2] sm:$0x1]
    %v100 = vlaneseq
    %v101 = vshrl.u32 %v100, 7
    %v102 = vsub.s32 0, %v101
    %v103 = vrot.slane %v98, %v102
    %v105 = vadd.f32 %v96, %v103
    %v106 = vadd.f32 %v97, %v103
    %v107 = vpack.c.bf16 %v106, %v105
    %v109 = vunpack.c.l.b16 %v107
    %v110 = vunpack.c.h.b16 %v107
    %v111 = vpack.c.b16 %v109, %v109
    %v112 = vpack.c.b16 %v110, %v110
    %vm115 = vcmask 781312
    %116 = vst.msk [vmem:[%s3] sm:$0xf] %vm115, %v111
    %117 = vst.msk [vmem:[%s3 + $0x4] sm:$0xf] %vm115, %v112
  $region21: #{transformer_dec.16} parent=0 // pred_fallthru
    _
  // Predicated region
  $region22: #{transformer_dec.16} parent=0 // pred_check
    _
  $region23: #{transformer_dec.16} parent=0 // pred_check_branch
    %119 = sbr.rel (0) target = $region25
  $region24: #{transformer_dec.16} parent=0 // pred_region
    _
  $region25: #{transformer_dec.16} parent=0 // pred_fallthru
    _
  // Predicated region
  $region26: #{transformer_dec.16} parent=0 // pred_check
    _
  $region27: #{transformer_dec.16} parent=0 // pred_check_branch
    %121 = sbr.rel (0) target = $region29
  $region28: #{transformer_dec.16} parent=0 // pred_region
    _
  $region29: #{transformer_dec.16} parent=0 // pred_fallthru
    _

// kernel: transformer_dec.18
$region0: #{transformer_dec.18}
  #allocation0 [shape = 'u32[]', space=smem, size = 0x4, offset = 0x4, fixed_abs, tag = 'smem constant byte address 0x4 - core index']
  #allocation1 [shape = 'u32[144,128]{1,0:T(1,128)}', space=vmem, size = 0x12000, scoped, tag = 'internal scratch']
  %s0 = inlined_call_operand.vmem [shape: bf16[16,32], index: 0, kind: input, shape index: {}]
  %s1 = inlined_call_operand.vmem [shape: bf16[32,32], index: 1, kind: input, shape index: {}]
  %s2 = inlined_call_operand.vmem [shape: f32[1,32], index: 2, kind: input, shape index: {}]
  %s3 = inlined_call_operand.vmem [shape: f32[16,32], index: 3, kind: input, shape index: {}]
  %s4 = inlined_call_operand.vmem [shape: f32[1,32], index: 4, kind: input, shape index: {}]
  %s5 = inlined_call_operand.vmem [shape: f32[1,32], index: 5, kind: input, shape index: {}]
  %s6 = inlined_call_operand.vmem [shape: f32[16,32], index: 6, kind: output, shape index: {}]
  %s7 = sld [smem:[#allocation0]]
  $region34: #{transformer_dec.18} parent=0
    _
  %s9 = ssub.s32 1, %s7
  %s10 = scalar_select 0, %s9, %s7
  // Predicated region
  $region2: #{transformer_dec.18} parent=0 // pred_check
    _
  $region3: #{transformer_dec.18} parent=0 // pred_check_branch
    %12 = sbr.rel (0) target = $region5
  $region4: #{transformer_dec.18} parent=0 // pred_region
    _
  $region5: #{transformer_dec.18} parent=0 // pred_fallthru
    _
  // Predicated region
  $region6: #{transformer_dec.18} parent=0 // pred_check
    _
  $region7: #{transformer_dec.18} parent=0 // pred_check_branch
    %14 = sbr.rel (0) target = $region9
  $region8: #{transformer_dec.18} parent=0 // pred_region
    _
  $region9: #{transformer_dec.18} parent=0 // pred_fallthru
    _
  // Predicated region
  $region10: #{transformer_dec.18} parent=0 // pred_check
    _
  $region11: #{transformer_dec.18} parent=0 // pred_check_branch
    %16 = sbr.rel (0) target = $region13
  $region12: #{transformer_dec.18} parent=0 // pred_region
    _
  $region13: #{transformer_dec.18} parent=0 // pred_fallthru
    _
  // Predicated region
  $region14: #{transformer_dec.18} parent=0 // pred_check
    _
  $region15: #{transformer_dec.18} parent=0 // pred_check_branch
    %18 = sbr.rel (0) target = $region17
  $region16: #{transformer_dec.18} parent=0 // pred_region
    _
  $region17: #{transformer_dec.18} parent=0 // pred_fallthru
    _
  // Predicated region
  $region18: #{transformer_dec.18} parent=0 // pred_check
    _
  $region19: #{transformer_dec.18} parent=0 // pred_check_branch
    %20 = sbr.rel (0) target = $region21
  $region20: #{transformer_dec.18} parent=0 // pred_region
    _
  $region21: #{transformer_dec.18} parent=0 // pred_fallthru
    _
  // Predicated region
  $region22: #{transformer_dec.18} parent=0 // pred_check
    _
  $region23: #{transformer_dec.18} parent=0 // pred_check_branch
    %22 = sbr.rel (0) target = $region25
  $region24: #{transformer_dec.18} parent=0 // pred_region
    _
  $region25: #{transformer_dec.18} parent=0 // pred_fallthru
    _
  %v24 = vld [vmem:[%s0] sm:$0xf]
  %v25 = vld [vmem:[%s0 + $0x4] sm:$0xf]
  %v26 = vld [vmem:[%s1] sm:$0xf]
  %v27 = vld [vmem:[%s1 + $0x4] sm:$0xf]
  %v28 = vld [vmem:[%s1 + $0x8] sm:$0xf]
  %v29 = vld [vmem:[%s1 + $0xc] sm:$0xf]
  %v30 = vld [vmem:[%s2] sm:$0x1]
  %v32 = vlaneseq
  %v33 = vshrl.u32 %v32, 7
  %v34 = vsub.s32 0, %v33
  %v35 = vrot.slane %v30, %v34
  %v39 = vunpack.c.l.b16 %v24
  %v40 = vunpack.c.l.b16 %v25
  %v41 = vpack.c.b16 %v40, %v39
  %v46 = vunpack.c.l.b16 %v26
  %v47 = vunpack.c.l.b16 %v27
  %v48 = vunpack.c.l.b16 %v28
  %v49 = vunpack.c.l.b16 %v29
  %v50 = vpack.c.b16 %v47, %v46
  %v51 = vpack.c.b16 %v49, %v48
  %vm54 = vcmask 261120
  %v56 = vsel %vm54, %v41, 0
  %58 = vmatprep.subr.bf16.mxu0 0
  %59 = vmatpush1.bf16.msra.mxu0 %v50
  %60 = vmatprep.subr.bf16.mxu0 0
  %61 = vmatpush1.bf16.msra.mxu0 %v51
  %62 = vmatprep.subr.bf16.mxu0 0
  %63 = vmatpush1.bf16.msra.mxu0 0
  %64 = vmatprep.subr.bf16.mxu0 0
  %65 = vmatpush1.bf16.msra.mxu0 0
  %66 = vmatprep.subr.bf16.mxu0 0
  %67 = vmatpush1.bf16.msra.mxu0 0
  %68 = vmatprep.subr.bf16.mxu0 0
  %69 = vmatpush1.bf16.msra.mxu0 0
  %70 = vmatprep.subr.bf16.mxu0 0
  %71 = vmatpush1.bf16.msra.mxu0 0
  %72 = vmatprep.subr.bf16.mxu0 0
  %73 = vmatpush1.bf16.msra.mxu0 0
  %74 = vmatprep.subr.bf16.mxu0 0
  %75 = vmatpush1.bf16.msra.mxu0 0
  %76 = vmatprep.subr.bf16.mxu0 0
  %77 = vmatpush1.bf16.msra.mxu0 0
  %78 = vmatprep.subr.bf16.mxu0 0
  %79 = vmatpush1.bf16.msra.mxu0 0
  %80 = vmatprep.subr.bf16.mxu0 0
  %81 = vmatpush1.bf16.msra.mxu0 0
  %82 = vmatprep.subr.bf16.mxu0 0
  %83 = vmatpush1.bf16.msra.mxu0 0
  %84 = vmatprep.subr.bf16.mxu0 0
  %85 = vmatpush1.bf16.msra.mxu0 0
  %86 = vmatprep.subr.bf16.mxu0 0
  %87 = vmatpush1.bf16.msra.mxu0 0
  %88 = vmatprep.subr.bf16.mxu0 0
  %89 = vmatpush1.bf16.msra.mxu0 0
  %90 = vmatprep.mubr.bf16.mxu0 0
  %91 = vmatmul.mubr.bf16.gmra.mrb[0].mxu0 %v56
  %v92 = vpop.f32.mrb[0].mxu0
  %v93 = vadd.f32 %v35, %v92
  %v94 = vpop.f32.mrb[0].mxu0
  %v95 = vpop.f32.mrb[0].mxu0
  %v96 = vadd.f32 %v35, %v95
  %v97 = vpop.f32.mrb[0].mxu0
  %98 = vdwg.mxu0
  %v99 = vld [vmem:[%s3] sm:$0xff]
  %v100 = vld [vmem:[%s3 + $0x8] sm:$0xff]
  %v101 = vadd.f32 %v93, %v99
  %v102 = vadd.f32 %v96, %v100
  %v103 = vld [vmem:[%s4] sm:$0x1]
  %v104 = vld [vmem:[%s5] sm:$0x1]
  %v105 = vsel %vm54, %v101, 0.0
  %106 = vadd.xlane.f32.xlu0 %v105
  %v107 = vpop.xlane.xlu0 %106
  %v108 = vsel %vm54, %v102, 0.0
  %109 = vadd.xlane.f32.xlu0 %v108
  %v110 = vpop.xlane.xlu0 %109
  %v111 = vrcp.pop 32.0
  %v112 = vmul.f32 %v107, %v111
  %v113 = vmul.f32 %v110, %v111
  %v114 = vsub.f32 %v101, %v112
  %v115 = vsub.f32 %v102, %v113
  %v116 = vmul.f32 %v114, %v114
  %v117 = vmul.f32 %v115, %v115
  %v118 = vsel %vm54, %v116, 0.0
  %119 = vadd.xlane.f32.xlu0 %v118
  %v120 = vpop.xlane.xlu0 %119
  %v121 = vsel %vm54, %v117, 0.0
  %122 = vadd.xlane.f32.xlu0 %v121
  %v123 = vpop.xlane.xlu0 %122
  %v124 = vmul.f32 %v120, %v111
  %v125 = vmul.f32 %v123, %v111
  %v126 = vadd.f32 %v124, 1e-05
  %v127 = vadd.f32 %v125, 1e-05
  %v128 = vrsqrt.pop %v126
  %v129 = vrsqrt.pop %v127
  %v130 = vmul.f32 %v114, %v128
  %v131 = vmul.f32 %v115, %v129
  %v133 = vlaneseq
  %v134 = vshrl.u32 %v133, 7
  %v135 = vsub.s32 0, %v134
  %v136 = vrot.slane %v103, %v135
  %v138 = vmul.f32 %v130, %v136
  %v139 = vmul.f32 %v131, %v136
  %v141 = vlaneseq
  %v142 = vshrl.u32 %v141, 7
  %v143 = vsub.s32 0, %v142
  %v144 = vrot.slane %v104, %v143
  %v146 = vadd.f32 %v138, %v144
  %v147 = vadd.f32 %v139, %v144
  %148 = vst.msk [vmem:[%s6] sm:$0xff] %vm54, %v146
  %149 = vst.msk [vmem:[%s6 + $0x8] sm:$0xff] %vm54, %v147
  // Predicated region
  $region26: #{transformer_dec.18} parent=0 // pred_check
    _
  $region27: #{transformer_dec.18} parent=0 // pred_check_branch
    %151 = sbr.rel (0) target = $region29
  $region28: #{transformer_dec.18} parent=0 // pred_region
    _
  $region29: #{transformer_dec.18} parent=0 // pred_fallthru
    _
  // Predicated region
  $region30: #{transformer_dec.18} parent=0 // pred_check
    _
  $region31: #{transformer_dec.18} parent=0 // pred_check_branch
    %153 = sbr.rel (0) target = $region33
  $region32: #{transformer_dec.18} parent=0 // pred_region
    _
  $region33: #{transformer_dec.18} parent=0 // pred_fallthru
    _

// kernel: transformer_dec.17
$region0: #{transformer_dec.17}
  #allocation0 [shape = 'u32[]', space=smem, size = 0x4, offset = 0x4, fixed_abs, tag = 'smem constant byte address 0x4 - core index']
  #allocation1 [shape = 'u32[144,128]{1,0:T(1,128)}', space=vmem, size = 0x12000, scoped, tag = 'internal scratch']
  %s0 = inlined_call_operand.vmem [shape: bf16[2,8,96], index: 0, kind: input, shape index: {}]
  %s1 = inlined_call_operand.vmem [shape: bf16[2,8,32], index: 1, kind: output, shape index: {}]
  %s2 = sld [smem:[#allocation0]]
  $region37: #{transformer_dec.17} parent=0
    _
  %s4 = ssub.s32 1, %s2
  %s5 = scalar_select 0, %s4, %s2
  loop: start=0, step=1, limit=4
  $region2: #{transformer_dec.17} parent=0 // loop_pre_header
    _
  $region3: #{transformer_dec.17} parent=0 // loop_header
    %s7 = sphi 0, %s11
    %p8 = scmp.ge.s32.totalorder %s7, 4
    %s17 = sphi 0, %s19
    %s20 = sphi 0, %s17
    %s21 = sphi 0, %s20
    %s37 = sphi 0, %s21
    %s43 = sphi 0, %s45
    %s46 = sphi 0, %s43
    %s47 = sphi 0, %s46
    %s63 = sphi 0, %s47
  $region4: #{transformer_dec.17} parent=0 // loop_header_branch
    %10 = sbr.rel (%p8) target = $region8
  $region5: #{transformer_dec.17} parent=0 // loop_body
    %s12 = ssub.s32 %s7, 1
    %s13 = ssub.s32 %s7, 2
    %s14 = sadd.s32 %s7, 1
    %s15 = ssub.s32 %s7, %s14
    %p16 = scmp.eq.s32.totalorder %s15, 0
    %s18 = sadd.s32 %s17, 1
    %s19 = scalar_select %p16, %s17, %s18
    %p22 = pneg %p16
    %p23 = scmp.eq.s32.totalorder %s7, 1
    %p24 = por %p22, %p23
    %p25 = scmp.ne.s32.totalorder %s17, %s20
    %p26 = scmp.eq.s32.totalorder %s7, 0
    %p27 = por %p25, %p26
    %p28 = scmp.ne.s32.totalorder %s17, %s20
    %p29 = scmp.eq.s32.totalorder %s12, 1
    %p30 = por %p28, %p29
    %p31 = scmp.ne.s32.totalorder %s20, %s21
    %p32 = scmp.eq.s32.totalorder %s12, 0
    %p33 = por %p31, %p32
    %p34 = scmp.ne.s32.totalorder %s20, %s21
    %p35 = scmp.eq.s32.totalorder %s13, 1
    %p36 = por %p34, %p35
    %p38 = scmp.ne.s32.totalorder %s21, %s37
    %p39 = scmp.eq.s32.totalorder %s13, 0
    %p40 = por %p38, %p39
    %s41 = ssub.s32 %s7, %s14
    %p42 = scmp.eq.s32.totalorder %s41, 0
    %s44 = sadd.s32 %s43, 1
    %s45 = scalar_select %p42, %s43, %s44
    %p48 = pneg %p42
    %p49 = scmp.eq.s32.totalorder %s7, 1
    %p50 = por %p48, %p49
    %p51 = scmp.ne.s32.totalorder %s43, %s46
    %p52 = scmp.eq.s32.totalorder %s7, 0
    %p53 = por %p51, %p52
    %p54 = scmp.ne.s32.totalorder %s43, %s46
    %p55 = scmp.eq.s32.totalorder %s12, 1
    %p56 = por %p54, %p55
    %p57 = scmp.ne.s32.totalorder %s46, %s47
    %p58 = scmp.eq.s32.totalorder %s12, 0
    %p59 = por %p57, %p58
    %p60 = scmp.ne.s32.totalorder %s46, %s47
    %p61 = scmp.eq.s32.totalorder %s13, 1
    %p62 = por %p60, %p61
    %p64 = scmp.ne.s32.totalorder %s47, %s63
    %p65 = scmp.eq.s32.totalorder %s13, 0
    %p66 = por %p64, %p65
    %p67 = scmp.le.s32.totalorder 1, %s7
    %p68 = scmp.lt.s32.totalorder %s7, 3
    %p69 = pnand %p67, %p68
    %p70 = pneg %p69
    // Predicated region
    $region9: #{transformer_dec.17} parent=5 // pred_check
      _
    $region10: #{transformer_dec.17} parent=5 // pred_check_branch
      %72 = sbr.rel (%p69) target = $region12
    $region11: #{transformer_dec.17} parent=5 // pred_region
      %s73 = ssub.s32 %s7, 1
    $region12: #{transformer_dec.17} parent=5 // pred_fallthru
      _
    %p74 = scmp.lt.s32.totalorder %s7, 2
    // Predicated region
    $region13: #{transformer_dec.17} parent=5 // pred_check
      %p75 = pneg %p74
    $region14: #{transformer_dec.17} parent=5 // pred_check_branch
      %77 = sbr.rel (%p75) target = $region16
    $region15: #{transformer_dec.17} parent=5 // pred_region
      // Predicated region
      $region17: #{transformer_dec.17} parent=15 // pred_check
        %p78 = pneg %p27
      $region18: #{transformer_dec.17} parent=15 // pred_check_branch
        %80 = sbr.rel (%p78) target = $region20
      $region19: #{transformer_dec.17} parent=15 // pred_region
        %p81 = scmp.lt.s32.totalorder %s7, 1
        %s82 = scalar_select %p81, %s7, 1
        %s83 = smul.addr %s82, 4
        %s84 = scalar_lea.vmem %s0, %s83
      $region20: #{transformer_dec.17} parent=15 // pred_fallthru
        _
    $region16: #{transformer_dec.17} parent=5 // pred_fallthru
      _
    %p85 = scmp.le.s32.totalorder 1, %s7
    %p86 = scmp.lt.s32.totalorder %s7, 3
    %p87 = pnand %p85, %p86
    %p88 = pneg %p87
    // Predicated region
    $region21: #{transformer_dec.17} parent=5 // pred_check
      _
    $region22: #{transformer_dec.17} parent=5 // pred_check_branch
      %90 = sbr.rel (%p87) target = $region24
    $region23: #{transformer_dec.17} parent=5 // pred_region
      %s91 = ssub.s32 %s7, 1
      %p92 = scmp.lt.s32.totalorder %s12, 1
      %s93 = scalar_select %p92, %s12, 1
      %s94 = smul.addr %s93, 4
      %s95 = scalar_lea.vmem %s0, %s94
      %p96 = pneg %p33
      %p97 = pneg %p30
      %p98 = pneg %p59
      %p99 = pneg %p56
      %p100 = scmp.lt.s32.totalorder %s12, 1
      %s101 = scalar_select %p100, %s12, 1
      %s102 = smul.addr %s101, 4
      %s103 = scalar_lea.vmem %s1, %s102
      %p104 = scmp.lt.s32.totalorder %s12, 1
      %s105 = scalar_select %p104, %s12, 1
      %s106 = smul.addr %s105, 4
      %s107 = scalar_lea.vmem %s0, %s106
      %p108 = scmp.lt.s32.totalorder %s12, 1
      %s109 = scalar_select %p108, %s12, 1
      %s110 = smul.addr %s109, 4
      %s111 = scalar_lea.vmem %s1, %s110
      %v113 = vld [vmem:[%s107] sm:$0xf]
      %v114 = vunpack.c.l.bf16 %v113
      %v115 = vmul.f32 %v114, 0.35355338
      %v116 = vpack.c.bf16 %v115, %v115
      %v118 = vunpack.c.l.b16 %v113
      %v119 = vpack.c.b16 %v118, %v118
      %120 = vrot.lane.b32.xlu0 %v119, 96
      %v121 = vpop.permute.xlu0 %120
      %vm122 = vcmask 64512
      %v124 = vsel %vm122, %v116, 0
      %v127 = vsel %vm122, %v121, 0
      %129 = vmatprep.subr.bf16.mxu0 0
      %130 = vmatpush1.bf16.xpose.msra.mxu0 %v127
      %131 = vmatprep.subr.bf16.mxu0 0
      %132 = vmatpush1.bf16.xpose.msra.mxu0 0
      %133 = vmatprep.subr.bf16.mxu0 0
      %134 = vmatpush1.bf16.xpose.msra.mxu0 0
      %135 = vmatprep.subr.bf16.mxu0 0
      %136 = vmatpush1.bf16.xpose.msra.mxu0 0
      %137 = vmatprep.subr.bf16.mxu0 0
      %138 = vmatpush1.bf16.xpose.msra.mxu0 0
      %139 = vmatprep.subr.bf16.mxu0 0
      %140 = vmatpush1.bf16.xpose.msra.mxu0 0
      %141 = vmatprep.subr.bf16.mxu0 0
      %142 = vmatpush1.bf16.xpose.msra.mxu0 0
      %143 = vmatprep.subr.bf16.mxu0 0
      %144 = vmatpush1.bf16.xpose.msra.mxu0 0
      %145 = vmatprep.subr.bf16.mxu0 0
      %146 = vmatpush1.bf16.xpose.msra.mxu0 0
      %147 = vmatprep.subr.bf16.mxu0 0
      %148 = vmatpush1.bf16.xpose.msra.mxu0 0
      %149 = vmatprep.subr.bf16.mxu0 0
      %150 = vmatpush1.bf16.xpose.msra.mxu0 0
      %151 = vmatprep.subr.bf16.mxu0 0
      %152 = vmatpush1.bf16.xpose.msra.mxu0 0
      %153 = vmatprep.subr.bf16.mxu0 0
      %154 = vmatpush1.bf16.xpose.msra.mxu0 0
      %155 = vmatprep.subr.bf16.mxu0 0
      %156 = vmatpush1.bf16.xpose.msra.mxu0 0
      %157 = vmatprep.subr.bf16.mxu0 0
      %158 = vmatpush1.bf16.xpose.msra.mxu0 0
      %159 = vmatprep.subr.bf16.mxu0 0
      %160 = vmatpush1.bf16.xpose.msra.mxu0 0
      %161 = vmatprep.mubr.bf16.mxu0 0
      %162 = vmatmul.mubr.bf16.gmra.mrb[0].mxu0 %v124
      %v163 = vpop.f32.mrb[0].mxu0
      %v164 = vadd.f32 0.0, %v163
      %v165 = vpop.f32.mrb[0].mxu0
      %v166 = vpop.f32.mrb[0].mxu0
      %v167 = vpop.f32.mrb[0].mxu0
      %168 = vdwg.mxu0
      %v169 = vsel %vm122, %v164, -inf
      %170 = vmax.xlane.f32.xlu0 %v169
      %v171 = vpop.xlane.xlu0 %170
      %v172 = vsub.f32 %v164, %v171
      %v173 = vmul.f32 %v172, 1.442695
      %v174 = vpow.pop %v173
      %v175 = vsel %vm122, %v174, 0.0
      %176 = vadd.xlane.f32.xlu0 %v175
      %v177 = vpop.xlane.xlu0 %176
      %v178 = vrcp.pop %v177
      %v179 = vmul.f32 %v174, %v178
      %v180 = vpack.c.bf16 %v179, %v179
      %181 = vrot.lane.b32.xlu0 %v119, 64
      %v182 = vpop.permute.xlu0 %181
      %v184 = vsel %vm122, %v180, 0
      %vm186 = vcmask 1043456
      %v188 = vsel %vm186, %v182, 0
      %190 = vmatprep.subr.bf16.mxu0 0
      %191 = vmatpush1.bf16.msra.mxu0 %v188
      %192 = vmatprep.subr.bf16.mxu0 0
      %193 = vmatpush1.bf16.msra.mxu0 0
      %194 = vmatprep.subr.bf16.mxu0 0
      %195 = vmatpush1.bf16.msra.mxu0 0
      %196 = vmatprep.subr.bf16.mxu0 0
      %197 = vmatpush1.bf16.msra.mxu0 0
      %198 = vmatprep.subr.bf16.mxu0 0
      %199 = vmatpush1.bf16.msra.mxu0 0
      %200 = vmatprep.subr.bf16.mxu0 0
      %201 = vmatpush1.bf16.msra.mxu0 0
      %202 = vmatprep.subr.bf16.mxu0 0
      %203 = vmatpush1.bf16.msra.mxu0 0
      %204 = vmatprep.subr.bf16.mxu0 0
      %205 = vmatpush1.bf16.msra.mxu0 0
      %206 = vmatprep.subr.bf16.mxu0 0
      %207 = vmatpush1.bf16.msra.mxu0 0
      %208 = vmatprep.subr.bf16.mxu0 0
      %209 = vmatpush1.bf16.msra.mxu0 0
      %210 = vmatprep.subr.bf16.mxu0 0
      %211 = vmatpush1.bf16.msra.mxu0 0
      %212 = vmatprep.subr.bf16.mxu0 0
      %213 = vmatpush1.bf16.msra.mxu0 0
      %214 = vmatprep.subr.bf16.mxu0 0
      %215 = vmatpush1.bf16.msra.mxu0 0
      %216 = vmatprep.subr.bf16.mxu0 0
      %217 = vmatpush1.bf16.msra.mxu0 0
      %218 = vmatprep.subr.bf16.mxu0 0
      %219 = vmatpush1.bf16.msra.mxu0 0
      %220 = vmatprep.subr.bf16.mxu0 0
      %221 = vmatpush1.bf16.msra.mxu0 0
      %222 = vmatprep.mubr.bf16.mxu0 0
      %223 = vmatmul.mubr.bf16.gmra.mrb[0].mxu0 %v184
      %v224 = vpop.f32.mrb[0].mxu0
      %v225 = vadd.f32 0.0, %v224
      %v226 = vpop.f32.mrb[0].mxu0
      %v227 = vpop.f32.mrb[0].mxu0
      %v228 = vpop.f32.mrb[0].mxu0
      %229 = vdwg.mxu0
      %231 = vrot.lane.b32.xlu0 %v116, 120
      %v232 = vpop.permute.xlu0 %231
      %233 = vrot.lane.b32.xlu0 %v119, 88
      %v234 = vpop.permute.xlu0 %233
      %v236 = vsel %vm122, %v232, 0
      %v239 = vsel %vm122, %v234, 0
      %241 = vmatprep.subr.bf16.mxu0 0
      %242 = vmatpush1.bf16.xpose.msra.mxu0 %v239
      %243 = vmatprep.subr.bf16.mxu0 0
      %244 = vmatpush1.bf16.xpose.msra.mxu0 0
      %245 = vmatprep.subr.bf16.mxu0 0
      %246 = vmatpush1.bf16.xpose.msra.mxu0 0
      %247 = vmatprep.subr.bf16.mxu0 0
      %248 = vmatpush1.bf16.xpose.msra.mxu0 0
      %249 = vmatprep.subr.bf16.mxu0 0
      %250 = vmatpush1.bf16.xpose.msra.mxu0 0
      %251 = vmatprep.subr.bf16.mxu0 0
      %252 = vmatpush1.bf16.xpose.msra.mxu0 0
      %253 = vmatprep.subr.bf16.mxu0 0
      %254 = vmatpush1.bf16.xpose.msra.mxu0 0
      %255 = vmatprep.subr.bf16.mxu0 0
      %256 = vmatpush1.bf16.xpose.msra.mxu0 0
      %257 = vmatprep.subr.bf16.mxu0 0
      %258 = vmatpush1.bf16.xpose.msra.mxu0 0
      %259 = vmatprep.subr.bf16.mxu0 0
      %260 = vmatpush1.bf16.xpose.msra.mxu0 0
      %261 = vmatprep.subr.bf16.mxu0 0
      %262 = vmatpush1.bf16.xpose.msra.mxu0 0
      %263 = vmatprep.subr.bf16.mxu0 0
      %264 = vmatpush1.bf16.xpose.msra.mxu0 0
      %265 = vmatprep.subr.bf16.mxu0 0
      %266 = vmatpush1.bf16.xpose.msra.mxu0 0
      %267 = vmatprep.subr.bf16.mxu0 0
      %268 = vmatpush1.bf16.xpose.msra.mxu0 0
      %269 = vmatprep.subr.bf16.mxu0 0
      %270 = vmatpush1.bf16.xpose.msra.mxu0 0
      %271 = vmatprep.subr.bf16.mxu0 0
      %272 = vmatpush1.bf16.xpose.msra.mxu0 0
      %273 = vmatprep.mubr.bf16.mxu0 0
      %274 = vmatmul.mubr.bf16.gmra.mrb[0].mxu0 %v236
      %v275 = vpop.f32.mrb[0].mxu0
      %v276 = vadd.f32 0.0, %v275
      %v277 = vpop.f32.mrb[0].mxu0
      %v278 = vpop.f32.mrb[0].mxu0
      %v279 = vpop.f32.mrb[0].mxu0
      %280 = vdwg.mxu0
      %v281 = vsel %vm122, %v276, -inf
      %282 = vmax.xlane.f32.xlu0 %v281
      %v283 = vpop.xlane.xlu0 %282
      %v284 = vsub.f32 %v276, %v283
      %v285 = vmul.f32 %v284, 1.442695
      %v286 = vpow.pop %v285
      %v287 = vsel %vm122, %v286, 0.0
      %288 = vadd.xlane.f32.xlu0 %v287
      %v289 = vpop.xlane.xlu0 %288
      %v290 = vrcp.pop %v289
      %v291 = vmul.f32 %v286, %v290
      %v292 = vpack.c.bf16 %v291, %v291
      %293 = vrot.lane.b32.xlu0 %v119, 56
      %v294 = vpop.permute.xlu0 %293
      %v296 = vsel %vm122, %v292, 0
      %v299 = vsel %vm186, %v294, 0
      %301 = vmatprep.subr.bf16.mxu0 0
      %302 = vmatpush1.bf16.msra.mxu0 %v299
      %303 = vmatprep.subr.bf16.mxu0 0
      %304 = vmatpush1.bf16.msra.mxu0 0
      %305 = vmatprep.subr.bf16.mxu0 0
      %306 = vmatpush1.bf16.msra.mxu0 0
      %307 = vmatprep.subr.bf16.mxu0 0
      %308 = vmatpush1.bf16.msra.mxu0 0
      %309 = vmatprep.subr.bf16.mxu0 0
      %310 = vmatpush1.bf16.msra.mxu0 0
      %311 = vmatprep.subr.bf16.mxu0 0
      %312 = vmatpush1.bf16.msra.mxu0 0
      %313 = vmatprep.subr.bf16.mxu0 0
      %314 = vmatpush1.bf16.msra.mxu0 0
      %315 = vmatprep.subr.bf16.mxu0 0
      %316 = vmatpush1.bf16.msra.mxu0 0
      %317 = vmatprep.subr.bf16.mxu0 0
      %318 = vmatpush1.bf16.msra.mxu0 0
      %319 = vmatprep.subr.bf16.mxu0 0
      %320 = vmatpush1.bf16.msra.mxu0 0
      %321 = vmatprep.subr.bf16.mxu0 0
      %322 = vmatpush1.bf16.msra.mxu0 0
      %323 = vmatprep.subr.bf16.mxu0 0
      %324 = vmatpush1.bf16.msra.mxu0 0
      %325 = vmatprep.subr.bf16.mxu0 0
      %326 = vmatpush1.bf16.msra.mxu0 0
      %327 = vmatprep.subr.bf16.mxu0 0
      %328 = vmatpush1.bf16.msra.mxu0 0
      %329 = vmatprep.subr.bf16.mxu0 0
      %330 = vmatpush1.bf16.msra.mxu0 0
      %331 = vmatprep.subr.bf16.mxu0 0
      %332 = vmatpush1.bf16.msra.mxu0 0
      %333 = vmatprep.mubr.bf16.mxu0 0
      %334 = vmatmul.mubr.bf16.gmra.mrb[0].mxu0 %v296
      %v335 = vpop.f32.mrb[0].mxu0
      %v336 = vadd.f32 0.0, %v335
      %v337 = vpop.f32.mrb[0].mxu0
      %v338 = vpop.f32.mrb[0].mxu0
      %v339 = vpop.f32.mrb[0].mxu0
      %340 = vdwg.mxu0
      %341 = vrot.lane.b32.xlu0 %v116, 112
      %v342 = vpop.permute.xlu0 %341
      %343 = vrot.lane.b32.xlu0 %v119, 80
      %v344 = vpop.permute.xlu0 %343
      %v346 = vsel %vm122, %v342, 0
      %v349 = vsel %vm122, %v344, 0
      %351 = vmatprep.subr.bf16.mxu0 0
      %352 = vmatpush1.bf16.xpose.msra.mxu0 %v349
      %353 = vmatprep.subr.bf16.mxu0 0
      %354 = vmatpush1.bf16.xpose.msra.mxu0 0
      %355 = vmatprep.subr.bf16.mxu0 0
      %356 = vmatpush1.bf16.xpose.msra.mxu0 0
      %357 = vmatprep.subr.bf16.mxu0 0
      %358 = vmatpush1.bf16.xpose.msra.mxu0 0
      %359 = vmatprep.subr.bf16.mxu0 0
      %360 = vmatpush1.bf16.xpose.msra.mxu0 0
      %361 = vmatprep.subr.bf16.mxu0 0
      %362 = vmatpush1.bf16.xpose.msra.mxu0 0
      %363 = vmatprep.subr.bf16.mxu0 0
      %364 = vmatpush1.bf16.xpose.msra.mxu0 0
      %365 = vmatprep.subr.bf16.mxu0 0
      %366 = vmatpush1.bf16.xpose.msra.mxu0 0
      %367 = vmatprep.subr.bf16.mxu0 0
      %368 = vmatpush1.bf16.xpose.msra.mxu0 0
      %369 = vmatprep.subr.bf16.mxu0 0
      %370 = vmatpush1.bf16.xpose.msra.mxu0 0
      %371 = vmatprep.subr.bf16.mxu0 0
      %372 = vmatpush1.bf16.xpose.msra.mxu0 0
      %373 = vmatprep.subr.bf16.mxu0 0
      %374 = vmatpush1.bf16.xpose.msra.mxu0 0
      %375 = vmatprep.subr.bf16.mxu0 0
      %376 = vmatpush1.bf16.xpose.msra.mxu0 0
      %377 = vmatprep.subr.bf16.mxu0 0
      %378 = vmatpush1.bf16.xpose.msra.mxu0 0
      %379 = vmatprep.subr.bf16.mxu0 0
      %380 = vmatpush1.bf16.xpose.msra.mxu0 0
      %381 = vmatprep.subr.bf16.mxu0 0
      %382 = vmatpush1.bf16.xpose.msra.mxu0 0
      %383 = vmatprep.mubr.bf16.mxu0 0
      %384 = vmatmul.mubr.bf16.gmra.mrb[0].mxu0 %v346
      %v385 = vpop.f32.mrb[0].mxu0
      %v386 = vadd.f32 0.0, %v385
      %v387 = vpop.f32.mrb[0].mxu0
      %v388 = vpop.f32.mrb[0].mxu0
      %v389 = vpop.f32.mrb[0].mxu0
      %390 = vdwg.mxu0
      %v391 = vsel %vm122, %v386, -inf
      %392 = vmax.xlane.f32.xlu0 %v391
      %v393 = vpop.xlane.xlu0 %392
      %v394 = vsub.f32 %v386, %v393
      %v395 = vmul.f32 %v394, 1.442695
      %v396 = vpow.pop %v395
      %v397 = vsel %vm122, %v396, 0.0
      %398 = vadd.xlane.f32.xlu0 %v397
      %v399 = vpop.xlane.xlu0 %398
      %v400 = vrcp.pop %v399
      %v401 = vmul.f32 %v396, %v400
      %v402 = vpack.c.bf16 %v401, %v401
      %403 = vrot.lane.b32.xlu0 %v119, 48
      %v404 = vpop.permute.xlu0 %403
      %v406 = vsel %vm122, %v402, 0
      %v409 = vsel %vm186, %v404, 0
      %411 = vmatprep.subr.bf16.mxu0 0
      %412 = vmatpush1.bf16.msra.mxu0 %v409
      %413 = vmatprep.subr.bf16.mxu0 0
      %414 = vmatpush1.bf16.msra.mxu0 0
      %415 = vmatprep.subr.bf16.mxu0 0
      %416 = vmatpush1.bf16.msra.mxu0 0
      %417 = vmatprep.subr.bf16.mxu0 0
      %418 = vmatpush1.bf16.msra.mxu0 0
      %419 = vmatprep.subr.bf16.mxu0 0
      %420 = vmatpush1.bf16.msra.mxu0 0
      %421 = vmatprep.subr.bf16.mxu0 0
      %422 = vmatpush1.bf16.msra.mxu0 0
      %423 = vmatprep.subr.bf16.mxu0 0
      %424 = vmatpush1.bf16.msra.mxu0 0
      %425 = vmatprep.subr.bf16.mxu0 0
      %426 = vmatpush1.bf16.msra.mxu0 0
      %427 = vmatprep.subr.bf16.mxu0 0
      %428 = vmatpush1.bf16.msra.mxu0 0
      %429 = vmatprep.subr.bf16.mxu0 0
      %430 = vmatpush1.bf16.msra.mxu0 0
      %431 = vmatprep.subr.bf16.mxu0 0
      %432 = vmatpush1.bf16.msra.mxu0 0
      %433 = vmatprep.subr.bf16.mxu0 0
      %434 = vmatpush1.bf16.msra.mxu0 0
      %435 = vmatprep.subr.bf16.mxu0 0
      %436 = vmatpush1.bf16.msra.mxu0 0
      %437 = vmatprep.subr.bf16.mxu0 0
      %438 = vmatpush1.bf16.msra.mxu0 0
      %439 = vmatprep.subr.bf16.mxu0 0
      %440 = vmatpush1.bf16.msra.mxu0 0
      %441 = vmatprep.subr.bf16.mxu0 0
      %442 = vmatpush1.bf16.msra.mxu0 0
      %443 = vmatprep.mubr.bf16.mxu0 0
      %444 = vmatmul.mubr.bf16.gmra.mrb[0].mxu0 %v406
      %v445 = vpop.f32.mrb[0].mxu0
      %v446 = vadd.f32 0.0, %v445
      %v447 = vpop.f32.mrb[0].mxu0
      %v448 = vpop.f32.mrb[0].mxu0
      %v449 = vpop.f32.mrb[0].mxu0
      %450 = vdwg.mxu0
      %451 = vrot.lane.b32.xlu0 %v116, 104
      %v452 = vpop.permute.xlu0 %451
      %453 = vrot.lane.b32.xlu0 %v119, 72
      %v454 = vpop.permute.xlu0 %453
      %v456 = vsel %vm122, %v452, 0
      %v459 = vsel %vm122, %v454, 0
      %461 = vmatprep.subr.bf16.mxu0 0
      %462 = vmatpush1.bf16.xpose.msra.mxu0 %v459
      %463 = vmatprep.subr.bf16.mxu0 0
      %464 = vmatpush1.bf16.xpose.msra.mxu0 0
      %465 = vmatprep.subr.bf16.mxu0 0
      %466 = vmatpush1.bf16.xpose.msra.mxu0 0
      %467 = vmatprep.subr.bf16.mxu0 0
      %468 = vmatpush1.bf16.xpose.msra.mxu0 0
      %469 = vmatprep.subr.bf16.mxu0 0
      %470 = vmatpush1.bf16.xpose.msra.mxu0 0
      %471 = vmatprep.subr.bf16.mxu0 0
      %472 = vmatpush1.bf16.xpose.msra.mxu0 0
      %473 = vmatprep.subr.bf16.mxu0 0
      %474 = vmatpush1.bf16.xpose.msra.mxu0 0
      %475 = vmatprep.subr.bf16.mxu0 0
      %476 = vmatpush1.bf16.xpose.msra.mxu0 0
      %477 = vmatprep.subr.bf16.mxu0 0
      %478 = vmatpush1.bf16.xpose.msra.mxu0 0
      %479 = vmatprep.subr.bf16.mxu0 0
      %480 = vmatpush1.bf16.xpose.msra.mxu0 0
      %481 = vmatprep.subr.bf16.mxu0 0
      %482 = vmatpush1.bf16.xpose.msra.mxu0 0
      %483 = vmatprep.subr.bf16.mxu0 0
      %484 = vmatpush1.bf16.xpose.msra.mxu0 0
      %485 = vmatprep.subr.bf16.mxu0 0
      %486 = vmatpush1.bf16.xpose.msra.mxu0 0
      %487 = vmatprep.subr.bf16.mxu0 0
      %488 = vmatpush1.bf16.xpose.msra.mxu0 0
      %489 = vmatprep.subr.bf16.mxu0 0
      %490 = vmatpush1.bf16.xpose.msra.mxu0 0
      %491 = vmatprep.subr.bf16.mxu0 0
      %492 = vmatpush1.bf16.xpose.msra.mxu0 0
      %493 = vmatprep.mubr.bf16.mxu0 0
      %494 = vmatmul.mubr.bf16.gmra.mrb[0].mxu0 %v456
      %v495 = vpop.f32.mrb[0].mxu0
      %v496 = vadd.f32 0.0, %v495
      %v497 = vpop.f32.mrb[0].mxu0
      %v498 = vpop.f32.mrb[0].mxu0
      %v499 = vpop.f32.mrb[0].mxu0
      %500 = vdwg.mxu0
      %v501 = vsel %vm122, %v496, -inf
      %502 = vmax.xlane.f32.xlu0 %v501
      %v503 = vpop.xlane.xlu0 %502
      %v504 = vsub.f32 %v496, %v503
      %v505 = vmul.f32 %v504, 1.442695
      %v506 = vpow.pop %v505
      %v507 = vsel %vm122, %v506, 0.0
      %508 = vadd.xlane.f32.xlu0 %v507
      %v509 = vpop.xlane.xlu0 %508
      %v510 = vrcp.pop %v509
      %v511 = vmul.f32 %v506, %v510
      %v512 = vpack.c.bf16 %v511, %v511
      %513 = vrot.lane.b32.xlu0 %v119, 40
      %v514 = vpop.permute.xlu0 %513
      %v516 = vsel %vm122, %v512, 0
      %v519 = vsel %vm186, %v514, 0
      %521 = vmatprep.subr.bf16.mxu0 0
      %522 = vmatpush1.bf16.msra.mxu0 %v519
      %523 = vmatprep.subr.bf16.mxu0 0
      %524 = vmatpush1.bf16.msra.mxu0 0
      %525 = vmatprep.subr.bf16.mxu0 0
      %526 = vmatpush1.bf16.msra.mxu0 0
      %527 = vmatprep.subr.bf16.mxu0 0
      %528 = vmatpush1.bf16.msra.mxu0 0
      %529 = vmatprep.subr.bf16.mxu0 0
      %530 = vmatpush1.bf16.msra.mxu0 0
      %531 = vmatprep.subr.bf16.mxu0 0
      %532 = vmatpush1.bf16.msra.mxu0 0
      %533 = vmatprep.subr.bf16.mxu0 0
      %534 = vmatpush1.bf16.msra.mxu0 0
      %535 = vmatprep.subr.bf16.mxu0 0
      %536 = vmatpush1.bf16.msra.mxu0 0
      %537 = vmatprep.subr.bf16.mxu0 0
      %538 = vmatpush1.bf16.msra.mxu0 0
      %539 = vmatprep.subr.bf16.mxu0 0
      %540 = vmatpush1.bf16.msra.mxu0 0
      %541 = vmatprep.subr.bf16.mxu0 0
      %542 = vmatpush1.bf16.msra.mxu0 0
      %543 = vmatprep.subr.bf16.mxu0 0
      %544 = vmatpush1.bf16.msra.mxu0 0
      %545 = vmatprep.subr.bf16.mxu0 0
      %546 = vmatpush1.bf16.msra.mxu0 0
      %547 = vmatprep.subr.bf16.mxu0 0
      %548 = vmatpush1.bf16.msra.mxu0 0
      %549 = vmatprep.subr.bf16.mxu0 0
      %550 = vmatpush1.bf16.msra.mxu0 0
      %551 = vmatprep.subr.bf16.mxu0 0
      %552 = vmatpush1.bf16.msra.mxu0 0
      %553 = vmatprep.mubr.bf16.mxu0 0
      %554 = vmatmul.mubr.bf16.gmra.mrb[0].mxu0 %v516
      %v555 = vpop.f32.mrb[0].mxu0
      %v556 = vadd.f32 0.0, %v555
      %v557 = vpop.f32.mrb[0].mxu0
      %v558 = vpop.f32.mrb[0].mxu0
      %v559 = vpop.f32.mrb[0].mxu0
      %560 = vdwg.mxu0
      %562 = vrot.lane.b32.xlu0 %v336, 8
      %v563 = vpop.permute.xlu0 %562
      %566 = vrot.lane.b32.xlu0 %v446, 16
      %v567 = vpop.permute.xlu0 %566
      %570 = vrot.lane.b32.xlu0 %v556, 24
      %v571 = vpop.permute.xlu0 %570
      %v573 = vsel %vm122, %v225, %v563
      %vm574 = vcmask 130048
      %v575 = vsel %vm574, %v573, %v567
      %vm576 = vcmask 195584
      %v577 = vsel %vm576, %v575, %v571
      %v578 = vpack.c.bf16 %v577, %v577
      %vm579 = vcmask 257024
      %580 = vst.msk [vmem:[%s111] sm:$0xf] %vm579, %v578
      %p581 = scmp.lt.s32.totalorder %s12, 1
      %s582 = scalar_select %p581, %s12, 1
      %s583 = smul.addr %s582, 4
      %s584 = scalar_lea.vmem %s1, %s583
      // Predicated region
      $region25: #{transformer_dec.17} parent=23 // pred_check
        %p585 = pneg %p56
      $region26: #{transformer_dec.17} parent=23 // pred_check_branch
        %587 = sbr.rel (%p585) target = $region28
      $region27: #{transformer_dec.17} parent=23 // pred_region
        _
      $region28: #{transformer_dec.17} parent=23 // pred_fallthru
        _
    $region24: #{transformer_dec.17} parent=5 // pred_fallthru
      _
    %p588 = scmp.le.s32.totalorder 2, %s7
    // Predicated region
    $region29: #{transformer_dec.17} parent=5 // pred_check
      %p589 = pneg %p588
    $region30: #{transformer_dec.17} parent=5 // pred_check_branch
      %591 = sbr.rel (%p589) target = $region32
    $region31: #{transformer_dec.17} parent=5 // pred_region
      %s592 = ssub.s32 %s7, 2
      // Predicated region
      $region33: #{transformer_dec.17} parent=31 // pred_check
        %p593 = pneg %p62
      $region34: #{transformer_dec.17} parent=31 // pred_check_branch
        %595 = sbr.rel (%p593) target = $region36
      $region35: #{transformer_dec.17} parent=31 // pred_region
        %p596 = scmp.lt.s32.totalorder %s13, 1
        %s597 = scalar_select %p596, %s13, 1
        %s598 = smul.addr %s597, 4
        %s599 = scalar_lea.vmem %s1, %s598
      $region36: #{transformer_dec.17} parent=31 // pred_fallthru
        _
    $region32: #{transformer_dec.17} parent=5 // pred_fallthru
      _
  $region6: #{transformer_dec.17} parent=0 // loop_footer
    %s11 = sadd.s32 1, %s7
  $region7: #{transformer_dec.17} parent=0 // loop_footer_branch
    %6 = sbr.rel target = $region3
  $region8: #{transformer_dec.17} parent=0 // loop_exit
    _

// kernel: transformer_dec.20
$region0: #{transformer_dec.20}
  #allocation0 [shape = 'u32[]', space=smem, size = 0x4, offset = 0x4, fixed_abs, tag = 'smem constant byte address 0x4 - core index']
  #allocation1 [shape = 'u32[144,128]{1,0:T(1,128)}', space=vmem, size = 0x12000, scoped, tag = 'internal scratch']
  #allocation2 [shape = 'f32[16,64]{1,0:T(8,128)}', space=vmem, size = 0x2000, scoped, tag = 'scratch operand']
  %s0 = inlined_call_operand.vmem [shape: f32[16,32], index: 0, kind: input, shape index: {}]
  %s1 = inlined_call_operand.vmem [shape: bf16[32,64], index: 1, kind: input, shape index: {}]
  %s2 = inlined_call_operand.vmem [shape: f32[1,64], index: 2, kind: input, shape index: {}]
  %s3 = inlined_call_operand.vmem [shape: bf16[16,64], index: 3, kind: output, shape index: {}]
  %s4 = sld [smem:[#allocation0]]
  $region30: #{transformer_dec.20} parent=0
    _
  %s6 = ssub.s32 1, %s4
  %s7 = scalar_select 0, %s6, %s4
  // Predicated region
  $region2: #{transformer_dec.20} parent=0 // pred_check
    _
  $region3: #{transformer_dec.20} parent=0 // pred_check_branch
    %9 = sbr.rel (0) target = $region5
  $region4: #{transformer_dec.20} parent=0 // pred_region
    _
  $region5: #{transformer_dec.20} parent=0 // pred_fallthru
    _
  // Predicated region
  $region6: #{transformer_dec.20} parent=0 // pred_check
    _
  $region7: #{transformer_dec.20} parent=0 // pred_check_branch
    %11 = sbr.rel (0) target = $region9
  $region8: #{transformer_dec.20} parent=0 // pred_region
    _
  $region9: #{transformer_dec.20} parent=0 // pred_fallthru
    _
  // Predicated region
  $region10: #{transformer_dec.20} parent=0 // pred_check
    _
  $region11: #{transformer_dec.20} parent=0 // pred_check_branch
    %13 = sbr.rel (0) target = $region13
  $region12: #{transformer_dec.20} parent=0 // pred_region
    _
  $region13: #{transformer_dec.20} parent=0 // pred_fallthru
    _
  %p15 = scmp.eq.s32.totalorder 0, 0
  // Predicated region
  $region14: #{transformer_dec.20} parent=0 // pred_check
    %p16 = pneg %p15
  $region15: #{transformer_dec.20} parent=0 // pred_check_branch
    %18 = sbr.rel (%p16) target = $region17
  $region16: #{transformer_dec.20} parent=0 // pred_region
    %vm19 = vcmask 523264
    %20 = vst.msk [vmem:[#allocation2] sm:$0xff] %vm19, 0.0
    %21 = vst.msk [vmem:[#allocation2 + $0x8] sm:$0xff] %vm19, 0.0
  $region17: #{transformer_dec.20} parent=0 // pred_fallthru
    _
  %v22 = vld [vmem:[#allocation2] sm:$0xff]
  %v23 = vld [vmem:[#allocation2 + $0x8] sm:$0xff]
  %v24 = vld [vmem:[%s0] sm:$0xff]
  %v25 = vld [vmem:[%s0 + $0x8] sm:$0xff]
  %v26 = vpack.c.bf16 %v25, %v24
  %v27 = vld [vmem:[%s1] sm:$0xf]
  %v28 = vld [vmem:[%s1 + $0x4] sm:$0xf]
  %v29 = vld [vmem:[%s1 + $0x8] sm:$0xf]
  %v30 = vld [vmem:[%s1 + $0xc] sm:$0xf]
  %v35 = vunpack.c.l.b16 %v27
  %v36 = vunpack.c.l.b16 %v28
  %v37 = vunpack.c.l.b16 %v29
  %v38 = vunpack.c.l.b16 %v30
  %v39 = vpack.c.b16 %v36, %v35
  %v40 = vpack.c.b16 %v38, %v37
  %vm43 = vcmask 261120
  %v45 = vsel %vm43, %v26, 0
  %47 = vmatprep.subr.bf16.mxu0 0
  %48 = vmatpush1.bf16.msra.mxu0 %v39
  %49 = vmatprep.subr.bf16.mxu0 0
  %50 = vmatpush1.bf16.msra.mxu0 %v40
  %51 = vmatprep.subr.bf16.mxu0 0
  %52 = vmatpush1.bf16.msra.mxu0 0
  %53 = vmatprep.subr.bf16.mxu0 0
  %54 = vmatpush1.bf16.msra.mxu0 0
  %55 = vmatprep.subr.bf16.mxu0 0
  %56 = vmatpush1.bf16.msra.mxu0 0
  %57 = vmatprep.subr.bf16.mxu0 0
  %58 = vmatpush1.bf16.msra.mxu0 0
  %59 = vmatprep.subr.bf16.mxu0 0
  %60 = vmatpush1.bf16.msra.mxu0 0
  %61 = vmatprep.subr.bf16.mxu0 0
  %62 = vmatpush1.bf16.msra.mxu0 0
  %63 = vmatprep.subr.bf16.mxu0 0
  %64 = vmatpush1.bf16.msra.mxu0 0
  %65 = vmatprep.subr.bf16.mxu0 0
  %66 = vmatpush1.bf16.msra.mxu0 0
  %67 = vmatprep.subr.bf16.mxu0 0
  %68 = vmatpush1.bf16.msra.mxu0 0
  %69 = vmatprep.subr.bf16.mxu0 0
  %70 = vmatpush1.bf16.msra.mxu0 0
  %71 = vmatprep.subr.bf16.mxu0 0
  %72 = vmatpush1.bf16.msra.mxu0 0
  %73 = vmatprep.subr.bf16.mxu0 0
  %74 = vmatpush1.bf16.msra.mxu0 0
  %75 = vmatprep.subr.bf16.mxu0 0
  %76 = vmatpush1.bf16.msra.mxu0 0
  %77 = vmatprep.subr.bf16.mxu0 0
  %78 = vmatpush1.bf16.msra.mxu0 0
  %79 = vmatprep.mubr.bf16.mxu0 0
  %80 = vmatmul.mubr.bf16.gmra.mrb[0].mxu0 %v45
  %v81 = vpop.f32.mrb[0].mxu0
  %v82 = vadd.f32 0.0, %v81
  %v83 = vpop.f32.mrb[0].mxu0
  %v84 = vpop.f32.mrb[0].mxu0
  %v85 = vadd.f32 0.0, %v84
  %v86 = vpop.f32.mrb[0].mxu0
  %87 = vdwg.mxu0
  %v88 = vadd.f32 %v22, %v82
  %v89 = vadd.f32 %v23, %v85
  %vm90 = vcmask 523264
  %91 = vst.msk [vmem:[#allocation2] sm:$0xff] %vm90, %v88
  %92 = vst.msk [vmem:[#allocation2 + $0x8] sm:$0xff] %vm90, %v89
  // Predicated region
  $region18: #{transformer_dec.20} parent=0 // pred_check
    %p93 = pneg %p15
  $region19: #{transformer_dec.20} parent=0 // pred_check_branch
    %95 = sbr.rel (%p93) target = $region21
  $region20: #{transformer_dec.20} parent=0 // pred_region
    %v96 = vld [vmem:[#allocation2] sm:$0xff]
    %v97 = vld [vmem:[#allocation2 + $0x8] sm:$0xff]
    %v98 = vld [vmem:[%s2] sm:$0x1]
    %v100 = vlaneseq
    %v101 = vshrl.u32 %v100, 7
    %v102 = vsub.s32 0, %v101
    %v103 = vrot.slane %v98, %v102
    %v105 = vadd.f32 %v96, %v103
    %v106 = vadd.f32 %v97, %v103
    %v107 = vpack.c.bf16 %v106, %v105
    %v109 = vunpack.c.l.b16 %v107
    %v110 = vunpack.c.h.b16 %v107
    %v111 = vpack.c.b16 %v109, %v109
    %v112 = vpack.c.b16 %v110, %v110
    %vm115 = vcmask 519168
    %116 = vst.msk [vmem:[%s3] sm:$0xf] %vm115, %v111
    %117 = vst.msk [vmem:[%s3 + $0x4] sm:$0xf] %vm115, %v112
  $region21: #{transformer_dec.20} parent=0 // pred_fallthru
    _
  // Predicated region
  $region22: #{transformer_dec.20} parent=0 // pred_check
    _
  $region23: #{transformer_dec.20} parent=0 // pred_check_branch
    %119 = sbr.rel (0) target = $region25
  $region24: #{transformer_dec.20} parent=0 // pred_region
    _
  $region25: #{transformer_dec.20} parent=0 // pred_fallthru
    _
  // Predicated region
  $region26: #{transformer_dec.20} parent=0 // pred_check
    _
  $region27: #{transformer_dec.20} parent=0 // pred_check_branch
    %121 = sbr.rel (0) target = $region29
  $region28: #{transformer_dec.20} parent=0 // pred_region
    _
  $region29: #{transformer_dec.20} parent=0 // pred_fallthru
    _

// kernel: transformer_dec.21
$region0: #{transformer_dec.21}
  #allocation0 [shape = 'u32[]', space=smem, size = 0x4, offset = 0x4, fixed_abs, tag = 'smem constant byte address 0x4 - core index']
  #allocation1 [shape = 'u32[144,128]{1,0:T(1,128)}', space=vmem, size = 0x12000, scoped, tag = 'internal scratch']
  %s0 = inlined_call_operand.vmem [shape: bf16[2,8,32], index: 0, kind: input, shape index: {}]
  %s1 = inlined_call_operand.vmem [shape: bf16[2,8,64], index: 1, kind: input, shape index: {}]
  %s2 = inlined_call_operand.vmem [shape: bf16[2,8,32], index: 2, kind: output, shape index: {}]
  %s3 = sld [smem:[#allocation0]]
  $region41: #{transformer_dec.21} parent=0
    _
  %s5 = ssub.s32 1, %s3
  %s6 = scalar_select 0, %s5, %s3
  loop: start=0, step=1, limit=4
  $region2: #{transformer_dec.21} parent=0 // loop_pre_header
    _
  $region3: #{transformer_dec.21} parent=0 // loop_header
    %s8 = sphi 0, %s12
    %p9 = scmp.ge.s32.totalorder %s8, 4
    %s18 = sphi 0, %s20
    %s21 = sphi 0, %s18
    %s22 = sphi 0, %s21
    %s38 = sphi 0, %s22
    %s44 = sphi 0, %s46
    %s47 = sphi 0, %s44
    %s48 = sphi 0, %s47
    %s64 = sphi 0, %s48
    %s70 = sphi 0, %s72
    %s73 = sphi 0, %s70
    %s74 = sphi 0, %s73
    %s90 = sphi 0, %s74
  $region4: #{transformer_dec.21} parent=0 // loop_header_branch
    %11 = sbr.rel (%p9) target = $region8
  $region5: #{transformer_dec.21} parent=0 // loop_body
    %s13 = ssub.s32 %s8, 1
    %s14 = ssub.s32 %s8, 2
    %s15 = sadd.s32 %s8, 1
    %s16 = ssub.s32 %s8, %s15
    %p17 = scmp.eq.s32.totalorder %s16, 0
    %s19 = sadd.s32 %s18, 1
    %s20 = scalar_select %p17, %s18, %s19
    %p23 = pneg %p17
    %p24 = scmp.eq.s32.totalorder %s8, 1
    %p25 = por %p23, %p24
    %p26 = scmp.ne.s32.totalorder %s18, %s21
    %p27 = scmp.eq.s32.totalorder %s8, 0
    %p28 = por %p26, %p27
    %p29 = scmp.ne.s32.totalorder %s18, %s21
    %p30 = scmp.eq.s32.totalorder %s13, 1
    %p31 = por %p29, %p30
    %p32 = scmp.ne.s32.totalorder %s21, %s22
    %p33 = scmp.eq.s32.totalorder %s13, 0
    %p34 = por %p32, %p33
    %p35 = scmp.ne.s32.totalorder %s21, %s22
    %p36 = scmp.eq.s32.totalorder %s14, 1
    %p37 = por %p35, %p36
    %p39 = scmp.ne.s32.totalorder %s22, %s38
    %p40 = scmp.eq.s32.totalorder %s14, 0
    %p41 = por %p39, %p40
    %s42 = ssub.s32 %s8, %s15
    %p43 = scmp.eq.s32.totalorder %s42, 0
    %s45 = sadd.s32 %s44, 1
    %s46 = scalar_select %p43, %s44, %s45
    %p49 = pneg %p43
    %p50 = scmp.eq.s32.totalorder %s8, 1
    %p51 = por %p49, %p50
    %p52 = scmp.ne.s32.totalorder %s44, %s47
    %p53 = scmp.eq.s32.totalorder %s8, 0
    %p54 = por %p52, %p53
    %p55 = scmp.ne.s32.totalorder %s44, %s47
    %p56 = scmp.eq.s32.totalorder %s13, 1
    %p57 = por %p55, %p56
    %p58 = scmp.ne.s32.totalorder %s47, %s48
    %p59 = scmp.eq.s32.totalorder %s13, 0
    %p60 = por %p58, %p59
    %p61 = scmp.ne.s32.totalorder %s47, %s48
    %p62 = scmp.eq.s32.totalorder %s14, 1
    %p63 = por %p61, %p62
    %p65 = scmp.ne.s32.totalorder %s48, %s64
    %p66 = scmp.eq.s32.totalorder %s14, 0
    %p67 = por %p65, %p66
    %s68 = ssub.s32 %s8, %s15
    %p69 = scmp.eq.s32.totalorder %s68, 0
    %s71 = sadd.s32 %s70, 1
    %s72 = scalar_select %p69, %s70, %s71
    %p75 = pneg %p69
    %p76 = scmp.eq.s32.totalorder %s8, 1
    %p77 = por %p75, %p76
    %p78 = scmp.ne.s32.totalorder %s70, %s73
    %p79 = scmp.eq.s32.totalorder %s8, 0
    %p80 = por %p78, %p79
    %p81 = scmp.ne.s32.totalorder %s70, %s73
    %p82 = scmp.eq.s32.totalorder %s13, 1
    %p83 = por %p81, %p82
    %p84 = scmp.ne.s32.totalorder %s73, %s74
    %p85 = scmp.eq.s32.totalorder %s13, 0
    %p86 = por %p84, %p85
    %p87 = scmp.ne.s32.totalorder %s73, %s74
    %p88 = scmp.eq.s32.totalorder %s14, 1
    %p89 = por %p87, %p88
    %p91 = scmp.ne.s32.totalorder %s74, %s90
    %p92 = scmp.eq.s32.totalorder %s14, 0
    %p93 = por %p91, %p92
    %p94 = scmp.le.s32.totalorder 1, %s8
    %p95 = scmp.lt.s32.totalorder %s8, 3
    %p96 = pnand %p94, %p95
    %p97 = pneg %p96
    // Predicated region
    $region9: #{transformer_dec.21} parent=5 // pred_check
      _
    $region10: #{transformer_dec.21} parent=5 // pred_check_branch
      %99 = sbr.rel (%p96) target = $region12
    $region11: #{transformer_dec.21} parent=5 // pred_region
      %s100 = ssub.s32 %s8, 1
    $region12: #{transformer_dec.21} parent=5 // pred_fallthru
      _
    %p101 = scmp.lt.s32.totalorder %s8, 2
    // Predicated region
    $region13: #{transformer_dec.21} parent=5 // pred_check
      %p102 = pneg %p101
    $region14: #{transformer_dec.21} parent=5 // pred_check_branch
      %104 = sbr.rel (%p102) target = $region16
    $region15: #{transformer_dec.21} parent=5 // pred_region
      // Predicated region
      $region17: #{transformer_dec.21} parent=15 // pred_check
        %p105 = pneg %p28
      $region18: #{transformer_dec.21} parent=15 // pred_check_branch
        %107 = sbr.rel (%p105) target = $region20
      $region19: #{transformer_dec.21} parent=15 // pred_region
        %p108 = scmp.lt.s32.totalorder %s8, 1
        %s109 = scalar_select %p108, %s8, 1
        %s110 = smul.addr %s109, 4
        %s111 = scalar_lea.vmem %s0, %s110
      $region20: #{transformer_dec.21} parent=15 // pred_fallthru
        _
      // Predicated region
      $region21: #{transformer_dec.21} parent=15 // pred_check
        %p112 = pneg %p54
      $region22: #{transformer_dec.21} parent=15 // pred_check_branch
        %114 = sbr.rel (%p112) target = $region24
      $region23: #{transformer_dec.21} parent=15 // pred_region
        %p115 = scmp.lt.s32.totalorder %s8, 1
        %s116 = scalar_select %p115, %s8, 1
        %s117 = smul.addr %s116, 4
        %s118 = scalar_lea.vmem %s1, %s117
      $region24: #{transformer_dec.21} parent=15 // pred_fallthru
        _
    $region16: #{transformer_dec.21} parent=5 // pred_fallthru
      _
    %p119 = scmp.le.s32.totalorder 1, %s8
    %p120 = scmp.lt.s32.totalorder %s8, 3
    %p121 = pnand %p119, %p120
    %p122 = pneg %p121
    // Predicated region
    $region25: #{transformer_dec.21} parent=5 // pred_check
      _
    $region26: #{transformer_dec.21} parent=5 // pred_check_branch
      %124 = sbr.rel (%p121) target = $region28
    $region27: #{transformer_dec.21} parent=5 // pred_region
      %s125 = ssub.s32 %s8, 1
      %p126 = scmp.lt.s32.totalorder %s13, 1
      %s127 = scalar_select %p126, %s13, 1
      %s128 = smul.addr %s127, 4
      %s129 = scalar_lea.vmem %s0, %s128
      %p130 = pneg %p34
      %p131 = pneg %p31
      %p132 = scmp.lt.s32.totalorder %s13, 1
      %s133 = scalar_select %p132, %s13, 1
      %s134 = smul.addr %s133, 4
      %s135 = scalar_lea.vmem %s1, %s134
      %p136 = pneg %p60
      %p137 = pneg %p57
      %p138 = pneg %p86
      %p139 = pneg %p83
      %p140 = scmp.lt.s32.totalorder %s13, 1
      %s141 = scalar_select %p140, %s13, 1
      %s142 = smul.addr %s141, 4
      %s143 = scalar_lea.vmem %s2, %s142
      %p144 = scmp.lt.s32.totalorder %s13, 1
      %s145 = scalar_select %p144, %s13, 1
      %s146 = smul.addr %s145, 4
      %s147 = scalar_lea.vmem %s0, %s146
      %p148 = scmp.lt.s32.totalorder %s13, 1
      %s149 = scalar_select %p148, %s13, 1
      %s150 = smul.addr %s149, 4
      %s151 = scalar_lea.vmem %s1, %s150
      %p152 = scmp.lt.s32.totalorder %s13, 1
      %s153 = scalar_select %p152, %s13, 1
      %s154 = smul.addr %s153, 4
      %s155 = scalar_lea.vmem %s2, %s154
      %v157 = vld [vmem:[%s147] sm:$0xf]
      %v158 = vld [vmem:[%s151] sm:$0xf]
      %v159 = vunpack.c.l.bf16 %v157
      %v160 = vmul.f32 %v159, 0.35355338
      %v161 = vpack.c.bf16 %v160, %v160
      %vm162 = vcmask 64512
      %v164 = vsel %vm162, %v161, 0
      %v167 = vsel %vm162, %v158, 0
      %169 = vmatprep.subr.bf16.mxu0 0
      %170 = vmatpush1.bf16.xpose.msra.mxu0 %v167
      %171 = vmatprep.subr.bf16.mxu0 0
      %172 = vmatpush1.bf16.xpose.msra.mxu0 0
      %173 = vmatprep.subr.bf16.mxu0 0
      %174 = vmatpush1.bf16.xpose.msra.mxu0 0
      %175 = vmatprep.subr.bf16.mxu0 0
      %176 = vmatpush1.bf16.xpose.msra.mxu0 0
      %177 = vmatprep.subr.bf16.mxu0 0
      %178 = vmatpush1.bf16.xpose.msra.mxu0 0
      %179 = vmatprep.subr.bf16.mxu0 0
      %180 = vmatpush1.bf16.xpose.msra.mxu0 0
      %181 = vmatprep.subr.bf16.mxu0 0
      %182 = vmatpush1.bf16.xpose.msra.mxu0 0
      %183 = vmatprep.subr.bf16.mxu0 0
      %184 = vmatpush1.bf16.xpose.msra.mxu0 0
      %185 = vmatprep.subr.bf16.mxu0 0
      %186 = vmatpush1.bf16.xpose.msra.mxu0 0
      %187 = vmatprep.subr.bf16.mxu0 0
      %188 = vmatpush1.bf16.xpose.msra.mxu0 0
      %189 = vmatprep.subr.bf16.mxu0 0
      %190 = vmatpush1.bf16.xpose.msra.mxu0 0
      %191 = vmatprep.subr.bf16.mxu0 0
      %192 = vmatpush1.bf16.xpose.msra.mxu0 0
      %193 = vmatprep.subr.bf16.mxu0 0
      %194 = vmatpush1.bf16.xpose.msra.mxu0 0
      %195 = vmatprep.subr.bf16.mxu0 0
      %196 = vmatpush1.bf16.xpose.msra.mxu0 0
      %197 = vmatprep.subr.bf16.mxu0 0
      %198 = vmatpush1.bf16.xpose.msra.mxu0 0
      %199 = vmatprep.subr.bf16.mxu0 0
      %200 = vmatpush1.bf16.xpose.msra.mxu0 0
      %201 = vmatprep.mubr.bf16.mxu0 0
      %202 = vmatmul.mubr.bf16.gmra.mrb[0].mxu0 %v164
      %v203 = vpop.f32.mrb[0].mxu0
      %v204 = vadd.f32 0.0, %v203
      %v205 = vpop.f32.mrb[0].mxu0
      %v206 = vpop.f32.mrb[0].mxu0
      %v207 = vpop.f32.mrb[0].mxu0
      %208 = vdwg.mxu0
      %v209 = vsel %vm162, %v204, -inf
      %210 = vmax.xlane.f32.xlu0 %v209
      %v211 = vpop.xlane.xlu0 %210
      %v212 = vsub.f32 %v204, %v211
      %v213 = vmul.f32 %v212, 1.442695
      %v214 = vpow.pop %v213
      %v215 = vsel %vm162, %v214, 0.0
      %216 = vadd.xlane.f32.xlu0 %v215
      %v217 = vpop.xlane.xlu0 %216
      %v218 = vrcp.pop %v217
      %v219 = vmul.f32 %v214, %v218
      %v220 = vpack.c.bf16 %v219, %v219
      %v222 = vunpack.c.l.b16 %v158
      %v223 = vpack.c.b16 %v222, %v222
      %224 = vrot.lane.b32.xlu0 %v223, 96
      %v225 = vpop.permute.xlu0 %224
      %v227 = vsel %vm162, %v220, 0
      %vm229 = vcmask 1043456
      %v231 = vsel %vm229, %v225, 0
      %233 = vmatprep.subr.bf16.mxu0 0
      %234 = vmatpush1.bf16.msra.mxu0 %v231
      %235 = vmatprep.subr.bf16.mxu0 0
      %236 = vmatpush1.bf16.msra.mxu0 0
      %237 = vmatprep.subr.bf16.mxu0 0
      %238 = vmatpush1.bf16.msra.mxu0 0
      %239 = vmatprep.subr.bf16.mxu0 0
      %240 = vmatpush1.bf16.msra.mxu0 0
      %241 = vmatprep.subr.bf16.mxu0 0
      %242 = vmatpush1.bf16.msra.mxu0 0
      %243 = vmatprep.subr.bf16.mxu0 0
      %244 = vmatpush1.bf16.msra.mxu0 0
      %245 = vmatprep.subr.bf16.mxu0 0
      %246 = vmatpush1.bf16.msra.mxu0 0
      %247 = vmatprep.subr.bf16.mxu0 0
      %248 = vmatpush1.bf16.msra.mxu0 0
      %249 = vmatprep.subr.bf16.mxu0 0
      %250 = vmatpush1.bf16.msra.mxu0 0
      %251 = vmatprep.subr.bf16.mxu0 0
      %252 = vmatpush1.bf16.msra.mxu0 0
      %253 = vmatprep.subr.bf16.mxu0 0
      %254 = vmatpush1.bf16.msra.mxu0 0
      %255 = vmatprep.subr.bf16.mxu0 0
      %256 = vmatpush1.bf16.msra.mxu0 0
      %257 = vmatprep.subr.bf16.mxu0 0
      %258 = vmatpush1.bf16.msra.mxu0 0
      %259 = vmatprep.subr.bf16.mxu0 0
      %260 = vmatpush1.bf16.msra.mxu0 0
      %261 = vmatprep.subr.bf16.mxu0 0
      %262 = vmatpush1.bf16.msra.mxu0 0
      %263 = vmatprep.subr.bf16.mxu0 0
      %264 = vmatpush1.bf16.msra.mxu0 0
      %265 = vmatprep.mubr.bf16.mxu0 0
      %266 = vmatmul.mubr.bf16.gmra.mrb[0].mxu0 %v227
      %v267 = vpop.f32.mrb[0].mxu0
      %v268 = vadd.f32 0.0, %v267
      %v269 = vpop.f32.mrb[0].mxu0
      %v270 = vpop.f32.mrb[0].mxu0
      %v271 = vpop.f32.mrb[0].mxu0
      %272 = vdwg.mxu0
      %274 = vrot.lane.b32.xlu0 %v161, 120
      %v275 = vpop.permute.xlu0 %274
      %276 = vrot.lane.b32.xlu0 %v223, 120
      %v277 = vpop.permute.xlu0 %276
      %v279 = vsel %vm162, %v275, 0
      %v282 = vsel %vm162, %v277, 0
      %284 = vmatprep.subr.bf16.mxu0 0
      %285 = vmatpush1.bf16.xpose.msra.mxu0 %v282
      %286 = vmatprep.subr.bf16.mxu0 0
      %287 = vmatpush1.bf16.xpose.msra.mxu0 0
      %288 = vmatprep.subr.bf16.mxu0 0
      %289 = vmatpush1.bf16.xpose.msra.mxu0 0
      %290 = vmatprep.subr.bf16.mxu0 0
      %291 = vmatpush1.bf16.xpose.msra.mxu0 0
      %292 = vmatprep.subr.bf16.mxu0 0
      %293 = vmatpush1.bf16.xpose.msra.mxu0 0
      %294 = vmatprep.subr.bf16.mxu0 0
      %295 = vmatpush1.bf16.xpose.msra.mxu0 0
      %296 = vmatprep.subr.bf16.mxu0 0
      %297 = vmatpush1.bf16.xpose.msra.mxu0 0
      %298 = vmatprep.subr.bf16.mxu0 0
      %299 = vmatpush1.bf16.xpose.msra.mxu0 0
      %300 = vmatprep.subr.bf16.mxu0 0
      %301 = vmatpush1.bf16.xpose.msra.mxu0 0
      %302 = vmatprep.subr.bf16.mxu0 0
      %303 = vmatpush1.bf16.xpose.msra.mxu0 0
      %304 = vmatprep.subr.bf16.mxu0 0
      %305 = vmatpush1.bf16.xpose.msra.mxu0 0
      %306 = vmatprep.subr.bf16.mxu0 0
      %307 = vmatpush1.bf16.xpose.msra.mxu0 0
      %308 = vmatprep.subr.bf16.mxu0 0
      %309 = vmatpush1.bf16.xpose.msra.mxu0 0
      %310 = vmatprep.subr.bf16.mxu0 0
      %311 = vmatpush1.bf16.xpose.msra.mxu0 0
      %312 = vmatprep.subr.bf16.mxu0 0
      %313 = vmatpush1.bf16.xpose.msra.mxu0 0
      %314 = vmatprep.subr.bf16.mxu0 0
      %315 = vmatpush1.bf16.xpose.msra.mxu0 0
      %316 = vmatprep.mubr.bf16.mxu0 0
      %317 = vmatmul.mubr.bf16.gmra.mrb[0].mxu0 %v279
      %v318 = vpop.f32.mrb[0].mxu0
      %v319 = vadd.f32 0.0, %v318
      %v320 = vpop.f32.mrb[0].mxu0
      %v321 = vpop.f32.mrb[0].mxu0
      %v322 = vpop.f32.mrb[0].mxu0
      %323 = vdwg.mxu0
      %v324 = vsel %vm162, %v319, -inf
      %325 = vmax.xlane.f32.xlu0 %v324
      %v326 = vpop.xlane.xlu0 %325
      %v327 = vsub.f32 %v319, %v326
      %v328 = vmul.f32 %v327, 1.442695
      %v329 = vpow.pop %v328
      %v330 = vsel %vm162, %v329, 0.0
      %331 = vadd.xlane.f32.xlu0 %v330
      %v332 = vpop.xlane.xlu0 %331
      %v333 = vrcp.pop %v332
      %v334 = vmul.f32 %v329, %v333
      %v335 = vpack.c.bf16 %v334, %v334
      %336 = vrot.lane.b32.xlu0 %v223, 88
      %v337 = vpop.permute.xlu0 %336
      %v339 = vsel %vm162, %v335, 0
      %v342 = vsel %vm229, %v337, 0
      %344 = vmatprep.subr.bf16.mxu0 0
      %345 = vmatpush1.bf16.msra.mxu0 %v342
      %346 = vmatprep.subr.bf16.mxu0 0
      %347 = vmatpush1.bf16.msra.mxu0 0
      %348 = vmatprep.subr.bf16.mxu0 0
      %349 = vmatpush1.bf16.msra.mxu0 0
      %350 = vmatprep.subr.bf16.mxu0 0
      %351 = vmatpush1.bf16.msra.mxu0 0
      %352 = vmatprep.subr.bf16.mxu0 0
      %353 = vmatpush1.bf16.msra.mxu0 0
      %354 = vmatprep.subr.bf16.mxu0 0
      %355 = vmatpush1.bf16.msra.mxu0 0
      %356 = vmatprep.subr.bf16.mxu0 0
      %357 = vmatpush1.bf16.msra.mxu0 0
      %358 = vmatprep.subr.bf16.mxu0 0
      %359 = vmatpush1.bf16.msra.mxu0 0
      %360 = vmatprep.subr.bf16.mxu0 0
      %361 = vmatpush1.bf16.msra.mxu0 0
      %362 = vmatprep.subr.bf16.mxu0 0
      %363 = vmatpush1.bf16.msra.mxu0 0
      %364 = vmatprep.subr.bf16.mxu0 0
      %365 = vmatpush1.bf16.msra.mxu0 0
      %366 = vmatprep.subr.bf16.mxu0 0
      %367 = vmatpush1.bf16.msra.mxu0 0
      %368 = vmatprep.subr.bf16.mxu0 0
      %369 = vmatpush1.bf16.msra.mxu0 0
      %370 = vmatprep.subr.bf16.mxu0 0
      %371 = vmatpush1.bf16.msra.mxu0 0
      %372 = vmatprep.subr.bf16.mxu0 0
      %373 = vmatpush1.bf16.msra.mxu0 0
      %374 = vmatprep.subr.bf16.mxu0 0
      %375 = vmatpush1.bf16.msra.mxu0 0
      %376 = vmatprep.mubr.bf16.mxu0 0
      %377 = vmatmul.mubr.bf16.gmra.mrb[0].mxu0 %v339
      %v378 = vpop.f32.mrb[0].mxu0
      %v379 = vadd.f32 0.0, %v378
      %v380 = vpop.f32.mrb[0].mxu0
      %v381 = vpop.f32.mrb[0].mxu0
      %v382 = vpop.f32.mrb[0].mxu0
      %383 = vdwg.mxu0
      %384 = vrot.lane.b32.xlu0 %v161, 112
      %v385 = vpop.permute.xlu0 %384
      %386 = vrot.lane.b32.xlu0 %v223, 112
      %v387 = vpop.permute.xlu0 %386
      %v389 = vsel %vm162, %v385, 0
      %v392 = vsel %vm162, %v387, 0
      %394 = vmatprep.subr.bf16.mxu0 0
      %395 = vmatpush1.bf16.xpose.msra.mxu0 %v392
      %396 = vmatprep.subr.bf16.mxu0 0
      %397 = vmatpush1.bf16.xpose.msra.mxu0 0
      %398 = vmatprep.subr.bf16.mxu0 0
      %399 = vmatpush1.bf16.xpose.msra.mxu0 0
      %400 = vmatprep.subr.bf16.mxu0 0
      %401 = vmatpush1.bf16.xpose.msra.mxu0 0
      %402 = vmatprep.subr.bf16.mxu0 0
      %403 = vmatpush1.bf16.xpose.msra.mxu0 0
      %404 = vmatprep.subr.bf16.mxu0 0
      %405 = vmatpush1.bf16.xpose.msra.mxu0 0
      %406 = vmatprep.subr.bf16.mxu0 0
      %407 = vmatpush1.bf16.xpose.msra.mxu0 0
      %408 = vmatprep.subr.bf16.mxu0 0
      %409 = vmatpush1.bf16.xpose.msra.mxu0 0
      %410 = vmatprep.subr.bf16.mxu0 0
      %411 = vmatpush1.bf16.xpose.msra.mxu0 0
      %412 = vmatprep.subr.bf16.mxu0 0
      %413 = vmatpush1.bf16.xpose.msra.mxu0 0
      %414 = vmatprep.subr.bf16.mxu0 0
      %415 = vmatpush1.bf16.xpose.msra.mxu0 0
      %416 = vmatprep.subr.bf16.mxu0 0
      %417 = vmatpush1.bf16.xpose.msra.mxu0 0
      %418 = vmatprep.subr.bf16.mxu0 0
      %419 = vmatpush1.bf16.xpose.msra.mxu0 0
      %420 = vmatprep.subr.bf16.mxu0 0
      %421 = vmatpush1.bf16.xpose.msra.mxu0 0
      %422 = vmatprep.subr.bf16.mxu0 0
      %423 = vmatpush1.bf16.xpose.msra.mxu0 0
      %424 = vmatprep.subr.bf16.mxu0 0
      %425 = vmatpush1.bf16.xpose.msra.mxu0 0
      %426 = vmatprep.mubr.bf16.mxu0 0
      %427 = vmatmul.mubr.bf16.gmra.mrb[0].mxu0 %v389
      %v428 = vpop.f32.mrb[0].mxu0
      %v429 = vadd.f32 0.0, %v428
      %v430 = vpop.f32.mrb[0].mxu0
      %v431 = vpop.f32.mrb[0].mxu0
      %v432 = vpop.f32.mrb[0].mxu0
      %433 = vdwg.mxu0
      %v434 = vsel %vm162, %v429, -inf
      %435 = vmax.xlane.f32.xlu0 %v434
      %v436 = vpop.xlane.xlu0 %435
      %v437 = vsub.f32 %v429, %v436
      %v438 = vmul.f32 %v437, 1.442695
      %v439 = vpow.pop %v438
      %v440 = vsel %vm162, %v439, 0.0
      %441 = vadd.xlane.f32.xlu0 %v440
      %v442 = vpop.xlane.xlu0 %441
      %v443 = vrcp.pop %v442
      %v444 = vmul.f32 %v439, %v443
      %v445 = vpack.c.bf16 %v444, %v444
      %446 = vrot.lane.b32.xlu0 %v223, 80
      %v447 = vpop.permute.xlu0 %446
      %v449 = vsel %vm162, %v445, 0
      %v452 = vsel %vm229, %v447, 0
      %454 = vmatprep.subr.bf16.mxu0 0
      %455 = vmatpush1.bf16.msra.mxu0 %v452
      %456 = vmatprep.subr.bf16.mxu0 0
      %457 = vmatpush1.bf16.msra.mxu0 0
      %458 = vmatprep.subr.bf16.mxu0 0
      %459 = vmatpush1.bf16.msra.mxu0 0
      %460 = vmatprep.subr.bf16.mxu0 0
      %461 = vmatpush1.bf16.msra.mxu0 0
      %462 = vmatprep.subr.bf16.mxu0 0
      %463 = vmatpush1.bf16.msra.mxu0 0
      %464 = vmatprep.subr.bf16.mxu0 0
      %465 = vmatpush1.bf16.msra.mxu0 0
      %466 = vmatprep.subr.bf16.mxu0 0
      %467 = vmatpush1.bf16.msra.mxu0 0
      %468 = vmatprep.subr.bf16.mxu0 0
      %469 = vmatpush1.bf16.msra.mxu0 0
      %470 = vmatprep.subr.bf16.mxu0 0
      %471 = vmatpush1.bf16.msra.mxu0 0
      %472 = vmatprep.subr.bf16.mxu0 0
      %473 = vmatpush1.bf16.msra.mxu0 0
      %474 = vmatprep.subr.bf16.mxu0 0
      %475 = vmatpush1.bf16.msra.mxu0 0
      %476 = vmatprep.subr.bf16.mxu0 0
      %477 = vmatpush1.bf16.msra.mxu0 0
      %478 = vmatprep.subr.bf16.mxu0 0
      %479 = vmatpush1.bf16.msra.mxu0 0
      %480 = vmatprep.subr.bf16.mxu0 0
      %481 = vmatpush1.bf16.msra.mxu0 0
      %482 = vmatprep.subr.bf16.mxu0 0
      %483 = vmatpush1.bf16.msra.mxu0 0
      %484 = vmatprep.subr.bf16.mxu0 0
      %485 = vmatpush1.bf16.msra.mxu0 0
      %486 = vmatprep.mubr.bf16.mxu0 0
      %487 = vmatmul.mubr.bf16.gmra.mrb[0].mxu0 %v449
      %v488 = vpop.f32.mrb[0].mxu0
      %v489 = vadd.f32 0.0, %v488
      %v490 = vpop.f32.mrb[0].mxu0
      %v491 = vpop.f32.mrb[0].mxu0
      %v492 = vpop.f32.mrb[0].mxu0
      %493 = vdwg.mxu0
      %494 = vrot.lane.b32.xlu0 %v161, 104
      %v495 = vpop.permute.xlu0 %494
      %496 = vrot.lane.b32.xlu0 %v223, 104
      %v497 = vpop.permute.xlu0 %496
      %v499 = vsel %vm162, %v495, 0
      %v502 = vsel %vm162, %v497, 0
      %504 = vmatprep.subr.bf16.mxu0 0
      %505 = vmatpush1.bf16.xpose.msra.mxu0 %v502
      %506 = vmatprep.subr.bf16.mxu0 0
      %507 = vmatpush1.bf16.xpose.msra.mxu0 0
      %508 = vmatprep.subr.bf16.mxu0 0
      %509 = vmatpush1.bf16.xpose.msra.mxu0 0
      %510 = vmatprep.subr.bf16.mxu0 0
      %511 = vmatpush1.bf16.xpose.msra.mxu0 0
      %512 = vmatprep.subr.bf16.mxu0 0
      %513 = vmatpush1.bf16.xpose.msra.mxu0 0
      %514 = vmatprep.subr.bf16.mxu0 0
      %515 = vmatpush1.bf16.xpose.msra.mxu0 0
      %516 = vmatprep.subr.bf16.mxu0 0
      %517 = vmatpush1.bf16.xpose.msra.mxu0 0
      %518 = vmatprep.subr.bf16.mxu0 0
      %519 = vmatpush1.bf16.xpose.msra.mxu0 0
      %520 = vmatprep.subr.bf16.mxu0 0
      %521 = vmatpush1.bf16.xpose.msra.mxu0 0
      %522 = vmatprep.subr.bf16.mxu0 0
      %523 = vmatpush1.bf16.xpose.msra.mxu0 0
      %524 = vmatprep.subr.bf16.mxu0 0
      %525 = vmatpush1.bf16.xpose.msra.mxu0 0
      %526 = vmatprep.subr.bf16.mxu0 0
      %527 = vmatpush1.bf16.xpose.msra.mxu0 0
      %528 = vmatprep.subr.bf16.mxu0 0
      %529 = vmatpush1.bf16.xpose.msra.mxu0 0
      %530 = vmatprep.subr.bf16.mxu0 0
      %531 = vmatpush1.bf16.xpose.msra.mxu0 0
      %532 = vmatprep.subr.bf16.mxu0 0
      %533 = vmatpush1.bf16.xpose.msra.mxu0 0
      %534 = vmatprep.subr.bf16.mxu0 0
      %535 = vmatpush1.bf16.xpose.msra.mxu0 0
      %536 = vmatprep.mubr.bf16.mxu0 0
      %537 = vmatmul.mubr.bf16.gmra.mrb[0].mxu0 %v499
      %v538 = vpop.f32.mrb[0].mxu0
      %v539 = vadd.f32 0.0, %v538
      %v540 = vpop.f32.mrb[0].mxu0
      %v541 = vpop.f32.mrb[0].mxu0
      %v542 = vpop.f32.mrb[0].mxu0
      %543 = vdwg.mxu0
      %v544 = vsel %vm162, %v539, -inf
      %545 = vmax.xlane.f32.xlu0 %v544
      %v546 = vpop.xlane.xlu0 %545
      %v547 = vsub.f32 %v539, %v546
      %v548 = vmul.f32 %v547, 1.442695
      %v549 = vpow.pop %v548
      %v550 = vsel %vm162, %v549, 0.0
      %551 = vadd.xlane.f32.xlu0 %v550
      %v552 = vpop.xlane.xlu0 %551
      %v553 = vrcp.pop %v552
      %v554 = vmul.f32 %v549, %v553
      %v555 = vpack.c.bf16 %v554, %v554
      %556 = vrot.lane.b32.xlu0 %v223, 72
      %v557 = vpop.permute.xlu0 %556
      %v559 = vsel %vm162, %v555, 0
      %v562 = vsel %vm229, %v557, 0
      %564 = vmatprep.subr.bf16.mxu0 0
      %565 = vmatpush1.bf16.msra.mxu0 %v562
      %566 = vmatprep.subr.bf16.mxu0 0
      %567 = vmatpush1.bf16.msra.mxu0 0
      %568 = vmatprep.subr.bf16.mxu0 0
      %569 = vmatpush1.bf16.msra.mxu0 0
      %570 = vmatprep.subr.bf16.mxu0 0
      %571 = vmatpush1.bf16.msra.mxu0 0
      %572 = vmatprep.subr.bf16.mxu0 0
      %573 = vmatpush1.bf16.msra.mxu0 0
      %574 = vmatprep.subr.bf16.mxu0 0
      %575 = vmatpush1.bf16.msra.mxu0 0
      %576 = vmatprep.subr.bf16.mxu0 0
      %577 = vmatpush1.bf16.msra.mxu0 0
      %578 = vmatprep.subr.bf16.mxu0 0
      %579 = vmatpush1.bf16.msra.mxu0 0
      %580 = vmatprep.subr.bf16.mxu0 0
      %581 = vmatpush1.bf16.msra.mxu0 0
      %582 = vmatprep.subr.bf16.mxu0 0
      %583 = vmatpush1.bf16.msra.mxu0 0
      %584 = vmatprep.subr.bf16.mxu0 0
      %585 = vmatpush1.bf16.msra.mxu0 0
      %586 = vmatprep.subr.bf16.mxu0 0
      %587 = vmatpush1.bf16.msra.mxu0 0
      %588 = vmatprep.subr.bf16.mxu0 0
      %589 = vmatpush1.bf16.msra.mxu0 0
      %590 = vmatprep.subr.bf16.mxu0 0
      %591 = vmatpush1.bf16.msra.mxu0 0
      %592 = vmatprep.subr.bf16.mxu0 0
      %593 = vmatpush1.bf16.msra.mxu0 0
      %594 = vmatprep.subr.bf16.mxu0 0
      %595 = vmatpush1.bf16.msra.mxu0 0
      %596 = vmatprep.mubr.bf16.mxu0 0
      %597 = vmatmul.mubr.bf16.gmra.mrb[0].mxu0 %v559
      %v598 = vpop.f32.mrb[0].mxu0
      %v599 = vadd.f32 0.0, %v598
      %v600 = vpop.f32.mrb[0].mxu0
      %v601 = vpop.f32.mrb[0].mxu0
      %v602 = vpop.f32.mrb[0].mxu0
      %603 = vdwg.mxu0
      %605 = vrot.lane.b32.xlu0 %v379, 8
      %v606 = vpop.permute.xlu0 %605
      %609 = vrot.lane.b32.xlu0 %v489, 16
      %v610 = vpop.permute.xlu0 %609
      %613 = vrot.lane.b32.xlu0 %v599, 24
      %v614 = vpop.permute.xlu0 %613
      %v616 = vsel %vm162, %v268, %v606
      %vm617 = vcmask 130048
      %v618 = vsel %vm617, %v616, %v610
      %vm619 = vcmask 195584
      %v620 = vsel %vm619, %v618, %v614
      %v621 = vpack.c.bf16 %v620, %v620
      %vm622 = vcmask 257024
      %623 = vst.msk [vmem:[%s155] sm:$0xf] %vm622, %v621
      %p624 = scmp.lt.s32.totalorder %s13, 1
      %s625 = scalar_select %p624, %s13, 1
      %s626 = smul.addr %s625, 4
      %s627 = scalar_lea.vmem %s2, %s626
      // Predicated region
      $region29: #{transformer_dec.21} parent=27 // pred_check
        %p628 = pneg %p83
      $region30: #{transformer_dec.21} parent=27 // pred_check_branch
        %630 = sbr.rel (%p628) target = $region32
      $region31: #{transformer_dec.21} parent=27 // pred_region
        _
      $region32: #{transformer_dec.21} parent=27 // pred_fallthru
        _
    $region28: #{transformer_dec.21} parent=5 // pred_fallthru
      _
    %p631 = scmp.le.s32.totalorder 2, %s8
    // Predicated region
    $region33: #{transformer_dec.21} parent=5 // pred_check
      %p632 = pneg %p631
    $region34: #{transformer_dec.21} parent=5 // pred_check_branch
      %634 = sbr.rel (%p632) target = $region36
    $region35: #{transformer_dec.21} parent=5 // pred_region
      %s635 = ssub.s32 %s8, 2
      // Predicated region
      $region37: #{transformer_dec.21} parent=35 // pred_check
        %p636 = pneg %p89
      $region38: #{transformer_dec.21} parent=35 // pred_check_branch
        %638 = sbr.rel (%p636) target = $region40
      $region39: #{transformer_dec.21} parent=35 // pred_region
        %p639 = scmp.lt.s32.totalorder %s14, 1
        %s640 = scalar_select %p639, %s14, 1
        %s641 = smul.addr %s640, 4
        %s642 = scalar_lea.vmem %s2, %s641
      $region40: #{transformer_dec.21} parent=35 // pred_fallthru
        _
    $region36: #{transformer_dec.21} parent=5 // pred_fallthru
      _
  $region6: #{transformer_dec.21} parent=0 // loop_footer
    %s12 = sadd.s32 1, %s8
  $region7: #{transformer_dec.21} parent=0 // loop_footer_branch
    %7 = sbr.rel target = $region3
  $region8: #{transformer_dec.21} parent=0 // loop_exit
    _

// kernel: transformer_dec.23
$region0: #{transformer_dec.23}
  #allocation0 [shape = 'u32[]', space=smem, size = 0x4, offset = 0x4, fixed_abs, tag = 'smem constant byte address 0x4 - core index']
  #allocation1 [shape = 'u32[144,128]{1,0:T(1,128)}', space=vmem, size = 0x12000, scoped, tag = 'internal scratch']
  %s0 = inlined_call_operand.vmem [shape: f32[16,32], index: 0, kind: input, shape index: {}]
  %s1 = inlined_call_operand.vmem [shape: bf16[32,64], index: 1, kind: input, shape index: {}]
  %s2 = inlined_call_operand.vmem [shape: f32[1,64], index: 2, kind: input, shape index: {}]
  %s3 = inlined_call_operand.vmem [shape: bf16[64,32], index: 3, kind: input, shape index: {}]
  %s4 = inlined_call_operand.vmem [shape: f32[1,32], index: 4, kind: input, shape index: {}]
  %s5 = inlined_call_operand.vmem [shape: f32[1,32], index: 5, kind: input, shape index: {}]
  %s6 = inlined_call_operand.vmem [shape: f32[1,32], index: 6, kind: input, shape index: {}]
  %s7 = inlined_call_operand.vmem [shape: f32[16,32], index: 7, kind: output, shape index: {}]
  %s8 = sld [smem:[#allocation0]]
  $region38: #{transformer_dec.23} parent=0
    _
  %s10 = ssub.s32 1, %s8
  %s11 = scalar_select 0, %s10, %s8
  // Predicated region
  $region2: #{transformer_dec.23} parent=0 // pred_check
    _
  $region3: #{transformer_dec.23} parent=0 // pred_check_branch
    %13 = sbr.rel (0) target = $region5
  $region4: #{transformer_dec.23} parent=0 // pred_region
    _
  $region5: #{transformer_dec.23} parent=0 // pred_fallthru
    _
  // Predicated region
  $region6: #{transformer_dec.23} parent=0 // pred_check
    _
  $region7: #{transformer_dec.23} parent=0 // pred_check_branch
    %15 = sbr.rel (0) target = $region9
  $region8: #{transformer_dec.23} parent=0 // pred_region
    _
  $region9: #{transformer_dec.23} parent=0 // pred_fallthru
    _
  // Predicated region
  $region10: #{transformer_dec.23} parent=0 // pred_check
    _
  $region11: #{transformer_dec.23} parent=0 // pred_check_branch
    %17 = sbr.rel (0) target = $region13
  $region12: #{transformer_dec.23} parent=0 // pred_region
    _
  $region13: #{transformer_dec.23} parent=0 // pred_fallthru
    _
  // Predicated region
  $region14: #{transformer_dec.23} parent=0 // pred_check
    _
  $region15: #{transformer_dec.23} parent=0 // pred_check_branch
    %19 = sbr.rel (0) target = $region17
  $region16: #{transformer_dec.23} parent=0 // pred_region
    _
  $region17: #{transformer_dec.23} parent=0 // pred_fallthru
    _
  // Predicated region
  $region18: #{transformer_dec.23} parent=0 // pred_check
    _
  $region19: #{transformer_dec.23} parent=0 // pred_check_branch
    %21 = sbr.rel (0) target = $region21
  $region20: #{transformer_dec.23} parent=0 // pred_region
    _
  $region21: #{transformer_dec.23} parent=0 // pred_fallthru
    _
  // Predicated region
  $region22: #{transformer_dec.23} parent=0 // pred_check
    _
  $region23: #{transformer_dec.23} parent=0 // pred_check_branch
    %23 = sbr.rel (0) target = $region25
  $region24: #{transformer_dec.23} parent=0 // pred_region
    _
  $region25: #{transformer_dec.23} parent=0 // pred_fallthru
    _
  // Predicated region
  $region26: #{transformer_dec.23} parent=0 // pred_check
    _
  $region27: #{transformer_dec.23} parent=0 // pred_check_branch
    %25 = sbr.rel (0) target = $region29
  $region28: #{transformer_dec.23} parent=0 // pred_region
    _
  $region29: #{transformer_dec.23} parent=0 // pred_fallthru
    _
  %v27 = vld [vmem:[%s0] sm:$0xff]
  %v28 = vld [vmem:[%s0 + $0x8] sm:$0xff]
  %v29 = vpack.c.bf16 %v28, %v27
  %v30 = vld [vmem:[%s1] sm:$0xf]
  %v31 = vld [vmem:[%s1 + $0x4] sm:$0xf]
  %v32 = vld [vmem:[%s1 + $0x8] sm:$0xf]
  %v33 = vld [vmem:[%s1 + $0xc] sm:$0xf]
  %v34 = vld [vmem:[%s2] sm:$0x1]
  %v36 = vlaneseq
  %v37 = vshrl.u32 %v36, 7
  %v38 = vsub.s32 0, %v37
  %v39 = vrot.slane %v34, %v38
  %v45 = vunpack.c.l.b16 %v30
  %v46 = vunpack.c.l.b16 %v31
  %v47 = vunpack.c.l.b16 %v32
  %v48 = vunpack.c.l.b16 %v33
  %v49 = vpack.c.b16 %v46, %v45
  %v50 = vpack.c.b16 %v48, %v47
  %vm53 = vcmask 261120
  %v55 = vsel %vm53, %v29, 0
  %57 = vmatprep.subr.bf16.mxu0 0
  %58 = vmatpush1.bf16.msra.mxu0 %v49
  %59 = vmatprep.subr.bf16.mxu0 0
  %60 = vmatpush1.bf16.msra.mxu0 %v50
  %61 = vmatprep.subr.bf16.mxu0 0
  %62 = vmatpush1.bf16.msra.mxu0 0
  %63 = vmatprep.subr.bf16.mxu0 0
  %64 = vmatpush1.bf16.msra.mxu0 0
  %65 = vmatprep.subr.bf16.mxu0 0
  %66 = vmatpush1.bf16.msra.mxu0 0
  %67 = vmatprep.subr.bf16.mxu0 0
  %68 = vmatpush1.bf16.msra.mxu0 0
  %69 = vmatprep.subr.bf16.mxu0 0
  %70 = vmatpush1.bf16.msra.mxu0 0
  %71 = vmatprep.subr.bf16.mxu0 0
  %72 = vmatpush1.bf16.msra.mxu0 0
  %73 = vmatprep.subr.bf16.mxu0 0
  %74 = vmatpush1.bf16.msra.mxu0 0
  %75 = vmatprep.subr.bf16.mxu0 0
  %76 = vmatpush1.bf16.msra.mxu0 0
  %77 = vmatprep.subr.bf16.mxu0 0
  %78 = vmatpush1.bf16.msra.mxu0 0
  %79 = vmatprep.subr.bf16.mxu0 0
  %80 = vmatpush1.bf16.msra.mxu0 0
  %81 = vmatprep.subr.bf16.mxu0 0
  %82 = vmatpush1.bf16.msra.mxu0 0
  %83 = vmatprep.subr.bf16.mxu0 0
  %84 = vmatpush1.bf16.msra.mxu0 0
  %85 = vmatprep.subr.bf16.mxu0 0
  %86 = vmatpush1.bf16.msra.mxu0 0
  %87 = vmatprep.subr.bf16.mxu0 0
  %88 = vmatpush1.bf16.msra.mxu0 0
  %89 = vmatprep.mubr.bf16.mxu0 0
  %90 = vmatmul.mubr.bf16.gmra.mrb[0].mxu0 %v55
  %v91 = vpop.f32.mrb[0].mxu0
  %v92 = vadd.f32 %v39, %v91
  %v93 = vpop.f32.mrb[0].mxu0
  %v94 = vpop.f32.mrb[0].mxu0
  %v95 = vadd.f32 %v39, %v94
  %v96 = vpop.f32.mrb[0].mxu0
  %97 = vdwg.mxu0
  %v98 = vmax.f32 %v92, 0.0
  %v99 = vmax.f32 %v95, 0.0
  %v100 = vpack.c.bf16 %v99, %v98
  %v101 = vld [vmem:[%s3] sm:$0xf]
  %v102 = vld [vmem:[%s3 + $0x4] sm:$0xf]
  %v103 = vld [vmem:[%s3 + $0x8] sm:$0xf]
  %v104 = vld [vmem:[%s3 + $0xc] sm:$0xf]
  %v105 = vld [vmem:[%s3 + $0x10] sm:$0xf]
  %v106 = vld [vmem:[%s3 + $0x14] sm:$0xf]
  %v107 = vld [vmem:[%s3 + $0x18] sm:$0xf]
  %v108 = vld [vmem:[%s3 + $0x1c] sm:$0xf]
  %v109 = vld [vmem:[%s4] sm:$0x1]
  %v111 = vlaneseq
  %v112 = vshrl.u32 %v111, 7
  %v113 = vsub.s32 0, %v112
  %v114 = vrot.slane %v109, %v113
  %v124 = vunpack.c.l.b16 %v101
  %v125 = vunpack.c.l.b16 %v102
  %v126 = vunpack.c.l.b16 %v103
  %v127 = vunpack.c.l.b16 %v104
  %v128 = vunpack.c.l.b16 %v105
  %v129 = vunpack.c.l.b16 %v106
  %v130 = vunpack.c.l.b16 %v107
  %v131 = vunpack.c.l.b16 %v108
  %v132 = vpack.c.b16 %v125, %v124
  %v133 = vpack.c.b16 %v127, %v126
  %v134 = vpack.c.b16 %v129, %v128
  %v135 = vpack.c.b16 %v131, %v130
  %vm140 = vcmask 523264
  %v142 = vsel %vm140, %v100, 0
  %144 = vmatprep.subr.bf16.mxu0 0
  %145 = vmatpush1.bf16.msra.mxu0 %v132
  %146 = vmatprep.subr.bf16.mxu0 0
  %147 = vmatpush1.bf16.msra.mxu0 %v133
  %148 = vmatprep.subr.bf16.mxu0 0
  %149 = vmatpush1.bf16.msra.mxu0 %v134
  %150 = vmatprep.subr.bf16.mxu0 0
  %151 = vmatpush1.bf16.msra.mxu0 %v135
  %152 = vmatprep.subr.bf16.mxu0 0
  %153 = vmatpush1.bf16.msra.mxu0 0
  %154 = vmatprep.subr.bf16.mxu0 0
  %155 = vmatpush1.bf16.msra.mxu0 0
  %156 = vmatprep.subr.bf16.mxu0 0
  %157 = vmatpush1.bf16.msra.mxu0 0
  %158 = vmatprep.subr.bf16.mxu0 0
  %159 = vmatpush1.bf16.msra.mxu0 0
  %160 = vmatprep.subr.bf16.mxu0 0
  %161 = vmatpush1.bf16.msra.mxu0 0
  %162 = vmatprep.subr.bf16.mxu0 0
  %163 = vmatpush1.bf16.msra.mxu0 0
  %164 = vmatprep.subr.bf16.mxu0 0
  %165 = vmatpush1.bf16.msra.mxu0 0
  %166 = vmatprep.subr.bf16.mxu0 0
  %167 = vmatpush1.bf16.msra.mxu0 0
  %168 = vmatprep.subr.bf16.mxu0 0
  %169 = vmatpush1.bf16.msra.mxu0 0
  %170 = vmatprep.subr.bf16.mxu0 0
  %171 = vmatpush1.bf16.msra.mxu0 0
  %172 = vmatprep.subr.bf16.mxu0 0
  %173 = vmatpush1.bf16.msra.mxu0 0
  %174 = vmatprep.subr.bf16.mxu0 0
  %175 = vmatpush1.bf16.msra.mxu0 0
  %176 = vmatprep.mubr.bf16.mxu0 0
  %177 = vmatmul.mubr.bf16.gmra.mrb[0].mxu0 %v142
  %v178 = vpop.f32.mrb[0].mxu0
  %v179 = vadd.f32 %v114, %v178
  %v180 = vpop.f32.mrb[0].mxu0
  %v181 = vpop.f32.mrb[0].mxu0
  %v182 = vadd.f32 %v114, %v181
  %v183 = vpop.f32.mrb[0].mxu0
  %184 = vdwg.mxu0
  %v185 = vadd.f32 %v179, %v27
  %v186 = vadd.f32 %v182, %v28
  %v187 = vld [vmem:[%s5] sm:$0x1]
  %v188 = vld [vmem:[%s6] sm:$0x1]
  %v189 = vsel %vm53, %v185, 0.0
  %190 = vadd.xlane.f32.xlu0 %v189
  %v191 = vpop.xlane.xlu0 %190
  %v192 = vsel %vm53, %v186, 0.0
  %193 = vadd.xlane.f32.xlu0 %v192
  %v194 = vpop.xlane.xlu0 %193
  %v195 = vrcp.pop 32.0
  %v196 = vmul.f32 %v191, %v195
  %v197 = vmul.f32 %v194, %v195
  %v198 = vsub.f32 %v185, %v196
  %v199 = vsub.f32 %v186, %v197
  %v200 = vmul.f32 %v198, %v198
  %v201 = vmul.f32 %v199, %v199
  %v202 = vsel %vm53, %v200, 0.0
  %203 = vadd.xlane.f32.xlu0 %v202
  %v204 = vpop.xlane.xlu0 %203
  %v205 = vsel %vm53, %v201, 0.0
  %206 = vadd.xlane.f32.xlu0 %v205
  %v207 = vpop.xlane.xlu0 %206
  %v208 = vmul.f32 %v204, %v195
  %v209 = vmul.f32 %v207, %v195
  %v210 = vadd.f32 %v208, 1e-05
  %v211 = vadd.f32 %v209, 1e-05
  %v212 = vrsqrt.pop %v210
  %v213 = vrsqrt.pop %v211
  %v214 = vmul.f32 %v198, %v212
  %v215 = vmul.f32 %v199, %v213
  %v217 = vlaneseq
  %v218 = vshrl.u32 %v217, 7
  %v219 = vsub.s32 0, %v218
  %v220 = vrot.slane %v187, %v219
  %v222 = vmul.f32 %v214, %v220
  %v223 = vmul.f32 %v215, %v220
  %v225 = vlaneseq
  %v226 = vshrl.u32 %v225, 7
  %v227 = vsub.s32 0, %v226
  %v228 = vrot.slane %v188, %v227
  %v230 = vadd.f32 %v222, %v228
  %v231 = vadd.f32 %v223, %v228
  %232 = vst.msk [vmem:[%s7] sm:$0xff] %vm53, %v230
  %233 = vst.msk [vmem:[%s7 + $0x8] sm:$0xff] %vm53, %v231
  // Predicated region
  $region30: #{transformer_dec.23} parent=0 // pred_check
    _
  $region31: #{transformer_dec.23} parent=0 // pred_check_branch
    %235 = sbr.rel (0) target = $region33
  $region32: #{transformer_dec.23} parent=0 // pred_region
    _
  $region33: #{transformer_dec.23} parent=0 // pred_fallthru
    _
  // Predicated region
  $region34: #{transformer_dec.23} parent=0 // pred_check
    _
  $region35: #{transformer_dec.23} parent=0 // pred_check_branch
    %237 = sbr.rel (0) target = $region37
  $region36: #{transformer_dec.23} parent=0 // pred_region
    _
  $region37: #{transformer_dec.23} parent=0 // pred_fallthru
    _

// kernel: transformer_dec.31
$region0: #{transformer_dec.31}
  #allocation0 [shape = 'u32[]', space=smem, size = 0x4, offset = 0x4, fixed_abs, tag = 'smem constant byte address 0x4 - core index']
  #allocation1 [shape = 'u32[144,128]{1,0:T(1,128)}', space=vmem, size = 0x12000, scoped, tag = 'internal scratch']
  %s0 = inlined_call_operand.vmem [shape: f32[16,32], index: 0, kind: input, shape index: {}]
  %s1 = inlined_call_operand.vmem [shape: bf16[32,64], index: 1, kind: input, shape index: {}]
  %s2 = inlined_call_operand.vmem [shape: f32[1,64], index: 2, kind: input, shape index: {}]
  %s3 = inlined_call_operand.vmem [shape: bf16[64,32], index: 3, kind: input, shape index: {}]
  %s4 = inlined_call_operand.vmem [shape: f32[1,32], index: 4, kind: input, shape index: {}]
  %s5 = inlined_call_operand.vmem [shape: f32[1,32], index: 5, kind: input, shape index: {}]
  %s6 = inlined_call_operand.vmem [shape: f32[1,32], index: 6, kind: input, shape index: {}]
  %s7 = inlined_call_operand.hbm [shape: f32[16,32], index: 7, kind: output, shape index: {}]
  %s8 = sld [smem:[#allocation0]]
  $region38: #{transformer_dec.31} parent=0
    _
  %s10 = ssub.s32 1, %s8
  %s11 = scalar_select 0, %s10, %s8
  $region1: #{transformer_dec.31} parent=0
    #allocation2 [shape = 'u8[8192]{0}', space=vmem, size = 0x2000, scoped, tag = 'output window, operand 0, single buffered']
    #allocation3 [shape = 's32[1]{0}', space=sflag, size = 0x4, scoped, tag = 'scoped memory for transformer_dec.31']
    %12 = vsyncpa [#allocation3], 0
    // Predicated region
    $region2: #{transformer_dec.31} parent=1 // pred_check
      _
    $region3: #{transformer_dec.31} parent=1 // pred_check_branch
      %14 = sbr.rel (0) target = $region5
    $region4: #{transformer_dec.31} parent=1 // pred_region
      _
    $region5: #{transformer_dec.31} parent=1 // pred_fallthru
      _
    // Predicated region
    $region6: #{transformer_dec.31} parent=1 // pred_check
      _
    $region7: #{transformer_dec.31} parent=1 // pred_check_branch
      %16 = sbr.rel (0) target = $region9
    $region8: #{transformer_dec.31} parent=1 // pred_region
      _
    $region9: #{transformer_dec.31} parent=1 // pred_fallthru
      _
    // Predicated region
    $region10: #{transformer_dec.31} parent=1 // pred_check
      _
    $region11: #{transformer_dec.31} parent=1 // pred_check_branch
      %18 = sbr.rel (0) target = $region13
    $region12: #{transformer_dec.31} parent=1 // pred_region
      _
    $region13: #{transformer_dec.31} parent=1 // pred_fallthru
      _
    // Predicated region
    $region14: #{transformer_dec.31} parent=1 // pred_check
      _
    $region15: #{transformer_dec.31} parent=1 // pred_check_branch
      %20 = sbr.rel (0) target = $region17
    $region16: #{transformer_dec.31} parent=1 // pred_region
      _
    $region17: #{transformer_dec.31} parent=1 // pred_fallthru
      _
    // Predicated region
    $region18: #{transformer_dec.31} parent=1 // pred_check
      _
    $region19: #{transformer_dec.31} parent=1 // pred_check_branch
      %22 = sbr.rel (0) target = $region21
    $region20: #{transformer_dec.31} parent=1 // pred_region
      _
    $region21: #{transformer_dec.31} parent=1 // pred_fallthru
      _
    // Predicated region
    $region22: #{transformer_dec.31} parent=1 // pred_check
      _
    $region23: #{transformer_dec.31} parent=1 // pred_check_branch
      %24 = sbr.rel (0) target = $region25
    $region24: #{transformer_dec.31} parent=1 // pred_region
      _
    $region25: #{transformer_dec.31} parent=1 // pred_fallthru
      _
    // Predicated region
    $region26: #{transformer_dec.31} parent=1 // pred_check
      _
    $region27: #{transformer_dec.31} parent=1 // pred_check_branch
      %26 = sbr.rel (0) target = $region29
    $region28: #{transformer_dec.31} parent=1 // pred_region
      _
    $region29: #{transformer_dec.31} parent=1 // pred_fallthru
      _
    %v28 = vld [vmem:[%s0] sm:$0xff]
    %v29 = vld [vmem:[%s0 + $0x8] sm:$0xff]
    %v30 = vpack.c.bf16 %v29, %v28
    %v31 = vld [vmem:[%s1] sm:$0xf]
    %v32 = vld [vmem:[%s1 + $0x4] sm:$0xf]
    %v33 = vld [vmem:[%s1 + $0x8] sm:$0xf]
    %v34 = vld [vmem:[%s1 + $0xc] sm:$0xf]
    %v35 = vld [vmem:[%s2] sm:$0x1]
    %v37 = vlaneseq
    %v38 = vshrl.u32 %v37, 7
    %v39 = vsub.s32 0, %v38
    %v40 = vrot.slane %v35, %v39
    %v46 = vunpack.c.l.b16 %v31
    %v47 = vunpack.c.l.b16 %v32
    %v48 = vunpack.c.l.b16 %v33
    %v49 = vunpack.c.l.b16 %v34
    %v50 = vpack.c.b16 %v47, %v46
    %v51 = vpack.c.b16 %v49, %v48
    %vm54 = vcmask 261120
    %v56 = vsel %vm54, %v30, 0
    %58 = vmatprep.subr.bf16.mxu0 0
    %59 = vmatpush1.bf16.msra.mxu0 %v50
    %60 = vmatprep.subr.bf16.mxu0 0
    %61 = vmatpush1.bf16.msra.mxu0 %v51
    %62 = vmatprep.subr.bf16.mxu0 0
    %63 = vmatpush1.bf16.msra.mxu0 0
    %64 = vmatprep.subr.bf16.mxu0 0
    %65 = vmatpush1.bf16.msra.mxu0 0
    %66 = vmatprep.subr.bf16.mxu0 0
    %67 = vmatpush1.bf16.msra.mxu0 0
    %68 = vmatprep.subr.bf16.mxu0 0
    %69 = vmatpush1.bf16.msra.mxu0 0
    %70 = vmatprep.subr.bf16.mxu0 0
    %71 = vmatpush1.bf16.msra.mxu0 0
    %72 = vmatprep.subr.bf16.mxu0 0
    %73 = vmatpush1.bf16.msra.mxu0 0
    %74 = vmatprep.subr.bf16.mxu0 0
    %75 = vmatpush1.bf16.msra.mxu0 0
    %76 = vmatprep.subr.bf16.mxu0 0
    %77 = vmatpush1.bf16.msra.mxu0 0
    %78 = vmatprep.subr.bf16.mxu0 0
    %79 = vmatpush1.bf16.msra.mxu0 0
    %80 = vmatprep.subr.bf16.mxu0 0
    %81 = vmatpush1.bf16.msra.mxu0 0
    %82 = vmatprep.subr.bf16.mxu0 0
    %83 = vmatpush1.bf16.msra.mxu0 0
    %84 = vmatprep.subr.bf16.mxu0 0
    %85 = vmatpush1.bf16.msra.mxu0 0
    %86 = vmatprep.subr.bf16.mxu0 0
    %87 = vmatpush1.bf16.msra.mxu0 0
    %88 = vmatprep.subr.bf16.mxu0 0
    %89 = vmatpush1.bf16.msra.mxu0 0
    %90 = vmatprep.mubr.bf16.mxu0 0
    %91 = vmatmul.mubr.bf16.gmra.mrb[0].mxu0 %v56
    %v92 = vpop.f32.mrb[0].mxu0
    %v93 = vadd.f32 %v40, %v92
    %v94 = vpop.f32.mrb[0].mxu0
    %v95 = vpop.f32.mrb[0].mxu0
    %v96 = vadd.f32 %v40, %v95
    %v97 = vpop.f32.mrb[0].mxu0
    %98 = vdwg.mxu0
    %v99 = vmax.f32 %v93, 0.0
    %v100 = vmax.f32 %v96, 0.0
    %v101 = vpack.c.bf16 %v100, %v99
    %v102 = vld [vmem:[%s3] sm:$0xf]
    %v103 = vld [vmem:[%s3 + $0x4] sm:$0xf]
    %v104 = vld [vmem:[%s3 + $0x8] sm:$0xf]
    %v105 = vld [vmem:[%s3 + $0xc] sm:$0xf]
    %v106 = vld [vmem:[%s3 + $0x10] sm:$0xf]
    %v107 = vld [vmem:[%s3 + $0x14] sm:$0xf]
    %v108 = vld [vmem:[%s3 + $0x18] sm:$0xf]
    %v109 = vld [vmem:[%s3 + $0x1c] sm:$0xf]
    %v110 = vld [vmem:[%s4] sm:$0x1]
    %v112 = vlaneseq
    %v113 = vshrl.u32 %v112, 7
    %v114 = vsub.s32 0, %v113
    %v115 = vrot.slane %v110, %v114
    %v125 = vunpack.c.l.b16 %v102
    %v126 = vunpack.c.l.b16 %v103
    %v127 = vunpack.c.l.b16 %v104
    %v128 = vunpack.c.l.b16 %v105
    %v129 = vunpack.c.l.b16 %v106
    %v130 = vunpack.c.l.b16 %v107
    %v131 = vunpack.c.l.b16 %v108
    %v132 = vunpack.c.l.b16 %v109
    %v133 = vpack.c.b16 %v126, %v125
    %v134 = vpack.c.b16 %v128, %v127
    %v135 = vpack.c.b16 %v130, %v129
    %v136 = vpack.c.b16 %v132, %v131
    %vm141 = vcmask 523264
    %v143 = vsel %vm141, %v101, 0
    %145 = vmatprep.subr.bf16.mxu0 0
    %146 = vmatpush1.bf16.msra.mxu0 %v133
    %147 = vmatprep.subr.bf16.mxu0 0
    %148 = vmatpush1.bf16.msra.mxu0 %v134
    %149 = vmatprep.subr.bf16.mxu0 0
    %150 = vmatpush1.bf16.msra.mxu0 %v135
    %151 = vmatprep.subr.bf16.mxu0 0
    %152 = vmatpush1.bf16.msra.mxu0 %v136
    %153 = vmatprep.subr.bf16.mxu0 0
    %154 = vmatpush1.bf16.msra.mxu0 0
    %155 = vmatprep.subr.bf16.mxu0 0
    %156 = vmatpush1.bf16.msra.mxu0 0
    %157 = vmatprep.subr.bf16.mxu0 0
    %158 = vmatpush1.bf16.msra.mxu0 0
    %159 = vmatprep.subr.bf16.mxu0 0
    %160 = vmatpush1.bf16.msra.mxu0 0
    %161 = vmatprep.subr.bf16.mxu0 0
    %162 = vmatpush1.bf16.msra.mxu0 0
    %163 = vmatprep.subr.bf16.mxu0 0
    %164 = vmatpush1.bf16.msra.mxu0 0
    %165 = vmatprep.subr.bf16.mxu0 0
    %166 = vmatpush1.bf16.msra.mxu0 0
    %167 = vmatprep.subr.bf16.mxu0 0
    %168 = vmatpush1.bf16.msra.mxu0 0
    %169 = vmatprep.subr.bf16.mxu0 0
    %170 = vmatpush1.bf16.msra.mxu0 0
    %171 = vmatprep.subr.bf16.mxu0 0
    %172 = vmatpush1.bf16.msra.mxu0 0
    %173 = vmatprep.subr.bf16.mxu0 0
    %174 = vmatpush1.bf16.msra.mxu0 0
    %175 = vmatprep.subr.bf16.mxu0 0
    %176 = vmatpush1.bf16.msra.mxu0 0
    %177 = vmatprep.mubr.bf16.mxu0 0
    %178 = vmatmul.mubr.bf16.gmra.mrb[0].mxu0 %v143
    %v179 = vpop.f32.mrb[0].mxu0
    %v180 = vadd.f32 %v115, %v179
    %v181 = vpop.f32.mrb[0].mxu0
    %v182 = vpop.f32.mrb[0].mxu0
    %v183 = vadd.f32 %v115, %v182
    %v184 = vpop.f32.mrb[0].mxu0
    %185 = vdwg.mxu0
    %v186 = vadd.f32 %v180, %v28
    %v187 = vadd.f32 %v183, %v29
    %v188 = vld [vmem:[%s5] sm:$0x1]
    %v189 = vld [vmem:[%s6] sm:$0x1]
    %v190 = vsel %vm54, %v186, 0.0
    %191 = vadd.xlane.f32.xlu0 %v190
    %v192 = vpop.xlane.xlu0 %191
    %v193 = vsel %vm54, %v187, 0.0
    %194 = vadd.xlane.f32.xlu0 %v193
    %v195 = vpop.xlane.xlu0 %194
    %v196 = vrcp.pop 32.0
    %v197 = vmul.f32 %v192, %v196
    %v198 = vmul.f32 %v195, %v196
    %v199 = vsub.f32 %v186, %v197
    %v200 = vsub.f32 %v187, %v198
    %v201 = vmul.f32 %v199, %v199
    %v202 = vmul.f32 %v200, %v200
    %v203 = vsel %vm54, %v201, 0.0
    %204 = vadd.xlane.f32.xlu0 %v203
    %v205 = vpop.xlane.xlu0 %204
    %v206 = vsel %vm54, %v202, 0.0
    %207 = vadd.xlane.f32.xlu0 %v206
    %v208 = vpop.xlane.xlu0 %207
    %v209 = vmul.f32 %v205, %v196
    %v210 = vmul.f32 %v208, %v196
    %v211 = vadd.f32 %v209, 1e-05
    %v212 = vadd.f32 %v210, 1e-05
    %v213 = vrsqrt.pop %v211
    %v214 = vrsqrt.pop %v212
    %v215 = vmul.f32 %v199, %v213
    %v216 = vmul.f32 %v200, %v214
    %v218 = vlaneseq
    %v219 = vshrl.u32 %v218, 7
    %v220 = vsub.s32 0, %v219
    %v221 = vrot.slane %v188, %v220
    %v223 = vmul.f32 %v215, %v221
    %v224 = vmul.f32 %v216, %v221
    %v226 = vlaneseq
    %v227 = vshrl.u32 %v226, 7
    %v228 = vsub.s32 0, %v227
    %v229 = vrot.slane %v189, %v228
    %v231 = vadd.f32 %v223, %v229
    %v232 = vadd.f32 %v224, %v229
    %233 = vst.msk [vmem:[#allocation2] sm:$0xff] %vm54, %v231
    %234 = vst.msk [vmem:[#allocation2 + $0x8] sm:$0xff] %vm54, %v232
    // Predicated region
    $region30: #{transformer_dec.31} parent=1 // pred_check
      _
    $region31: #{transformer_dec.31} parent=1 // pred_check_branch
      %236 = sbr.rel (0) target = $region33
    $region32: #{transformer_dec.31} parent=1 // pred_region
      %s238 = ssub.s32 256, 256
      %239 = vsyncadd [#allocation3], %s238
      %s240 = sshll.u32 [#allocation2], 4
      %s241 = int_to_ptr.vmem [resolvable:$true] %s240
      %246 = dma.vmem_to_hbm [thread:$0]  %s241, 256, %s7, [#allocation3], 128, 128, 8
    $region33: #{transformer_dec.31} parent=1 // pred_fallthru
      _
    // Predicated region
    $region34: #{transformer_dec.31} parent=1 // pred_check
      _
    $region35: #{transformer_dec.31} parent=1 // pred_check_branch
      %248 = sbr.rel (0) target = $region37
    $region36: #{transformer_dec.31} parent=1 // pred_region
      %249 = dma.done [#allocation3], 256
    $region37: #{transformer_dec.31} parent=1 // pred_fallthru
      _
    %250 = vsyncpa [#allocation3], 1

</llo_original>
